<compile_context>
chip_gen: v7x
topology: tpu7x:2x2x1
jax: 0.10.0
libtpu: 0.0.40
codegen_flags: <defaults>
</compile_context>

<pallas_src>
import functools

import jax
import jax.numpy as jnp
from jax.experimental import pallas as pl
from jax.experimental.pallas import tpu as pltpu

# ---------------- config (small shapes consistent with ViT.__init__) ----------
IN_C = 3
NUM_CLASSES = 10
IMG_SIZE = 16
PATCH = 4                       # 4x4 patch grid -> 16 patches
PATCH_SIZE = IMG_SIZE // PATCH  # 4
F_DIM = PATCH_SIZE * PATCH_SIZE * 3   # f = (img_size // patch)**2 * 3 = 48
HIDDEN = 32
MLP_HIDDEN = 64
HEAD = 4
NUM_LAYERS = 2
IS_CLS_TOKEN = True
NUM_TOKENS = PATCH * PATCH + 1        # 17 (CLS + 16 patches)
N_PAD = 24                            # tokens padded to a multiple of 8 sublanes
OUT_PAD = 128                         # logits padded to a full 128-lane store
LN_EPS = 1e-5

_LAYER_KEYS = ('g1', 'b1', 'wqkv', 'bqkv', 'wo', 'bo',
               'g2', 'b2', 'w1', 'bm1', 'w2', 'bm2')
_N_FIXED = 9   # non-layer kernel inputs


def _full_spec(shape):
    """BlockSpec covering the whole array (block == array)."""
    return pl.BlockSpec(shape, lambda *_: (0,) * len(shape))


def _layer_norm(x, gamma, beta):
    mu = jnp.mean(x, axis=-1, keepdims=True)
    var = jnp.mean(jnp.square(x - mu), axis=-1, keepdims=True)
    return (x - mu) * jax.lax.rsqrt(var + LN_EPS) * gamma + beta


# ---------------- the single fused kernel ------------------------------------
def _vit_kernel(*refs, batch):
    (words_ref, add_ref, emb_w_ref, emb_b_ref, mask_ref,
     fc_g_ref, fc_be_ref, fc_w_ref, fc_b_ref) = refs[:_N_FIXED]
    n_lw = NUM_LAYERS * len(_LAYER_KEYS)
    layer_refs = refs[_N_FIXED:_N_FIXED + n_lw]
    o_ref = refs[_N_FIXED + n_lw]
    attn_scr = refs[_N_FIXED + n_lw + 1]

    f32 = jnp.float32

    # ---- patch embedding, batch folded into rows: (B*N_PAD, F) @ (F, H) ----
    emb = jnp.dot(words_ref[...], emb_w_ref[...], preferred_element_type=f32)
    emb = emb + emb_b_ref[...]
    # add_ref already folds cls_token + pos_emb and the emb-bias correction for
    # the zero CLS / pad word rows -> no row-mask multiply needed.
    tokens = emb + add_ref[...]                           # (B*N_PAD, HIDDEN)

    # block-diagonal (per-batch) + key-padding mask, precomputed on the host
    neg_mask = mask_ref[...]                              # (B*N_PAD, B*N_PAD)

    d = HIDDEN // HEAD
    scale = 1.0 / (HIDDEN ** 0.5)   # vit-cifar MSA scales scores by sqrt(features)

    for l in range(NUM_LAYERS):
        (g1, b1, wqkv, bqkv, wo, bo, g2, b2, w1, bm1, w2, bm2) = \
            layer_refs[l * 12:(l + 1) * 12]

        x = tokens
        ln1 = _layer_norm(x, g1[...], b1[...])

        # fused QKV projection: one (B*N_PAD, H) x (H, 3H) matmul
        qkv = jnp.dot(ln1, wqkv[...], preferred_element_type=f32) + bqkv[...]
        q = qkv[:, :HIDDEN]
        k = qkv[:, HIDDEN:2 * HIDDEN]
        v = qkv[:, 2 * HIDDEN:]

        for h in range(HEAD):                  # static unrolled (4 heads)
            qh = q[:, h * d:(h + 1) * d]
            kh = k[:, h * d:(h + 1) * d]
            vh = v[:, h * d:(h + 1) * d]
            # contract last dims of both operands: no explicit kh.T relayout;
            # whole batch in one score matmul, cross-batch entries masked out.
            s = jax.lax.dot_general(
                qh, kh, (((1,), (1,)), ((), ())),
                preferred_element_type=f32) * scale
            p = jax.nn.softmax(s + neg_mask, axis=-1)
            # slice-store the head output instead of lane-concatenating
            attn_scr[:, h * d:(h + 1) * d] = jnp.dot(
                p, vh, preferred_element_type=f32)

        attn = attn_scr[...]
        o = jnp.dot(attn, wo[...], preferred_element_type=f32) + bo[...]
        out1 = x + o                                       # residual 1

        ln2 = _layer_norm(out1, g2[...], b2[...])
        # TODO(synk): PyTorch nn.GELU() default is the exact erf form; tanh approx used here.
        h1 = jax.nn.gelu(jnp.dot(ln2, w1[...], preferred_element_type=f32)
                         + bm1[...], approximate=True)
        h2 = jax.nn.gelu(jnp.dot(h1, w2[...], preferred_element_type=f32)
                         + bm2[...], approximate=True)
        tokens = out1 + h2                                 # residual 2

    # ---- classifier head on the CLS rows; lane-dense (B, 128) logits slab ----
    pooled = jnp.concatenate(
        [tokens[b * N_PAD:b * N_PAD + 1, :] for b in range(batch)], axis=0)
    pooled = _layer_norm(pooled, fc_g_ref[...], fc_be_ref[...])
    logits = jnp.dot(pooled, fc_w_ref[...], preferred_element_type=f32) + fc_b_ref[...]
    o_ref[...] = logits.astype(o_ref.dtype)


# ---------------- glue (plain JAX) -------------------------------------------
def to_words(x):
    """(B, C, H, W) -> (B, patch**2, patch_size*patch_size*C), matching torch unfold."""
    b, c, h, w = x.shape
    ps = PATCH_SIZE
    out = x.reshape(b, c, PATCH, ps, PATCH, ps)
    out = out.transpose(0, 2, 4, 3, 5, 1)        # (b, ph, pw, ps_row, ps_col, c)
    return out.reshape(b, PATCH * PATCH, ps * ps * c)


def init_params(key):
    keys = jax.random.split(key, 4 + NUM_LAYERS)

    def dense(k, fan_in, fan_out):
        kw, kb = jax.random.split(k)
        lim = 1.0 / float(fan_in) ** 0.5
        w = jax.random.uniform(kw, (fan_in, fan_out), jnp.float32, -lim, lim)
        b = jax.random.uniform(kb, (1, fan_out), jnp.float32, -lim, lim)
        return w, b

    params = {}
    params['emb_w'], params['emb_b'] = dense(keys[0], F_DIM, HIDDEN)
    params['cls_token'] = jax.random.normal(keys[1], (1, 1, HIDDEN), jnp.float32)
    params['pos_emb'] = jax.random.normal(keys[2], (1, NUM_TOKENS, HIDDEN), jnp.float32)

    layers = []
    for i in range(NUM_LAYERS):
        lk = jax.random.split(keys[3 + i], 6)
        lp = {'g1': jnp.ones((1, HIDDEN), jnp.float32),
              'b1': jnp.zeros((1, HIDDEN), jnp.float32),
              'g2': jnp.ones((1, HIDDEN), jnp.float32),
              'b2': jnp.zeros((1, HIDDEN), jnp.float32)}
        wq, bq = dense(lk[0], HIDDEN, HIDDEN)
        wk, bk = dense(lk[1], HIDDEN, HIDDEN)
        wv, bv = dense(lk[2], HIDDEN, HIDDEN)
        # fused QKV weights: one MXU pass instead of three
        lp['wqkv'] = jnp.concatenate([wq, wk, wv], axis=1)    # (H, 3H)
        lp['bqkv'] = jnp.concatenate([bq, bk, bv], axis=1)    # (1, 3H)
        lp['wo'], lp['bo'] = dense(lk[3], HIDDEN, HIDDEN)
        lp['w1'], lp['bm1'] = dense(lk[4], HIDDEN, MLP_HIDDEN)
        lp['w2'], lp['bm2'] = dense(lk[5], MLP_HIDDEN, HIDDEN)
        layers.append(lp)
    params['layers'] = layers

    params['fc_g'] = jnp.ones((1, HIDDEN), jnp.float32)
    params['fc_be'] = jnp.zeros((1, HIDDEN), jnp.float32)
    fc_w, fc_b = dense(keys[3 + NUM_LAYERS], HIDDEN, NUM_CLASSES)
    # lane-dense classifier store: pad N from 10 -> 128, slice outside the kernel
    params['fc_w_pad'] = jnp.pad(fc_w, ((0, 0), (0, OUT_PAD - NUM_CLASSES)))
    params['fc_b_pad'] = jnp.pad(fc_b, ((0, 0), (0, OUT_PAD - NUM_CLASSES)))
    return params


def vit_forward(x, params):
    B = x.shape[0]
    P2 = PATCH * PATCH
    words = to_words(x)                                       # (B, P2, F_DIM)
    # row 0 of each batch block is the CLS slot; rows NUM_TOKENS.. are padding
    words_p = jnp.pad(words, ((0, 0), (1, N_PAD - 1 - P2), (0, 0)))
    words_p = words_p.reshape(B * N_PAD, F_DIM)               # (B*N_PAD, F_DIM)

    # Additive per-token slab: CLS row gets cls_token + pos0 (minus the embedding
    # bias that the kernel adds to its zero word row); pad rows get -bias so they
    # come out exactly zero; patch rows get their positional embedding.
    emb_b = params['emb_b'][0]                                # (HIDDEN,)
    add_tok = jnp.zeros((N_PAD, HIDDEN), jnp.float32)
    add_tok = add_tok.at[0].set(
        params['cls_token'][0, 0] + params['pos_emb'][0, 0] - emb_b)
    add_tok = add_tok.at[1:NUM_TOKENS].set(params['pos_emb'][0, 1:NUM_TOKENS])
    add_tok = add_tok.at[NUM_TOKENS:].set(-emb_b)
    add_full = jnp.tile(add_tok, (B, 1))                      # (B*N_PAD, HIDDEN)

    # Block-diagonal (per-batch) + key-padding mask, built on host once.
    rows = jnp.arange(B * N_PAD)
    blk = rows // N_PAD
    valid_key = (rows % N_PAD) < NUM_TOKENS
    keep = (blk[:, None] == blk[None, :]) & valid_key[None, :]
    neg_mask = jnp.where(keep, 0.0, -1e30).astype(jnp.float32)  # (B*N_PAD, B*N_PAD)

    inputs = [words_p, add_full,
              params['emb_w'], params['emb_b'], neg_mask,
              params['fc_g'], params['fc_be'],
              params['fc_w_pad'], params['fc_b_pad']]
    for lp in params['layers']:
        inputs += [lp[k] for k in _LAYER_KEYS]

    logits_pad = pl.pallas_call(
        functools.partial(_vit_kernel, batch=B),
        out_shape=jax.ShapeDtypeStruct((B, OUT_PAD), jnp.float32),
        grid=(1,),
        in_specs=[_full_spec(a.shape) for a in inputs],
        out_specs=_full_spec((B, OUT_PAD)),
        scratch_shapes=[pltpu.VMEM((B * N_PAD, HIDDEN), jnp.float32)],
    )(*inputs)
    return logits_pad[:, :NUM_CLASSES]


if __name__ == "__main__":
    key = jax.random.PRNGKey(0)
    pkey, xkey = jax.random.split(key)
    params = init_params(pkey)
    x = jax.random.normal(xkey, (2, IN_C, IMG_SIZE, IMG_SIZE), jnp.float32)

    logits = jax.jit(vit_forward)(x, params)
    jax.block_until_ready(logits)
    assert logits.shape == (2, NUM_CLASSES), logits.shape
    assert bool(jnp.all(jnp.isfinite(logits)))
    print("KERNEL_OK")
</pallas_src>

<mosaic_0001>
module attributes {stable_mosaic.version = 11 : i64} {
  func.func @_vit_kernel(%arg0: i32, %arg1: memref<48x48xf32, #tpu.memory_space<vmem>>, %arg2: memref<48x32xf32, #tpu.memory_space<vmem>>, %arg3: memref<48x32xf32, #tpu.memory_space<vmem>>, %arg4: memref<1x32xf32, #tpu.memory_space<vmem>>, %arg5: memref<48x48xf32, #tpu.memory_space<vmem>>, %arg6: memref<1x32xf32, #tpu.memory_space<vmem>>, %arg7: memref<1x32xf32, #tpu.memory_space<vmem>>, %arg8: memref<32x128xf32, #tpu.memory_space<vmem>>, %arg9: memref<1x128xf32, #tpu.memory_space<vmem>>, %arg10: memref<1x32xf32, #tpu.memory_space<vmem>>, %arg11: memref<1x32xf32, #tpu.memory_space<vmem>>, %arg12: memref<32x96xf32, #tpu.memory_space<vmem>>, %arg13: memref<1x96xf32, #tpu.memory_space<vmem>>, %arg14: memref<32x32xf32, #tpu.memory_space<vmem>>, %arg15: memref<1x32xf32, #tpu.memory_space<vmem>>, %arg16: memref<1x32xf32, #tpu.memory_space<vmem>>, %arg17: memref<1x32xf32, #tpu.memory_space<vmem>>, %arg18: memref<32x64xf32, #tpu.memory_space<vmem>>, %arg19: memref<1x64xf32, #tpu.memory_space<vmem>>, %arg20: memref<64x32xf32, #tpu.memory_space<vmem>>, %arg21: memref<1x32xf32, #tpu.memory_space<vmem>>, %arg22: memref<1x32xf32, #tpu.memory_space<vmem>>, %arg23: memref<1x32xf32, #tpu.memory_space<vmem>>, %arg24: memref<32x96xf32, #tpu.memory_space<vmem>>, %arg25: memref<1x96xf32, #tpu.memory_space<vmem>>, %arg26: memref<32x32xf32, #tpu.memory_space<vmem>>, %arg27: memref<1x32xf32, #tpu.memory_space<vmem>>, %arg28: memref<1x32xf32, #tpu.memory_space<vmem>>, %arg29: memref<1x32xf32, #tpu.memory_space<vmem>>, %arg30: memref<32x64xf32, #tpu.memory_space<vmem>>, %arg31: memref<1x64xf32, #tpu.memory_space<vmem>>, %arg32: memref<64x32xf32, #tpu.memory_space<vmem>>, %arg33: memref<1x32xf32, #tpu.memory_space<vmem>>, %arg34: memref<2x128xf32, #tpu.memory_space<vmem>>, %arg35: memref<48x32xf32, #tpu.memory_space<vmem>>) attributes {dimension_semantics = [#tpu.dimension_semantics<arbitrary>], iteration_bounds = array<i64: 1>, scalar_prefetch = 0 : i64, scratch_operands = 1 : i64, tpu.core_type = #tpu.core_type<tc>, window_params = [{pipeline_mode = #tpu.pipeline_mode<synchronous>, transform_indices = @transform_0, window_bounds = array<i64: 48, 48>}, {pipeline_mode = #tpu.pipeline_mode<synchronous>, transform_indices = @transform_1, window_bounds = array<i64: 48, 32>}, {pipeline_mode = #tpu.pipeline_mode<synchronous>, transform_indices = @transform_2, window_bounds = array<i64: 48, 32>}, {pipeline_mode = #tpu.pipeline_mode<synchronous>, transform_indices = @transform_3, window_bounds = array<i64: 1, 32>}, {pipeline_mode = #tpu.pipeline_mode<synchronous>, transform_indices = @transform_4, window_bounds = array<i64: 48, 48>}, {pipeline_mode = #tpu.pipeline_mode<synchronous>, transform_indices = @transform_5, window_bounds = array<i64: 1, 32>}, {pipeline_mode = #tpu.pipeline_mode<synchronous>, transform_indices = @transform_6, window_bounds = array<i64: 1, 32>}, {pipeline_mode = #tpu.pipeline_mode<synchronous>, transform_indices = @transform_7, window_bounds = array<i64: 32, 128>}, {pipeline_mode = #tpu.pipeline_mode<synchronous>, transform_indices = @transform_8, window_bounds = array<i64: 1, 128>}, {pipeline_mode = #tpu.pipeline_mode<synchronous>, transform_indices = @transform_9, window_bounds = array<i64: 1, 32>}, {pipeline_mode = #tpu.pipeline_mode<synchronous>, transform_indices = @transform_10, window_bounds = array<i64: 1, 32>}, {pipeline_mode = #tpu.pipeline_mode<synchronous>, transform_indices = @transform_11, window_bounds = array<i64: 32, 96>}, {pipeline_mode = #tpu.pipeline_mode<synchronous>, transform_indices = @transform_12, window_bounds = array<i64: 1, 96>}, {pipeline_mode = #tpu.pipeline_mode<synchronous>, transform_indices = @transform_13, window_bounds = array<i64: 32, 32>}, {pipeline_mode = #tpu.pipeline_mode<synchronous>, transform_indices = @transform_14, window_bounds = array<i64: 1, 32>}, {pipeline_mode = #tpu.pipeline_mode<synchronous>, transform_indices = @transform_15, window_bounds = array<i64: 1, 32>}, {pipeline_mode = #tpu.pipeline_mode<synchronous>, transform_indices = @transform_16, window_bounds = array<i64: 1, 32>}, {pipeline_mode = #tpu.pipeline_mode<synchronous>, transform_indices = @transform_17, window_bounds = array<i64: 32, 64>}, {pipeline_mode = #tpu.pipeline_mode<synchronous>, transform_indices = @transform_18, window_bounds = array<i64: 1, 64>}, {pipeline_mode = #tpu.pipeline_mode<synchronous>, transform_indices = @transform_19, window_bounds = array<i64: 64, 32>}, {pipeline_mode = #tpu.pipeline_mode<synchronous>, transform_indices = @transform_20, window_bounds = array<i64: 1, 32>}, {pipeline_mode = #tpu.pipeline_mode<synchronous>, transform_indices = @transform_21, window_bounds = array<i64: 1, 32>}, {pipeline_mode = #tpu.pipeline_mode<synchronous>, transform_indices = @transform_22, window_bounds = array<i64: 1, 32>}, {pipeline_mode = #tpu.pipeline_mode<synchronous>, transform_indices = @transform_23, window_bounds = array<i64: 32, 96>}, {pipeline_mode = #tpu.pipeline_mode<synchronous>, transform_indices = @transform_24, window_bounds = array<i64: 1, 96>}, {pipeline_mode = #tpu.pipeline_mode<synchronous>, transform_indices = @transform_25, window_bounds = array<i64: 32, 32>}, {pipeline_mode = #tpu.pipeline_mode<synchronous>, transform_indices = @transform_26, window_bounds = array<i64: 1, 32>}, {pipeline_mode = #tpu.pipeline_mode<synchronous>, transform_indices = @transform_27, window_bounds = array<i64: 1, 32>}, {pipeline_mode = #tpu.pipeline_mode<synchronous>, transform_indices = @transform_28, window_bounds = array<i64: 1, 32>}, {pipeline_mode = #tpu.pipeline_mode<synchronous>, transform_indices = @transform_29, window_bounds = array<i64: 32, 64>}, {pipeline_mode = #tpu.pipeline_mode<synchronous>, transform_indices = @transform_30, window_bounds = array<i64: 1, 64>}, {pipeline_mode = #tpu.pipeline_mode<synchronous>, transform_indices = @transform_31, window_bounds = array<i64: 64, 32>}, {pipeline_mode = #tpu.pipeline_mode<synchronous>, transform_indices = @transform_32, window_bounds = array<i64: 1, 32>}, {pipeline_mode = #tpu.pipeline_mode<synchronous>, transform_indices = @transform_33, window_bounds = array<i64: 2, 128>}]} {
    %c0 = arith.constant 0 : index
    %c0_0 = arith.constant 0 : index
    %0 = vector.load %arg1[%c0, %c0_0] : memref<48x48xf32, #tpu.memory_space<vmem>>, vector<48x48xf32>
    %c0_1 = arith.constant 0 : index
    %c0_2 = arith.constant 0 : index
    %1 = vector.load %arg3[%c0_1, %c0_2] : memref<48x32xf32, #tpu.memory_space<vmem>>, vector<48x32xf32>
    %cst = arith.constant dense<0.000000e+00> : vector<48x32xf32>
    %2 = tpu.matmul %0, %1, %cst {dimension_numbers = #tpu.dot_dimension_numbers<[1], [0], [0], [1], [0, 0, 1, 1], [], []>} : vector<48x48xf32>, vector<48x32xf32>, vector<48x32xf32> -> vector<48x32xf32>
    %c0_3 = arith.constant 0 : index
    %c0_4 = arith.constant 0 : index
    %3 = vector.load %arg4[%c0_3, %c0_4] : memref<1x32xf32, #tpu.memory_space<vmem>>, vector<1x32xf32>
    %4 = vector.broadcast %3 : vector<1x32xf32> to vector<48x32xf32>
    %5 = arith.addf %2, %4 : vector<48x32xf32>
    %c0_5 = arith.constant 0 : index
    %c0_6 = arith.constant 0 : index
    %6 = vector.load %arg2[%c0_5, %c0_6] : memref<48x32xf32, #tpu.memory_space<vmem>>, vector<48x32xf32>
    %7 = arith.addf %5, %6 : vector<48x32xf32>
    %c0_7 = arith.constant 0 : index
    %c0_8 = arith.constant 0 : index
    %8 = vector.load %arg5[%c0_7, %c0_8] : memref<48x48xf32, #tpu.memory_space<vmem>>, vector<48x48xf32>
    %c0_9 = arith.constant 0 : index
    %c0_10 = arith.constant 0 : index
    %9 = vector.load %arg10[%c0_9, %c0_10] : memref<1x32xf32, #tpu.memory_space<vmem>>, vector<1x32xf32>
    %c0_11 = arith.constant 0 : index
    %c0_12 = arith.constant 0 : index
    %10 = vector.load %arg11[%c0_11, %c0_12] : memref<1x32xf32, #tpu.memory_space<vmem>>, vector<1x32xf32>
    %cst_13 = arith.constant dense<0.000000e+00> : vector<48xf32>
    %11 = vector.multi_reduction <add>, %7, %cst_13 [1] : vector<48x32xf32> to vector<48xf32>
    %12 = vector.shape_cast %11 : vector<48xf32> to vector<48x1xf32>
    %cst_14 = arith.constant 3.200000e+01 : f32
    %13 = vector.broadcast %cst_14 : f32 to vector<48x1xf32>
    %14 = arith.divf %12, %13 : vector<48x1xf32>
    %15 = vector.broadcast %14 : vector<48x1xf32> to vector<48x32xf32>
    %16 = arith.subf %7, %15 : vector<48x32xf32>
    %17 = arith.mulf %16, %16 : vector<48x32xf32>
    %cst_15 = arith.constant dense<0.000000e+00> : vector<48xf32>
    %18 = vector.multi_reduction <add>, %17, %cst_15 [1] : vector<48x32xf32> to vector<48xf32>
    %19 = vector.shape_cast %18 : vector<48xf32> to vector<48x1xf32>
    %cst_16 = arith.constant 3.200000e+01 : f32
    %20 = vector.broadcast %cst_16 : f32 to vector<48x1xf32>
    %21 = arith.divf %19, %20 : vector<48x1xf32>
    %22 = vector.broadcast %14 : vector<48x1xf32> to vector<48x32xf32>
    %23 = arith.subf %7, %22 : vector<48x32xf32>
    %cst_17 = arith.constant 9.99999974E-6 : f32
    %24 = vector.broadcast %cst_17 : f32 to vector<48x1xf32>
    %25 = arith.addf %21, %24 : vector<48x1xf32>
    %26 = math.rsqrt %25 : vector<48x1xf32>
    %27 = vector.broadcast %26 : vector<48x1xf32> to vector<48x32xf32>
    %28 = arith.mulf %23, %27 : vector<48x32xf32>
    %29 = vector.broadcast %9 : vector<1x32xf32> to vector<48x32xf32>
    %30 = arith.mulf %28, %29 : vector<48x32xf32>
    %31 = vector.broadcast %10 : vector<1x32xf32> to vector<48x32xf32>
    %32 = arith.addf %30, %31 : vector<48x32xf32>
    %c0_18 = arith.constant 0 : index
    %c0_19 = arith.constant 0 : index
    %33 = vector.load %arg12[%c0_18, %c0_19] : memref<32x96xf32, #tpu.memory_space<vmem>>, vector<32x96xf32>
    %cst_20 = arith.constant dense<0.000000e+00> : vector<48x96xf32>
    %34 = tpu.matmul %32, %33, %cst_20 {dimension_numbers = #tpu.dot_dimension_numbers<[1], [0], [0], [1], [0, 0, 1, 1], [], []>} : vector<48x32xf32>, vector<32x96xf32>, vector<48x96xf32> -> vector<48x96xf32>
    %c0_21 = arith.constant 0 : index
    %c0_22 = arith.constant 0 : index
    %35 = vector.load %arg13[%c0_21, %c0_22] : memref<1x96xf32, #tpu.memory_space<vmem>>, vector<1x96xf32>
    %36 = vector.broadcast %35 : vector<1x96xf32> to vector<48x96xf32>
    %37 = arith.addf %34, %36 : vector<48x96xf32>
    %38 = vector.extract_strided_slice %37 {offsets = [0, 0], sizes = [48, 32], strides = [1, 1]} : vector<48x96xf32> to vector<48x32xf32>
    %39 = vector.extract_strided_slice %37 {offsets = [0, 32], sizes = [48, 32], strides = [1, 1]} : vector<48x96xf32> to vector<48x32xf32>
    %40 = vector.extract_strided_slice %37 {offsets = [0, 64], sizes = [48, 32], strides = [1, 1]} : vector<48x96xf32> to vector<48x32xf32>
    %41 = vector.extract_strided_slice %38 {offsets = [0, 0], sizes = [48, 8], strides = [1, 1]} : vector<48x32xf32> to vector<48x8xf32>
    %42 = vector.extract_strided_slice %39 {offsets = [0, 0], sizes = [48, 8], strides = [1, 1]} : vector<48x32xf32> to vector<48x8xf32>
    %43 = vector.extract_strided_slice %40 {offsets = [0, 0], sizes = [48, 8], strides = [1, 1]} : vector<48x32xf32> to vector<48x8xf32>
    %cst_23 = arith.constant dense<0.000000e+00> : vector<48x48xf32>
    %44 = tpu.matmul %41, %42, %cst_23 {dimension_numbers = #tpu.dot_dimension_numbers<[1], [1], [0], [0], [0, 0, 1, 0], [], []>} : vector<48x8xf32>, vector<48x8xf32>, vector<48x48xf32> -> vector<48x48xf32>
    %cst_24 = arith.constant 0.176776692 : f32
    %45 = vector.broadcast %cst_24 : f32 to vector<48x48xf32>
    %46 = arith.mulf %44, %45 : vector<48x48xf32>
    %47 = arith.addf %46, %8 : vector<48x48xf32>
    %cst_25 = arith.constant dense<0xFF800000> : vector<48xf32>
    %48 = vector.multi_reduction <maximumf>, %47, %cst_25 [1] : vector<48x48xf32> to vector<48xf32>
    %cst_26 = arith.constant 0xFF800000 : f32
    %49 = vector.broadcast %cst_26 : f32 to vector<48xf32>
    %50 = arith.maximumf %49, %48 : vector<48xf32>
    %51 = vector.shape_cast %50 : vector<48xf32> to vector<48x1xf32>
    %52 = vector.broadcast %51 : vector<48x1xf32> to vector<48x48xf32>
    %53 = arith.subf %47, %52 : vector<48x48xf32>
    %54 = math.exp %53 : vector<48x48xf32>
    %cst_27 = arith.constant dense<0.000000e+00> : vector<48xf32>
    %55 = vector.multi_reduction <add>, %54, %cst_27 [1] : vector<48x48xf32> to vector<48xf32>
    %56 = vector.shape_cast %55 : vector<48xf32> to vector<48x1xf32>
    %57 = vector.broadcast %56 : vector<48x1xf32> to vector<48x48xf32>
    %58 = arith.divf %54, %57 : vector<48x48xf32>
    %cst_28 = arith.constant dense<0.000000e+00> : vector<48x8xf32>
    %59 = tpu.matmul %58, %43, %cst_28 {dimension_numbers = #tpu.dot_dimension_numbers<[1], [0], [0], [1], [0, 0, 1, 1], [], []>} : vector<48x48xf32>, vector<48x8xf32>, vector<48x8xf32> -> vector<48x8xf32>
    %c0_29 = arith.constant 0 : index
    %c0_30 = arith.constant 0 : index
    %60 = vector.load %arg35[%c0_29, %c0_30] : memref<48x32xf32, #tpu.memory_space<vmem>>, vector<48x8xf32>
    tpu.vector_store %arg35[%c0_29, %c0_30], %59 {strides = array<i32>} : memref<48x32xf32, #tpu.memory_space<vmem>>, vector<48x8xf32>,
    %61 = vector.extract_strided_slice %38 {offsets = [0, 8], sizes = [48, 8], strides = [1, 1]} : vector<48x32xf32> to vector<48x8xf32>
    %62 = vector.extract_strided_slice %39 {offsets = [0, 8], sizes = [48, 8], strides = [1, 1]} : vector<48x32xf32> to vector<48x8xf32>
    %63 = vector.extract_strided_slice %40 {offsets = [0, 8], sizes = [48, 8], strides = [1, 1]} : vector<48x32xf32> to vector<48x8xf32>
    %cst_31 = arith.constant dense<0.000000e+00> : vector<48x48xf32>
    %64 = tpu.matmul %61, %62, %cst_31 {dimension_numbers = #tpu.dot_dimension_numbers<[1], [1], [0], [0], [0, 0, 1, 0], [], []>} : vector<48x8xf32>, vector<48x8xf32>, vector<48x48xf32> -> vector<48x48xf32>
    %cst_32 = arith.constant 0.176776692 : f32
    %65 = vector.broadcast %cst_32 : f32 to vector<48x48xf32>
    %66 = arith.mulf %64, %65 : vector<48x48xf32>
    %67 = arith.addf %66, %8 : vector<48x48xf32>
    %cst_33 = arith.constant dense<0xFF800000> : vector<48xf32>
    %68 = vector.multi_reduction <maximumf>, %67, %cst_33 [1] : vector<48x48xf32> to vector<48xf32>
    %cst_34 = arith.constant 0xFF800000 : f32
    %69 = vector.broadcast %cst_34 : f32 to vector<48xf32>
    %70 = arith.maximumf %69, %68 : vector<48xf32>
    %71 = vector.shape_cast %70 : vector<48xf32> to vector<48x1xf32>
    %72 = vector.broadcast %71 : vector<48x1xf32> to vector<48x48xf32>
    %73 = arith.subf %67, %72 : vector<48x48xf32>
    %74 = math.exp %73 : vector<48x48xf32>
    %cst_35 = arith.constant dense<0.000000e+00> : vector<48xf32>
    %75 = vector.multi_reduction <add>, %74, %cst_35 [1] : vector<48x48xf32> to vector<48xf32>
    %76 = vector.shape_cast %75 : vector<48xf32> to vector<48x1xf32>
    %77 = vector.broadcast %76 : vector<48x1xf32> to vector<48x48xf32>
    %78 = arith.divf %74, %77 : vector<48x48xf32>
    %cst_36 = arith.constant dense<0.000000e+00> : vector<48x8xf32>
    %79 = tpu.matmul %78, %63, %cst_36 {dimension_numbers = #tpu.dot_dimension_numbers<[1], [0], [0], [1], [0, 0, 1, 1], [], []>} : vector<48x48xf32>, vector<48x8xf32>, vector<48x8xf32> -> vector<48x8xf32>
    %c0_37 = arith.constant 0 : index
    %c8 = arith.constant 8 : index
    %80 = vector.load %arg35[%c0_37, %c8] : memref<48x32xf32, #tpu.memory_space<vmem>>, vector<48x8xf32>
    tpu.vector_store %arg35[%c0_37, %c8], %79 {strides = array<i32>} : memref<48x32xf32, #tpu.memory_space<vmem>>, vector<48x8xf32>,
    %81 = vector.extract_strided_slice %38 {offsets = [0, 16], sizes = [48, 8], strides = [1, 1]} : vector<48x32xf32> to vector<48x8xf32>
    %82 = vector.extract_strided_slice %39 {offsets = [0, 16], sizes = [48, 8], strides = [1, 1]} : vector<48x32xf32> to vector<48x8xf32>
    %83 = vector.extract_strided_slice %40 {offsets = [0, 16], sizes = [48, 8], strides = [1, 1]} : vector<48x32xf32> to vector<48x8xf32>
    %cst_38 = arith.constant dense<0.000000e+00> : vector<48x48xf32>
    %84 = tpu.matmul %81, %82, %cst_38 {dimension_numbers = #tpu.dot_dimension_numbers<[1], [1], [0], [0], [0, 0, 1, 0], [], []>} : vector<48x8xf32>, vector<48x8xf32>, vector<48x48xf32> -> vector<48x48xf32>
    %cst_39 = arith.constant 0.176776692 : f32
    %85 = vector.broadcast %cst_39 : f32 to vector<48x48xf32>
    %86 = arith.mulf %84, %85 : vector<48x48xf32>
    %87 = arith.addf %86, %8 : vector<48x48xf32>
    %cst_40 = arith.constant dense<0xFF800000> : vector<48xf32>
    %88 = vector.multi_reduction <maximumf>, %87, %cst_40 [1] : vector<48x48xf32> to vector<48xf32>
    %cst_41 = arith.constant 0xFF800000 : f32
    %89 = vector.broadcast %cst_41 : f32 to vector<48xf32>
    %90 = arith.maximumf %89, %88 : vector<48xf32>
    %91 = vector.shape_cast %90 : vector<48xf32> to vector<48x1xf32>
    %92 = vector.broadcast %91 : vector<48x1xf32> to vector<48x48xf32>
    %93 = arith.subf %87, %92 : vector<48x48xf32>
    %94 = math.exp %93 : vector<48x48xf32>
    %cst_42 = arith.constant dense<0.000000e+00> : vector<48xf32>
    %95 = vector.multi_reduction <add>, %94, %cst_42 [1] : vector<48x48xf32> to vector<48xf32>
    %96 = vector.shape_cast %95 : vector<48xf32> to vector<48x1xf32>
    %97 = vector.broadcast %96 : vector<48x1xf32> to vector<48x48xf32>
    %98 = arith.divf %94, %97 : vector<48x48xf32>
    %cst_43 = arith.constant dense<0.000000e+00> : vector<48x8xf32>
    %99 = tpu.matmul %98, %83, %cst_43 {dimension_numbers = #tpu.dot_dimension_numbers<[1], [0], [0], [1], [0, 0, 1, 1], [], []>} : vector<48x48xf32>, vector<48x8xf32>, vector<48x8xf32> -> vector<48x8xf32>
    %c0_44 = arith.constant 0 : index
    %c16 = arith.constant 16 : index
    %100 = vector.load %arg35[%c0_44, %c16] : memref<48x32xf32, #tpu.memory_space<vmem>>, vector<48x8xf32>
    tpu.vector_store %arg35[%c0_44, %c16], %99 {strides = array<i32>} : memref<48x32xf32, #tpu.memory_space<vmem>>, vector<48x8xf32>,
    %101 = vector.extract_strided_slice %38 {offsets = [0, 24], sizes = [48, 8], strides = [1, 1]} : vector<48x32xf32> to vector<48x8xf32>
    %102 = vector.extract_strided_slice %39 {offsets = [0, 24], sizes = [48, 8], strides = [1, 1]} : vector<48x32xf32> to vector<48x8xf32>
    %103 = vector.extract_strided_slice %40 {offsets = [0, 24], sizes = [48, 8], strides = [1, 1]} : vector<48x32xf32> to vector<48x8xf32>
    %cst_45 = arith.constant dense<0.000000e+00> : vector<48x48xf32>
    %104 = tpu.matmul %101, %102, %cst_45 {dimension_numbers = #tpu.dot_dimension_numbers<[1], [1], [0], [0], [0, 0, 1, 0], [], []>} : vector<48x8xf32>, vector<48x8xf32>, vector<48x48xf32> -> vector<48x48xf32>
    %cst_46 = arith.constant 0.176776692 : f32
    %105 = vector.broadcast %cst_46 : f32 to vector<48x48xf32>
    %106 = arith.mulf %104, %105 : vector<48x48xf32>
    %107 = arith.addf %106, %8 : vector<48x48xf32>
    %cst_47 = arith.constant dense<0xFF800000> : vector<48xf32>
    %108 = vector.multi_reduction <maximumf>, %107, %cst_47 [1] : vector<48x48xf32> to vector<48xf32>
    %cst_48 = arith.constant 0xFF800000 : f32
    %109 = vector.broadcast %cst_48 : f32 to vector<48xf32>
    %110 = arith.maximumf %109, %108 : vector<48xf32>
    %111 = vector.shape_cast %110 : vector<48xf32> to vector<48x1xf32>
    %112 = vector.broadcast %111 : vector<48x1xf32> to vector<48x48xf32>
    %113 = arith.subf %107, %112 : vector<48x48xf32>
    %114 = math.exp %113 : vector<48x48xf32>
    %cst_49 = arith.constant dense<0.000000e+00> : vector<48xf32>
    %115 = vector.multi_reduction <add>, %114, %cst_49 [1] : vector<48x48xf32> to vector<48xf32>
    %116 = vector.shape_cast %115 : vector<48xf32> to vector<48x1xf32>
    %117 = vector.broadcast %116 : vector<48x1xf32> to vector<48x48xf32>
    %118 = arith.divf %114, %117 : vector<48x48xf32>
    %cst_50 = arith.constant dense<0.000000e+00> : vector<48x8xf32>
    %119 = tpu.matmul %118, %103, %cst_50 {dimension_numbers = #tpu.dot_dimension_numbers<[1], [0], [0], [1], [0, 0, 1, 1], [], []>} : vector<48x48xf32>, vector<48x8xf32>, vector<48x8xf32> -> vector<48x8xf32>
    %c0_51 = arith.constant 0 : index
    %c24 = arith.constant 24 : index
    %120 = vector.load %arg35[%c0_51, %c24] : memref<48x32xf32, #tpu.memory_space<vmem>>, vector<48x8xf32>
    tpu.vector_store %arg35[%c0_51, %c24], %119 {strides = array<i32>} : memref<48x32xf32, #tpu.memory_space<vmem>>, vector<48x8xf32>,
    %c0_52 = arith.constant 0 : index
    %c0_53 = arith.constant 0 : index
    %121 = vector.load %arg35[%c0_52, %c0_53] : memref<48x32xf32, #tpu.memory_space<vmem>>, vector<48x32xf32>
    %c0_54 = arith.constant 0 : index
    %c0_55 = arith.constant 0 : index
    %122 = vector.load %arg14[%c0_54, %c0_55] : memref<32x32xf32, #tpu.memory_space<vmem>>, vector<32x32xf32>
    %cst_56 = arith.constant dense<0.000000e+00> : vector<48x32xf32>
    %123 = tpu.matmul %121, %122, %cst_56 {dimension_numbers = #tpu.dot_dimension_numbers<[1], [0], [0], [1], [0, 0, 1, 1], [], []>} : vector<48x32xf32>, vector<32x32xf32>, vector<48x32xf32> -> vector<48x32xf32>
    %c0_57 = arith.constant 0 : index
    %c0_58 = arith.constant 0 : index
    %124 = vector.load %arg15[%c0_57, %c0_58] : memref<1x32xf32, #tpu.memory_space<vmem>>, vector<1x32xf32>
    %125 = vector.broadcast %124 : vector<1x32xf32> to vector<48x32xf32>
    %126 = arith.addf %123, %125 : vector<48x32xf32>
    %127 = arith.addf %7, %126 : vector<48x32xf32>
    %c0_59 = arith.constant 0 : index
    %c0_60 = arith.constant 0 : index
    %128 = vector.load %arg16[%c0_59, %c0_60] : memref<1x32xf32, #tpu.memory_space<vmem>>, vector<1x32xf32>
    %c0_61 = arith.constant 0 : index
    %c0_62 = arith.constant 0 : index
    %129 = vector.load %arg17[%c0_61, %c0_62] : memref<1x32xf32, #tpu.memory_space<vmem>>, vector<1x32xf32>
    %cst_63 = arith.constant dense<0.000000e+00> : vector<48xf32>
    %130 = vector.multi_reduction <add>, %127, %cst_63 [1] : vector<48x32xf32> to vector<48xf32>
    %131 = vector.shape_cast %130 : vector<48xf32> to vector<48x1xf32>
    %cst_64 = arith.constant 3.200000e+01 : f32
    %132 = vector.broadcast %cst_64 : f32 to vector<48x1xf32>
    %133 = arith.divf %131, %132 : vector<48x1xf32>
    %134 = vector.broadcast %133 : vector<48x1xf32> to vector<48x32xf32>
    %135 = arith.subf %127, %134 : vector<48x32xf32>
    %136 = arith.mulf %135, %135 : vector<48x32xf32>
    %cst_65 = arith.constant dense<0.000000e+00> : vector<48xf32>
    %137 = vector.multi_reduction <add>, %136, %cst_65 [1] : vector<48x32xf32> to vector<48xf32>
    %138 = vector.shape_cast %137 : vector<48xf32> to vector<48x1xf32>
    %cst_66 = arith.constant 3.200000e+01 : f32
    %139 = vector.broadcast %cst_66 : f32 to vector<48x1xf32>
    %140 = arith.divf %138, %139 : vector<48x1xf32>
    %141 = vector.broadcast %133 : vector<48x1xf32> to vector<48x32xf32>
    %142 = arith.subf %127, %141 : vector<48x32xf32>
    %cst_67 = arith.constant 9.99999974E-6 : f32
    %143 = vector.broadcast %cst_67 : f32 to vector<48x1xf32>
    %144 = arith.addf %140, %143 : vector<48x1xf32>
    %145 = math.rsqrt %144 : vector<48x1xf32>
    %146 = vector.broadcast %145 : vector<48x1xf32> to vector<48x32xf32>
    %147 = arith.mulf %142, %146 : vector<48x32xf32>
    %148 = vector.broadcast %128 : vector<1x32xf32> to vector<48x32xf32>
    %149 = arith.mulf %147, %148 : vector<48x32xf32>
    %150 = vector.broadcast %129 : vector<1x32xf32> to vector<48x32xf32>
    %151 = arith.addf %149, %150 : vector<48x32xf32>
    %c0_68 = arith.constant 0 : index
    %c0_69 = arith.constant 0 : index
    %152 = vector.load %arg18[%c0_68, %c0_69] : memref<32x64xf32, #tpu.memory_space<vmem>>, vector<32x64xf32>
    %cst_70 = arith.constant dense<0.000000e+00> : vector<48x64xf32>
    %153 = tpu.matmul %151, %152, %cst_70 {dimension_numbers = #tpu.dot_dimension_numbers<[1], [0], [0], [1], [0, 0, 1, 1], [], []>} : vector<48x32xf32>, vector<32x64xf32>, vector<48x64xf32> -> vector<48x64xf32>
    %c0_71 = arith.constant 0 : index
    %c0_72 = arith.constant 0 : index
    %154 = vector.load %arg19[%c0_71, %c0_72] : memref<1x64xf32, #tpu.memory_space<vmem>>, vector<1x64xf32>
    %155 = vector.broadcast %154 : vector<1x64xf32> to vector<48x64xf32>
    %156 = arith.addf %153, %155 : vector<48x64xf32>
    %157 = arith.mulf %156, %156 : vector<48x64xf32>
    %158 = arith.mulf %156, %157 : vector<48x64xf32>
    %cst_73 = arith.constant 4.471500e-02 : f32
    %159 = vector.broadcast %cst_73 : f32 to vector<48x64xf32>
    %160 = arith.mulf %159, %158 : vector<48x64xf32>
    %161 = arith.addf %156, %160 : vector<48x64xf32>
    %cst_74 = arith.constant 0.797884583 : f32
    %162 = vector.broadcast %cst_74 : f32 to vector<48x64xf32>
    %163 = arith.mulf %162, %161 : vector<48x64xf32>
    %164 = math.tanh %163 : vector<48x64xf32>
    %cst_75 = arith.constant 1.000000e+00 : f32
    %165 = vector.broadcast %cst_75 : f32 to vector<48x64xf32>
    %166 = arith.addf %165, %164 : vector<48x64xf32>
    %cst_76 = arith.constant 5.000000e-01 : f32
    %167 = vector.broadcast %cst_76 : f32 to vector<48x64xf32>
    %168 = arith.mulf %167, %166 : vector<48x64xf32>
    %169 = arith.mulf %156, %168 : vector<48x64xf32>
    %c0_77 = arith.constant 0 : index
    %c0_78 = arith.constant 0 : index
    %170 = vector.load %arg20[%c0_77, %c0_78] : memref<64x32xf32, #tpu.memory_space<vmem>>, vector<64x32xf32>
    %cst_79 = arith.constant dense<0.000000e+00> : vector<48x32xf32>
    %171 = tpu.matmul %169, %170, %cst_79 {dimension_numbers = #tpu.dot_dimension_numbers<[1], [0], [0], [1], [0, 0, 1, 1], [], []>} : vector<48x64xf32>, vector<64x32xf32>, vector<48x32xf32> -> vector<48x32xf32>
    %c0_80 = arith.constant 0 : index
    %c0_81 = arith.constant 0 : index
    %172 = vector.load %arg21[%c0_80, %c0_81] : memref<1x32xf32, #tpu.memory_space<vmem>>, vector<1x32xf32>
    %173 = vector.broadcast %172 : vector<1x32xf32> to vector<48x32xf32>
    %174 = arith.addf %171, %173 : vector<48x32xf32>
    %175 = arith.mulf %174, %174 : vector<48x32xf32>
    %176 = arith.mulf %174, %175 : vector<48x32xf32>
    %cst_82 = arith.constant 4.471500e-02 : f32
    %177 = vector.broadcast %cst_82 : f32 to vector<48x32xf32>
    %178 = arith.mulf %177, %176 : vector<48x32xf32>
    %179 = arith.addf %174, %178 : vector<48x32xf32>
    %cst_83 = arith.constant 0.797884583 : f32
    %180 = vector.broadcast %cst_83 : f32 to vector<48x32xf32>
    %181 = arith.mulf %180, %179 : vector<48x32xf32>
    %182 = math.tanh %181 : vector<48x32xf32>
    %cst_84 = arith.constant 1.000000e+00 : f32
    %183 = vector.broadcast %cst_84 : f32 to vector<48x32xf32>
    %184 = arith.addf %183, %182 : vector<48x32xf32>
    %cst_85 = arith.constant 5.000000e-01 : f32
    %185 = vector.broadcast %cst_85 : f32 to vector<48x32xf32>
    %186 = arith.mulf %185, %184 : vector<48x32xf32>
    %187 = arith.mulf %174, %186 : vector<48x32xf32>
    %188 = arith.addf %127, %187 : vector<48x32xf32>
    %c0_86 = arith.constant 0 : index
    %c0_87 = arith.constant 0 : index
    %189 = vector.load %arg22[%c0_86, %c0_87] : memref<1x32xf32, #tpu.memory_space<vmem>>, vector<1x32xf32>
    %c0_88 = arith.constant 0 : index
    %c0_89 = arith.constant 0 : index
    %190 = vector.load %arg23[%c0_88, %c0_89] : memref<1x32xf32, #tpu.memory_space<vmem>>, vector<1x32xf32>
    %cst_90 = arith.constant dense<0.000000e+00> : vector<48xf32>
    %191 = vector.multi_reduction <add>, %188, %cst_90 [1] : vector<48x32xf32> to vector<48xf32>
    %192 = vector.shape_cast %191 : vector<48xf32> to vector<48x1xf32>
    %cst_91 = arith.constant 3.200000e+01 : f32
    %193 = vector.broadcast %cst_91 : f32 to vector<48x1xf32>
    %194 = arith.divf %192, %193 : vector<48x1xf32>
    %195 = vector.broadcast %194 : vector<48x1xf32> to vector<48x32xf32>
    %196 = arith.subf %188, %195 : vector<48x32xf32>
    %197 = arith.mulf %196, %196 : vector<48x32xf32>
    %cst_92 = arith.constant dense<0.000000e+00> : vector<48xf32>
    %198 = vector.multi_reduction <add>, %197, %cst_92 [1] : vector<48x32xf32> to vector<48xf32>
    %199 = vector.shape_cast %198 : vector<48xf32> to vector<48x1xf32>
    %cst_93 = arith.constant 3.200000e+01 : f32
    %200 = vector.broadcast %cst_93 : f32 to vector<48x1xf32>
    %201 = arith.divf %199, %200 : vector<48x1xf32>
    %202 = vector.broadcast %194 : vector<48x1xf32> to vector<48x32xf32>
    %203 = arith.subf %188, %202 : vector<48x32xf32>
    %cst_94 = arith.constant 9.99999974E-6 : f32
    %204 = vector.broadcast %cst_94 : f32 to vector<48x1xf32>
    %205 = arith.addf %201, %204 : vector<48x1xf32>
    %206 = math.rsqrt %205 : vector<48x1xf32>
    %207 = vector.broadcast %206 : vector<48x1xf32> to vector<48x32xf32>
    %208 = arith.mulf %203, %207 : vector<48x32xf32>
    %209 = vector.broadcast %189 : vector<1x32xf32> to vector<48x32xf32>
    %210 = arith.mulf %208, %209 : vector<48x32xf32>
    %211 = vector.broadcast %190 : vector<1x32xf32> to vector<48x32xf32>
    %212 = arith.addf %210, %211 : vector<48x32xf32>
    %c0_95 = arith.constant 0 : index
    %c0_96 = arith.constant 0 : index
    %213 = vector.load %arg24[%c0_95, %c0_96] : memref<32x96xf32, #tpu.memory_space<vmem>>, vector<32x96xf32>
    %cst_97 = arith.constant dense<0.000000e+00> : vector<48x96xf32>
    %214 = tpu.matmul %212, %213, %cst_97 {dimension_numbers = #tpu.dot_dimension_numbers<[1], [0], [0], [1], [0, 0, 1, 1], [], []>} : vector<48x32xf32>, vector<32x96xf32>, vector<48x96xf32> -> vector<48x96xf32>
    %c0_98 = arith.constant 0 : index
    %c0_99 = arith.constant 0 : index
    %215 = vector.load %arg25[%c0_98, %c0_99] : memref<1x96xf32, #tpu.memory_space<vmem>>, vector<1x96xf32>
    %216 = vector.broadcast %215 : vector<1x96xf32> to vector<48x96xf32>
    %217 = arith.addf %214, %216 : vector<48x96xf32>
    %218 = vector.extract_strided_slice %217 {offsets = [0, 0], sizes = [48, 32], strides = [1, 1]} : vector<48x96xf32> to vector<48x32xf32>
    %219 = vector.extract_strided_slice %217 {offsets = [0, 32], sizes = [48, 32], strides = [1, 1]} : vector<48x96xf32> to vector<48x32xf32>
    %220 = vector.extract_strided_slice %217 {offsets = [0, 64], sizes = [48, 32], strides = [1, 1]} : vector<48x96xf32> to vector<48x32xf32>
    %221 = vector.extract_strided_slice %218 {offsets = [0, 0], sizes = [48, 8], strides = [1, 1]} : vector<48x32xf32> to vector<48x8xf32>
    %222 = vector.extract_strided_slice %219 {offsets = [0, 0], sizes = [48, 8], strides = [1, 1]} : vector<48x32xf32> to vector<48x8xf32>
    %223 = vector.extract_strided_slice %220 {offsets = [0, 0], sizes = [48, 8], strides = [1, 1]} : vector<48x32xf32> to vector<48x8xf32>
    %cst_100 = arith.constant dense<0.000000e+00> : vector<48x48xf32>
    %224 = tpu.matmul %221, %222, %cst_100 {dimension_numbers = #tpu.dot_dimension_numbers<[1], [1], [0], [0], [0, 0, 1, 0], [], []>} : vector<48x8xf32>, vector<48x8xf32>, vector<48x48xf32> -> vector<48x48xf32>
    %cst_101 = arith.constant 0.176776692 : f32
    %225 = vector.broadcast %cst_101 : f32 to vector<48x48xf32>
    %226 = arith.mulf %224, %225 : vector<48x48xf32>
    %227 = arith.addf %226, %8 : vector<48x48xf32>
    %cst_102 = arith.constant dense<0xFF800000> : vector<48xf32>
    %228 = vector.multi_reduction <maximumf>, %227, %cst_102 [1] : vector<48x48xf32> to vector<48xf32>
    %cst_103 = arith.constant 0xFF800000 : f32
    %229 = vector.broadcast %cst_103 : f32 to vector<48xf32>
    %230 = arith.maximumf %229, %228 : vector<48xf32>
    %231 = vector.shape_cast %230 : vector<48xf32> to vector<48x1xf32>
    %232 = vector.broadcast %231 : vector<48x1xf32> to vector<48x48xf32>
    %233 = arith.subf %227, %232 : vector<48x48xf32>
    %234 = math.exp %233 : vector<48x48xf32>
    %cst_104 = arith.constant dense<0.000000e+00> : vector<48xf32>
    %235 = vector.multi_reduction <add>, %234, %cst_104 [1] : vector<48x48xf32> to vector<48xf32>
    %236 = vector.shape_cast %235 : vector<48xf32> to vector<48x1xf32>
    %237 = vector.broadcast %236 : vector<48x1xf32> to vector<48x48xf32>
    %238 = arith.divf %234, %237 : vector<48x48xf32>
    %cst_105 = arith.constant dense<0.000000e+00> : vector<48x8xf32>
    %239 = tpu.matmul %238, %223, %cst_105 {dimension_numbers = #tpu.dot_dimension_numbers<[1], [0], [0], [1], [0, 0, 1, 1], [], []>} : vector<48x48xf32>, vector<48x8xf32>, vector<48x8xf32> -> vector<48x8xf32>
    %c0_106 = arith.constant 0 : index
    %c0_107 = arith.constant 0 : index
    %240 = vector.load %arg35[%c0_106, %c0_107] : memref<48x32xf32, #tpu.memory_space<vmem>>, vector<48x8xf32>
    tpu.vector_store %arg35[%c0_106, %c0_107], %239 {strides = array<i32>} : memref<48x32xf32, #tpu.memory_space<vmem>>, vector<48x8xf32>,
    %241 = vector.extract_strided_slice %218 {offsets = [0, 8], sizes = [48, 8], strides = [1, 1]} : vector<48x32xf32> to vector<48x8xf32>
    %242 = vector.extract_strided_slice %219 {offsets = [0, 8], sizes = [48, 8], strides = [1, 1]} : vector<48x32xf32> to vector<48x8xf32>
    %243 = vector.extract_strided_slice %220 {offsets = [0, 8], sizes = [48, 8], strides = [1, 1]} : vector<48x32xf32> to vector<48x8xf32>
    %cst_108 = arith.constant dense<0.000000e+00> : vector<48x48xf32>
    %244 = tpu.matmul %241, %242, %cst_108 {dimension_numbers = #tpu.dot_dimension_numbers<[1], [1], [0], [0], [0, 0, 1, 0], [], []>} : vector<48x8xf32>, vector<48x8xf32>, vector<48x48xf32> -> vector<48x48xf32>
    %cst_109 = arith.constant 0.176776692 : f32
    %245 = vector.broadcast %cst_109 : f32 to vector<48x48xf32>
    %246 = arith.mulf %244, %245 : vector<48x48xf32>
    %247 = arith.addf %246, %8 : vector<48x48xf32>
    %cst_110 = arith.constant dense<0xFF800000> : vector<48xf32>
    %248 = vector.multi_reduction <maximumf>, %247, %cst_110 [1] : vector<48x48xf32> to vector<48xf32>
    %cst_111 = arith.constant 0xFF800000 : f32
    %249 = vector.broadcast %cst_111 : f32 to vector<48xf32>
    %250 = arith.maximumf %249, %248 : vector<48xf32>
    %251 = vector.shape_cast %250 : vector<48xf32> to vector<48x1xf32>
    %252 = vector.broadcast %251 : vector<48x1xf32> to vector<48x48xf32>
    %253 = arith.subf %247, %252 : vector<48x48xf32>
    %254 = math.exp %253 : vector<48x48xf32>
    %cst_112 = arith.constant dense<0.000000e+00> : vector<48xf32>
    %255 = vector.multi_reduction <add>, %254, %cst_112 [1] : vector<48x48xf32> to vector<48xf32>
    %256 = vector.shape_cast %255 : vector<48xf32> to vector<48x1xf32>
    %257 = vector.broadcast %256 : vector<48x1xf32> to vector<48x48xf32>
    %258 = arith.divf %254, %257 : vector<48x48xf32>
    %cst_113 = arith.constant dense<0.000000e+00> : vector<48x8xf32>
    %259 = tpu.matmul %258, %243, %cst_113 {dimension_numbers = #tpu.dot_dimension_numbers<[1], [0], [0], [1], [0, 0, 1, 1], [], []>} : vector<48x48xf32>, vector<48x8xf32>, vector<48x8xf32> -> vector<48x8xf32>
    %c0_114 = arith.constant 0 : index
    %c8_115 = arith.constant 8 : index
    %260 = vector.load %arg35[%c0_114, %c8_115] : memref<48x32xf32, #tpu.memory_space<vmem>>, vector<48x8xf32>
    tpu.vector_store %arg35[%c0_114, %c8_115], %259 {strides = array<i32>} : memref<48x32xf32, #tpu.memory_space<vmem>>, vector<48x8xf32>,
    %261 = vector.extract_strided_slice %218 {offsets = [0, 16], sizes = [48, 8], strides = [1, 1]} : vector<48x32xf32> to vector<48x8xf32>
    %262 = vector.extract_strided_slice %219 {offsets = [0, 16], sizes = [48, 8], strides = [1, 1]} : vector<48x32xf32> to vector<48x8xf32>
    %263 = vector.extract_strided_slice %220 {offsets = [0, 16], sizes = [48, 8], strides = [1, 1]} : vector<48x32xf32> to vector<48x8xf32>
    %cst_116 = arith.constant dense<0.000000e+00> : vector<48x48xf32>
    %264 = tpu.matmul %261, %262, %cst_116 {dimension_numbers = #tpu.dot_dimension_numbers<[1], [1], [0], [0], [0, 0, 1, 0], [], []>} : vector<48x8xf32>, vector<48x8xf32>, vector<48x48xf32> -> vector<48x48xf32>
    %cst_117 = arith.constant 0.176776692 : f32
    %265 = vector.broadcast %cst_117 : f32 to vector<48x48xf32>
    %266 = arith.mulf %264, %265 : vector<48x48xf32>
    %267 = arith.addf %266, %8 : vector<48x48xf32>
    %cst_118 = arith.constant dense<0xFF800000> : vector<48xf32>
    %268 = vector.multi_reduction <maximumf>, %267, %cst_118 [1] : vector<48x48xf32> to vector<48xf32>
    %cst_119 = arith.constant 0xFF800000 : f32
    %269 = vector.broadcast %cst_119 : f32 to vector<48xf32>
    %270 = arith.maximumf %269, %268 : vector<48xf32>
    %271 = vector.shape_cast %270 : vector<48xf32> to vector<48x1xf32>
    %272 = vector.broadcast %271 : vector<48x1xf32> to vector<48x48xf32>
    %273 = arith.subf %267, %272 : vector<48x48xf32>
    %274 = math.exp %273 : vector<48x48xf32>
    %cst_120 = arith.constant dense<0.000000e+00> : vector<48xf32>
    %275 = vector.multi_reduction <add>, %274, %cst_120 [1] : vector<48x48xf32> to vector<48xf32>
    %276 = vector.shape_cast %275 : vector<48xf32> to vector<48x1xf32>
    %277 = vector.broadcast %276 : vector<48x1xf32> to vector<48x48xf32>
    %278 = arith.divf %274, %277 : vector<48x48xf32>
    %cst_121 = arith.constant dense<0.000000e+00> : vector<48x8xf32>
    %279 = tpu.matmul %278, %263, %cst_121 {dimension_numbers = #tpu.dot_dimension_numbers<[1], [0], [0], [1], [0, 0, 1, 1], [], []>} : vector<48x48xf32>, vector<48x8xf32>, vector<48x8xf32> -> vector<48x8xf32>
    %c0_122 = arith.constant 0 : index
    %c16_123 = arith.constant 16 : index
    %280 = vector.load %arg35[%c0_122, %c16_123] : memref<48x32xf32, #tpu.memory_space<vmem>>, vector<48x8xf32>
    tpu.vector_store %arg35[%c0_122, %c16_123], %279 {strides = array<i32>} : memref<48x32xf32, #tpu.memory_space<vmem>>, vector<48x8xf32>,
    %281 = vector.extract_strided_slice %218 {offsets = [0, 24], sizes = [48, 8], strides = [1, 1]} : vector<48x32xf32> to vector<48x8xf32>
    %282 = vector.extract_strided_slice %219 {offsets = [0, 24], sizes = [48, 8], strides = [1, 1]} : vector<48x32xf32> to vector<48x8xf32>
    %283 = vector.extract_strided_slice %220 {offsets = [0, 24], sizes = [48, 8], strides = [1, 1]} : vector<48x32xf32> to vector<48x8xf32>
    %cst_124 = arith.constant dense<0.000000e+00> : vector<48x48xf32>
    %284 = tpu.matmul %281, %282, %cst_124 {dimension_numbers = #tpu.dot_dimension_numbers<[1], [1], [0], [0], [0, 0, 1, 0], [], []>} : vector<48x8xf32>, vector<48x8xf32>, vector<48x48xf32> -> vector<48x48xf32>
    %cst_125 = arith.constant 0.176776692 : f32
    %285 = vector.broadcast %cst_125 : f32 to vector<48x48xf32>
    %286 = arith.mulf %284, %285 : vector<48x48xf32>
    %287 = arith.addf %286, %8 : vector<48x48xf32>
    %cst_126 = arith.constant dense<0xFF800000> : vector<48xf32>
    %288 = vector.multi_reduction <maximumf>, %287, %cst_126 [1] : vector<48x48xf32> to vector<48xf32>
    %cst_127 = arith.constant 0xFF800000 : f32
    %289 = vector.broadcast %cst_127 : f32 to vector<48xf32>
    %290 = arith.maximumf %289, %288 : vector<48xf32>
    %291 = vector.shape_cast %290 : vector<48xf32> to vector<48x1xf32>
    %292 = vector.broadcast %291 : vector<48x1xf32> to vector<48x48xf32>
    %293 = arith.subf %287, %292 : vector<48x48xf32>
    %294 = math.exp %293 : vector<48x48xf32>
    %cst_128 = arith.constant dense<0.000000e+00> : vector<48xf32>
    %295 = vector.multi_reduction <add>, %294, %cst_128 [1] : vector<48x48xf32> to vector<48xf32>
    %296 = vector.shape_cast %295 : vector<48xf32> to vector<48x1xf32>
    %297 = vector.broadcast %296 : vector<48x1xf32> to vector<48x48xf32>
    %298 = arith.divf %294, %297 : vector<48x48xf32>
    %cst_129 = arith.constant dense<0.000000e+00> : vector<48x8xf32>
    %299 = tpu.matmul %298, %283, %cst_129 {dimension_numbers = #tpu.dot_dimension_numbers<[1], [0], [0], [1], [0, 0, 1, 1], [], []>} : vector<48x48xf32>, vector<48x8xf32>, vector<48x8xf32> -> vector<48x8xf32>
    %c0_130 = arith.constant 0 : index
    %c24_131 = arith.constant 24 : index
    %300 = vector.load %arg35[%c0_130, %c24_131] : memref<48x32xf32, #tpu.memory_space<vmem>>, vector<48x8xf32>
    tpu.vector_store %arg35[%c0_130, %c24_131], %299 {strides = array<i32>} : memref<48x32xf32, #tpu.memory_space<vmem>>, vector<48x8xf32>,
    %c0_132 = arith.constant 0 : index
    %c0_133 = arith.constant 0 : index
    %301 = vector.load %arg35[%c0_132, %c0_133] : memref<48x32xf32, #tpu.memory_space<vmem>>, vector<48x32xf32>
    %c0_134 = arith.constant 0 : index
    %c0_135 = arith.constant 0 : index
    %302 = vector.load %arg26[%c0_134, %c0_135] : memref<32x32xf32, #tpu.memory_space<vmem>>, vector<32x32xf32>
    %cst_136 = arith.constant dense<0.000000e+00> : vector<48x32xf32>
    %303 = tpu.matmul %301, %302, %cst_136 {dimension_numbers = #tpu.dot_dimension_numbers<[1], [0], [0], [1], [0, 0, 1, 1], [], []>} : vector<48x32xf32>, vector<32x32xf32>, vector<48x32xf32> -> vector<48x32xf32>
    %c0_137 = arith.constant 0 : index
    %c0_138 = arith.constant 0 : index
    %304 = vector.load %arg27[%c0_137, %c0_138] : memref<1x32xf32, #tpu.memory_space<vmem>>, vector<1x32xf32>
    %305 = vector.broadcast %304 : vector<1x32xf32> to vector<48x32xf32>
    %306 = arith.addf %303, %305 : vector<48x32xf32>
    %307 = arith.addf %188, %306 : vector<48x32xf32>
    %c0_139 = arith.constant 0 : index
    %c0_140 = arith.constant 0 : index
    %308 = vector.load %arg28[%c0_139, %c0_140] : memref<1x32xf32, #tpu.memory_space<vmem>>, vector<1x32xf32>
    %c0_141 = arith.constant 0 : index
    %c0_142 = arith.constant 0 : index
    %309 = vector.load %arg29[%c0_141, %c0_142] : memref<1x32xf32, #tpu.memory_space<vmem>>, vector<1x32xf32>
    %cst_143 = arith.constant dense<0.000000e+00> : vector<48xf32>
    %310 = vector.multi_reduction <add>, %307, %cst_143 [1] : vector<48x32xf32> to vector<48xf32>
    %311 = vector.shape_cast %310 : vector<48xf32> to vector<48x1xf32>
    %cst_144 = arith.constant 3.200000e+01 : f32
    %312 = vector.broadcast %cst_144 : f32 to vector<48x1xf32>
    %313 = arith.divf %311, %312 : vector<48x1xf32>
    %314 = vector.broadcast %313 : vector<48x1xf32> to vector<48x32xf32>
    %315 = arith.subf %307, %314 : vector<48x32xf32>
    %316 = arith.mulf %315, %315 : vector<48x32xf32>
    %cst_145 = arith.constant dense<0.000000e+00> : vector<48xf32>
    %317 = vector.multi_reduction <add>, %316, %cst_145 [1] : vector<48x32xf32> to vector<48xf32>
    %318 = vector.shape_cast %317 : vector<48xf32> to vector<48x1xf32>
    %cst_146 = arith.constant 3.200000e+01 : f32
    %319 = vector.broadcast %cst_146 : f32 to vector<48x1xf32>
    %320 = arith.divf %318, %319 : vector<48x1xf32>
    %321 = vector.broadcast %313 : vector<48x1xf32> to vector<48x32xf32>
    %322 = arith.subf %307, %321 : vector<48x32xf32>
    %cst_147 = arith.constant 9.99999974E-6 : f32
    %323 = vector.broadcast %cst_147 : f32 to vector<48x1xf32>
    %324 = arith.addf %320, %323 : vector<48x1xf32>
    %325 = math.rsqrt %324 : vector<48x1xf32>
    %326 = vector.broadcast %325 : vector<48x1xf32> to vector<48x32xf32>
    %327 = arith.mulf %322, %326 : vector<48x32xf32>
    %328 = vector.broadcast %308 : vector<1x32xf32> to vector<48x32xf32>
    %329 = arith.mulf %327, %328 : vector<48x32xf32>
    %330 = vector.broadcast %309 : vector<1x32xf32> to vector<48x32xf32>
    %331 = arith.addf %329, %330 : vector<48x32xf32>
    %c0_148 = arith.constant 0 : index
    %c0_149 = arith.constant 0 : index
    %332 = vector.load %arg30[%c0_148, %c0_149] : memref<32x64xf32, #tpu.memory_space<vmem>>, vector<32x64xf32>
    %cst_150 = arith.constant dense<0.000000e+00> : vector<48x64xf32>
    %333 = tpu.matmul %331, %332, %cst_150 {dimension_numbers = #tpu.dot_dimension_numbers<[1], [0], [0], [1], [0, 0, 1, 1], [], []>} : vector<48x32xf32>, vector<32x64xf32>, vector<48x64xf32> -> vector<48x64xf32>
    %c0_151 = arith.constant 0 : index
    %c0_152 = arith.constant 0 : index
    %334 = vector.load %arg31[%c0_151, %c0_152] : memref<1x64xf32, #tpu.memory_space<vmem>>, vector<1x64xf32>
    %335 = vector.broadcast %334 : vector<1x64xf32> to vector<48x64xf32>
    %336 = arith.addf %333, %335 : vector<48x64xf32>
    %337 = arith.mulf %336, %336 : vector<48x64xf32>
    %338 = arith.mulf %336, %337 : vector<48x64xf32>
    %cst_153 = arith.constant 4.471500e-02 : f32
    %339 = vector.broadcast %cst_153 : f32 to vector<48x64xf32>
    %340 = arith.mulf %339, %338 : vector<48x64xf32>
    %341 = arith.addf %336, %340 : vector<48x64xf32>
    %cst_154 = arith.constant 0.797884583 : f32
    %342 = vector.broadcast %cst_154 : f32 to vector<48x64xf32>
    %343 = arith.mulf %342, %341 : vector<48x64xf32>
    %344 = math.tanh %343 : vector<48x64xf32>
    %cst_155 = arith.constant 1.000000e+00 : f32
    %345 = vector.broadcast %cst_155 : f32 to vector<48x64xf32>
    %346 = arith.addf %345, %344 : vector<48x64xf32>
    %cst_156 = arith.constant 5.000000e-01 : f32
    %347 = vector.broadcast %cst_156 : f32 to vector<48x64xf32>
    %348 = arith.mulf %347, %346 : vector<48x64xf32>
    %349 = arith.mulf %336, %348 : vector<48x64xf32>
    %c0_157 = arith.constant 0 : index
    %c0_158 = arith.constant 0 : index
    %350 = vector.load %arg32[%c0_157, %c0_158] : memref<64x32xf32, #tpu.memory_space<vmem>>, vector<64x32xf32>
    %cst_159 = arith.constant dense<0.000000e+00> : vector<48x32xf32>
    %351 = tpu.matmul %349, %350, %cst_159 {dimension_numbers = #tpu.dot_dimension_numbers<[1], [0], [0], [1], [0, 0, 1, 1], [], []>} : vector<48x64xf32>, vector<64x32xf32>, vector<48x32xf32> -> vector<48x32xf32>
    %c0_160 = arith.constant 0 : index
    %c0_161 = arith.constant 0 : index
    %352 = vector.load %arg33[%c0_160, %c0_161] : memref<1x32xf32, #tpu.memory_space<vmem>>, vector<1x32xf32>
    %353 = vector.broadcast %352 : vector<1x32xf32> to vector<48x32xf32>
    %354 = arith.addf %351, %353 : vector<48x32xf32>
    %355 = arith.mulf %354, %354 : vector<48x32xf32>
    %356 = arith.mulf %354, %355 : vector<48x32xf32>
    %cst_162 = arith.constant 4.471500e-02 : f32
    %357 = vector.broadcast %cst_162 : f32 to vector<48x32xf32>
    %358 = arith.mulf %357, %356 : vector<48x32xf32>
    %359 = arith.addf %354, %358 : vector<48x32xf32>
    %cst_163 = arith.constant 0.797884583 : f32
    %360 = vector.broadcast %cst_163 : f32 to vector<48x32xf32>
    %361 = arith.mulf %360, %359 : vector<48x32xf32>
    %362 = math.tanh %361 : vector<48x32xf32>
    %cst_164 = arith.constant 1.000000e+00 : f32
    %363 = vector.broadcast %cst_164 : f32 to vector<48x32xf32>
    %364 = arith.addf %363, %362 : vector<48x32xf32>
    %cst_165 = arith.constant 5.000000e-01 : f32
    %365 = vector.broadcast %cst_165 : f32 to vector<48x32xf32>
    %366 = arith.mulf %365, %364 : vector<48x32xf32>
    %367 = arith.mulf %354, %366 : vector<48x32xf32>
    %368 = arith.addf %307, %367 : vector<48x32xf32>
    %369 = vector.extract_strided_slice %368 {offsets = [0, 0], sizes = [1, 32], strides = [1, 1]} : vector<48x32xf32> to vector<1x32xf32>
    %370 = vector.extract_strided_slice %368 {offsets = [24, 0], sizes = [1, 32], strides = [1, 1]} : vector<48x32xf32> to vector<1x32xf32>
    %371 = tpu.concatenate %369, %370 in 0 : vector<1x32xf32>, vector<1x32xf32> -> vector<2x32xf32>
    %c0_166 = arith.constant 0 : index
    %c0_167 = arith.constant 0 : index
    %372 = vector.load %arg6[%c0_166, %c0_167] : memref<1x32xf32, #tpu.memory_space<vmem>>, vector<1x32xf32>
    %c0_168 = arith.constant 0 : index
    %c0_169 = arith.constant 0 : index
    %373 = vector.load %arg7[%c0_168, %c0_169] : memref<1x32xf32, #tpu.memory_space<vmem>>, vector<1x32xf32>
    %cst_170 = arith.constant dense<0.000000e+00> : vector<2xf32>
    %374 = vector.multi_reduction <add>, %371, %cst_170 [1] : vector<2x32xf32> to vector<2xf32>
    %375 = vector.shape_cast %374 : vector<2xf32> to vector<2x1xf32>
    %cst_171 = arith.constant 3.200000e+01 : f32
    %376 = vector.broadcast %cst_171 : f32 to vector<2x1xf32>
    %377 = arith.divf %375, %376 : vector<2x1xf32>
    %378 = vector.broadcast %377 : vector<2x1xf32> to vector<2x32xf32>
    %379 = arith.subf %371, %378 : vector<2x32xf32>
    %380 = arith.mulf %379, %379 : vector<2x32xf32>
    %cst_172 = arith.constant dense<0.000000e+00> : vector<2xf32>
    %381 = vector.multi_reduction <add>, %380, %cst_172 [1] : vector<2x32xf32> to vector<2xf32>
    %382 = vector.shape_cast %381 : vector<2xf32> to vector<2x1xf32>
    %cst_173 = arith.constant 3.200000e+01 : f32
    %383 = vector.broadcast %cst_173 : f32 to vector<2x1xf32>
    %384 = arith.divf %382, %383 : vector<2x1xf32>
    %385 = vector.broadcast %377 : vector<2x1xf32> to vector<2x32xf32>
    %386 = arith.subf %371, %385 : vector<2x32xf32>
    %cst_174 = arith.constant 9.99999974E-6 : f32
    %387 = vector.broadcast %cst_174 : f32 to vector<2x1xf32>
    %388 = arith.addf %384, %387 : vector<2x1xf32>
    %389 = math.rsqrt %388 : vector<2x1xf32>
    %390 = vector.broadcast %389 : vector<2x1xf32> to vector<2x32xf32>
    %391 = arith.mulf %386, %390 : vector<2x32xf32>
    %392 = vector.broadcast %372 : vector<1x32xf32> to vector<2x32xf32>
    %393 = arith.mulf %391, %392 : vector<2x32xf32>
    %394 = vector.broadcast %373 : vector<1x32xf32> to vector<2x32xf32>
    %395 = arith.addf %393, %394 : vector<2x32xf32>
    %c0_175 = arith.constant 0 : index
    %c0_176 = arith.constant 0 : index
    %396 = vector.load %arg8[%c0_175, %c0_176] : memref<32x128xf32, #tpu.memory_space<vmem>>, vector<32x128xf32>
    %cst_177 = arith.constant dense<0.000000e+00> : vector<2x128xf32>
    %397 = tpu.matmul %395, %396, %cst_177 {dimension_numbers = #tpu.dot_dimension_numbers<[1], [0], [0], [1], [0, 0, 1, 1], [], []>} : vector<2x32xf32>, vector<32x128xf32>, vector<2x128xf32> -> vector<2x128xf32>
    %c0_178 = arith.constant 0 : index
    %c0_179 = arith.constant 0 : index
    %398 = vector.load %arg9[%c0_178, %c0_179] : memref<1x128xf32, #tpu.memory_space<vmem>>, vector<1x128xf32>
    %399 = vector.broadcast %398 : vector<1x128xf32> to vector<2x128xf32>
    %400 = arith.addf %397, %399 : vector<2x128xf32>
    %c0_180 = arith.constant 0 : index
    %c0_181 = arith.constant 0 : index
    %401 = vector.load %arg34[%c0_180, %c0_181] : memref<2x128xf32, #tpu.memory_space<vmem>>, vector<2x128xf32>
    tpu.vector_store %arg34[%c0_180, %c0_181], %400 {strides = array<i32>} : memref<2x128xf32, #tpu.memory_space<vmem>>, vector<2x128xf32>,
    return
  }
  func.func @transform_0(%arg0: i32) -> (i32, i32) {
    %c0_i32 = arith.constant 0 : i32
    %c0_i32_0 = arith.constant 0 : i32
    %c0_i32_1 = arith.constant 0 : i32
    return %c0_i32, %c0_i32_0 : i32, i32
  }
  func.func @transform_1(%arg0: i32) -> (i32, i32) {
    %c0_i32 = arith.constant 0 : i32
    %c0_i32_0 = arith.constant 0 : i32
    %c0_i32_1 = arith.constant 0 : i32
    return %c0_i32, %c0_i32_0 : i32, i32
  }
  func.func @transform_2(%arg0: i32) -> (i32, i32) {
    %c0_i32 = arith.constant 0 : i32
    %c0_i32_0 = arith.constant 0 : i32
    %c0_i32_1 = arith.constant 0 : i32
    return %c0_i32, %c0_i32_0 : i32, i32
  }
  func.func @transform_3(%arg0: i32) -> (i32, i32) {
    %c0_i32 = arith.constant 0 : i32
    %c0_i32_0 = arith.constant 0 : i32
    %c0_i32_1 = arith.constant 0 : i32
    return %c0_i32, %c0_i32_0 : i32, i32
  }
  func.func @transform_4(%arg0: i32) -> (i32, i32) {
    %c0_i32 = arith.constant 0 : i32
    %c0_i32_0 = arith.constant 0 : i32
    %c0_i32_1 = arith.constant 0 : i32
    return %c0_i32, %c0_i32_0 : i32, i32
  }
  func.func @transform_5(%arg0: i32) -> (i32, i32) {
    %c0_i32 = arith.constant 0 : i32
    %c0_i32_0 = arith.constant 0 : i32
    %c0_i32_1 = arith.constant 0 : i32
    return %c0_i32, %c0_i32_0 : i32, i32
  }
  func.func @transform_6(%arg0: i32) -> (i32, i32) {
    %c0_i32 = arith.constant 0 : i32
    %c0_i32_0 = arith.constant 0 : i32
    %c0_i32_1 = arith.constant 0 : i32
    return %c0_i32, %c0_i32_0 : i32, i32
  }
  func.func @transform_7(%arg0: i32) -> (i32, i32) {
    %c0_i32 = arith.constant 0 : i32
    %c0_i32_0 = arith.constant 0 : i32
    %c0_i32_1 = arith.constant 0 : i32
    return %c0_i32, %c0_i32_0 : i32, i32
  }
  func.func @transform_8(%arg0: i32) -> (i32, i32) {
    %c0_i32 = arith.constant 0 : i32
    %c0_i32_0 = arith.constant 0 : i32
    %c0_i32_1 = arith.constant 0 : i32
    return %c0_i32, %c0_i32_0 : i32, i32
  }
  func.func @transform_9(%arg0: i32) -> (i32, i32) {
    %c0_i32 = arith.constant 0 : i32
    %c0_i32_0 = arith.constant 0 : i32
    %c0_i32_1 = arith.constant 0 : i32
    return %c0_i32, %c0_i32_0 : i32, i32
  }
  func.func @transform_10(%arg0: i32) -> (i32, i32) {
    %c0_i32 = arith.constant 0 : i32
    %c0_i32_0 = arith.constant 0 : i32
    %c0_i32_1 = arith.constant 0 : i32
    return %c0_i32, %c0_i32_0 : i32, i32
  }
  func.func @transform_11(%arg0: i32) -> (i32, i32) {
    %c0_i32 = arith.constant 0 : i32
    %c0_i32_0 = arith.constant 0 : i32
    %c0_i32_1 = arith.constant 0 : i32
    return %c0_i32, %c0_i32_0 : i32, i32
  }
  func.func @transform_12(%arg0: i32) -> (i32, i32) {
    %c0_i32 = arith.constant 0 : i32
    %c0_i32_0 = arith.constant 0 : i32
    %c0_i32_1 = arith.constant 0 : i32
    return %c0_i32, %c0_i32_0 : i32, i32
  }
  func.func @transform_13(%arg0: i32) -> (i32, i32) {
    %c0_i32 = arith.constant 0 : i32
    %c0_i32_0 = arith.constant 0 : i32
    %c0_i32_1 = arith.constant 0 : i32
    return %c0_i32, %c0_i32_0 : i32, i32
  }
  func.func @transform_14(%arg0: i32) -> (i32, i32) {
    %c0_i32 = arith.constant 0 : i32
    %c0_i32_0 = arith.constant 0 : i32
    %c0_i32_1 = arith.constant 0 : i32
    return %c0_i32, %c0_i32_0 : i32, i32
  }
  func.func @transform_15(%arg0: i32) -> (i32, i32) {
    %c0_i32 = arith.constant 0 : i32
    %c0_i32_0 = arith.constant 0 : i32
    %c0_i32_1 = arith.constant 0 : i32
    return %c0_i32, %c0_i32_0 : i32, i32
  }
  func.func @transform_16(%arg0: i32) -> (i32, i32) {
    %c0_i32 = arith.constant 0 : i32
    %c0_i32_0 = arith.constant 0 : i32
    %c0_i32_1 = arith.constant 0 : i32
    return %c0_i32, %c0_i32_0 : i32, i32
  }
  func.func @transform_17(%arg0: i32) -> (i32, i32) {
    %c0_i32 = arith.constant 0 : i32
    %c0_i32_0 = arith.constant 0 : i32
    %c0_i32_1 = arith.constant 0 : i32
    return %c0_i32, %c0_i32_0 : i32, i32
  }
  func.func @transform_18(%arg0: i32) -> (i32, i32) {
    %c0_i32 = arith.constant 0 : i32
    %c0_i32_0 = arith.constant 0 : i32
    %c0_i32_1 = arith.constant 0 : i32
    return %c0_i32, %c0_i32_0 : i32, i32
  }
  func.func @transform_19(%arg0: i32) -> (i32, i32) {
    %c0_i32 = arith.constant 0 : i32
    %c0_i32_0 = arith.constant 0 : i32
    %c0_i32_1 = arith.constant 0 : i32
    return %c0_i32, %c0_i32_0 : i32, i32
  }
  func.func @transform_20(%arg0: i32) -> (i32, i32) {
    %c0_i32 = arith.constant 0 : i32
    %c0_i32_0 = arith.constant 0 : i32
    %c0_i32_1 = arith.constant 0 : i32
    return %c0_i32, %c0_i32_0 : i32, i32
  }
  func.func @transform_21(%arg0: i32) -> (i32, i32) {
    %c0_i32 = arith.constant 0 : i32
    %c0_i32_0 = arith.constant 0 : i32
    %c0_i32_1 = arith.constant 0 : i32
    return %c0_i32, %c0_i32_0 : i32, i32
  }
  func.func @transform_22(%arg0: i32) -> (i32, i32) {
    %c0_i32 = arith.constant 0 : i32
    %c0_i32_0 = arith.constant 0 : i32
    %c0_i32_1 = arith.constant 0 : i32
    return %c0_i32, %c0_i32_0 : i32, i32
  }
  func.func @transform_23(%arg0: i32) -> (i32, i32) {
    %c0_i32 = arith.constant 0 : i32
    %c0_i32_0 = arith.constant 0 : i32
    %c0_i32_1 = arith.constant 0 : i32
    return %c0_i32, %c0_i32_0 : i32, i32
  }
  func.func @transform_24(%arg0: i32) -> (i32, i32) {
    %c0_i32 = arith.constant 0 : i32
    %c0_i32_0 = arith.constant 0 : i32
    %c0_i32_1 = arith.constant 0 : i32
    return %c0_i32, %c0_i32_0 : i32, i32
  }
  func.func @transform_25(%arg0: i32) -> (i32, i32) {
    %c0_i32 = arith.constant 0 : i32
    %c0_i32_0 = arith.constant 0 : i32
    %c0_i32_1 = arith.constant 0 : i32
    return %c0_i32, %c0_i32_0 : i32, i32
  }
  func.func @transform_26(%arg0: i32) -> (i32, i32) {
    %c0_i32 = arith.constant 0 : i32
    %c0_i32_0 = arith.constant 0 : i32
    %c0_i32_1 = arith.constant 0 : i32
    return %c0_i32, %c0_i32_0 : i32, i32
  }
  func.func @transform_27(%arg0: i32) -> (i32, i32) {
    %c0_i32 = arith.constant 0 : i32
    %c0_i32_0 = arith.constant 0 : i32
    %c0_i32_1 = arith.constant 0 : i32
    return %c0_i32, %c0_i32_0 : i32, i32
  }
  func.func @transform_28(%arg0: i32) -> (i32, i32) {
    %c0_i32 = arith.constant 0 : i32
    %c0_i32_0 = arith.constant 0 : i32
    %c0_i32_1 = arith.constant 0 : i32
    return %c0_i32, %c0_i32_0 : i32, i32
  }
  func.func @transform_29(%arg0: i32) -> (i32, i32) {
    %c0_i32 = arith.constant 0 : i32
    %c0_i32_0 = arith.constant 0 : i32
    %c0_i32_1 = arith.constant 0 : i32
    return %c0_i32, %c0_i32_0 : i32, i32
  }
  func.func @transform_30(%arg0: i32) -> (i32, i32) {
    %c0_i32 = arith.constant 0 : i32
    %c0_i32_0 = arith.constant 0 : i32
    %c0_i32_1 = arith.constant 0 : i32
    return %c0_i32, %c0_i32_0 : i32, i32
  }
  func.func @transform_31(%arg0: i32) -> (i32, i32) {
    %c0_i32 = arith.constant 0 : i32
    %c0_i32_0 = arith.constant 0 : i32
    %c0_i32_1 = arith.constant 0 : i32
    return %c0_i32, %c0_i32_0 : i32, i32
  }
  func.func @transform_32(%arg0: i32) -> (i32, i32) {
    %c0_i32 = arith.constant 0 : i32
    %c0_i32_0 = arith.constant 0 : i32
    %c0_i32_1 = arith.constant 0 : i32
    return %c0_i32, %c0_i32_0 : i32, i32
  }
  func.func @transform_33(%arg0: i32) -> (i32, i32) {
    %c0_i32 = arith.constant 0 : i32
    %c0_i32_0 = arith.constant 0 : i32
    %c0_i32_1 = arith.constant 0 : i32
    return %c0_i32, %c0_i32_0 : i32, i32
  }
}

</mosaic_0001>

<llo_original>
// kernel: vit_forward.1
$region0: #{vit_forward.1}
  #allocation0 [shape = 'u32[]', space=smem, size = 0x4, offset = 0x4, fixed_abs, tag = 'smem constant byte address 0x4 - core index']
  #allocation1 [shape = 'u32[144,128]{1,0:T(1,128)}', space=vmem, size = 0x12000, scoped, tag = 'internal scratch']
  #allocation2 [shape = 'f32[48,32]{1,0:T(8,128)}', space=vmem, size = 0x6000, scoped, tag = 'scratch operand']
  %s0 = inlined_call_operand.smem [shape: u32[34], index: -1, kind: input, shape index: {}]
  %s1 = sld [smem:[%s0]]
  %s2 = scalar_lea.smem %s0, 1
  %s3 = sld [smem:[%s2]]
  %s4 = scalar_lea.smem %s0, 2
  %s5 = sld [smem:[%s4]]
  %s6 = scalar_lea.smem %s0, 3
  %s7 = sld [smem:[%s6]]
  %s8 = scalar_lea.smem %s0, 4
  %s9 = sld [smem:[%s8]]
  %s10 = scalar_lea.smem %s0, 5
  %s11 = sld [smem:[%s10]]
  %s12 = scalar_lea.smem %s0, 6
  %s13 = sld [smem:[%s12]]
  %s14 = scalar_lea.smem %s0, 7
  %s15 = sld [smem:[%s14]]
  %s16 = scalar_lea.smem %s0, 8
  %s17 = sld [smem:[%s16]]
  %s18 = scalar_lea.smem %s0, 9
  %s19 = sld [smem:[%s18]]
  %s20 = scalar_lea.smem %s0, 10
  %s21 = sld [smem:[%s20]]
  %s22 = scalar_lea.smem %s0, 11
  %s23 = sld [smem:[%s22]]
  %s24 = scalar_lea.smem %s0, 12
  %s25 = sld [smem:[%s24]]
  %s26 = scalar_lea.smem %s0, 13
  %s27 = sld [smem:[%s26]]
  %s28 = scalar_lea.smem %s0, 14
  %s29 = sld [smem:[%s28]]
  %s30 = scalar_lea.smem %s0, 15
  %s31 = sld [smem:[%s30]]
  %s32 = scalar_lea.smem %s0, 16
  %s33 = sld [smem:[%s32]]
  %s34 = scalar_lea.smem %s0, 17
  %s35 = sld [smem:[%s34]]
  %s36 = scalar_lea.smem %s0, 18
  %s37 = sld [smem:[%s36]]
  %s38 = scalar_lea.smem %s0, 19
  %s39 = sld [smem:[%s38]]
  %s40 = scalar_lea.smem %s0, 20
  %s41 = sld [smem:[%s40]]
  %s42 = scalar_lea.smem %s0, 21
  %s43 = sld [smem:[%s42]]
  %s44 = scalar_lea.smem %s0, 22
  %s45 = sld [smem:[%s44]]
  %s46 = scalar_lea.smem %s0, 23
  %s47 = sld [smem:[%s46]]
  %s48 = scalar_lea.smem %s0, 24
  %s49 = sld [smem:[%s48]]
  %s50 = scalar_lea.smem %s0, 25
  %s51 = sld [smem:[%s50]]
  %s52 = scalar_lea.smem %s0, 26
  %s53 = sld [smem:[%s52]]
  %s54 = scalar_lea.smem %s0, 27
  %s55 = sld [smem:[%s54]]
  %s56 = scalar_lea.smem %s0, 28
  %s57 = sld [smem:[%s56]]
  %s58 = scalar_lea.smem %s0, 29
  %s59 = sld [smem:[%s58]]
  %s60 = scalar_lea.smem %s0, 30
  %s61 = sld [smem:[%s60]]
  %s62 = scalar_lea.smem %s0, 31
  %s63 = sld [smem:[%s62]]
  %s64 = scalar_lea.smem %s0, 32
  %s65 = sld [smem:[%s64]]
  %s66 = scalar_lea.smem %s0, 33
  %s67 = sld [smem:[%s66]]
  %s68 = sld [smem:[#allocation0]]
  $region142: #{vit_forward.1} parent=0
    _
  %s70 = ssub.s32 1, %s68
  %s71 = scalar_select 0, %s70, %s68
  $region1: #{vit_forward.1} parent=0
    #allocation3 [shape = 'u8[1024]{0}', space=vmem, size = 0x400, scoped, tag = 'output window, operand 0, single buffered']
    #allocation4 [shape = 's32[1]{0}', space=sflag, size = 0x4, scoped, tag = 'scoped memory for vit_forward.1']
    %72 = vsyncpa [#allocation4], 0
    // Predicated region
    $region2: #{vit_forward.1} parent=1 // pred_check
      _
    $region3: #{vit_forward.1} parent=1 // pred_check_branch
      %74 = sbr.rel (0) target = $region5
    $region4: #{vit_forward.1} parent=1 // pred_region
      _
    $region5: #{vit_forward.1} parent=1 // pred_fallthru
      _
    // Predicated region
    $region6: #{vit_forward.1} parent=1 // pred_check
      _
    $region7: #{vit_forward.1} parent=1 // pred_check_branch
      %76 = sbr.rel (0) target = $region9
    $region8: #{vit_forward.1} parent=1 // pred_region
      _
    $region9: #{vit_forward.1} parent=1 // pred_fallthru
      _
    // Predicated region
    $region10: #{vit_forward.1} parent=1 // pred_check
      _
    $region11: #{vit_forward.1} parent=1 // pred_check_branch
      %78 = sbr.rel (0) target = $region13
    $region12: #{vit_forward.1} parent=1 // pred_region
      _
    $region13: #{vit_forward.1} parent=1 // pred_fallthru
      _
    // Predicated region
    $region14: #{vit_forward.1} parent=1 // pred_check
      _
    $region15: #{vit_forward.1} parent=1 // pred_check_branch
      %80 = sbr.rel (0) target = $region17
    $region16: #{vit_forward.1} parent=1 // pred_region
      _
    $region17: #{vit_forward.1} parent=1 // pred_fallthru
      _
    // Predicated region
    $region18: #{vit_forward.1} parent=1 // pred_check
      _
    $region19: #{vit_forward.1} parent=1 // pred_check_branch
      %82 = sbr.rel (0) target = $region21
    $region20: #{vit_forward.1} parent=1 // pred_region
      _
    $region21: #{vit_forward.1} parent=1 // pred_fallthru
      _
    // Predicated region
    $region22: #{vit_forward.1} parent=1 // pred_check
      _
    $region23: #{vit_forward.1} parent=1 // pred_check_branch
      %84 = sbr.rel (0) target = $region25
    $region24: #{vit_forward.1} parent=1 // pred_region
      _
    $region25: #{vit_forward.1} parent=1 // pred_fallthru
      _
    // Predicated region
    $region26: #{vit_forward.1} parent=1 // pred_check
      _
    $region27: #{vit_forward.1} parent=1 // pred_check_branch
      %86 = sbr.rel (0) target = $region29
    $region28: #{vit_forward.1} parent=1 // pred_region
      _
    $region29: #{vit_forward.1} parent=1 // pred_fallthru
      _
    // Predicated region
    $region30: #{vit_forward.1} parent=1 // pred_check
      _
    $region31: #{vit_forward.1} parent=1 // pred_check_branch
      %88 = sbr.rel (0) target = $region33
    $region32: #{vit_forward.1} parent=1 // pred_region
      _
    $region33: #{vit_forward.1} parent=1 // pred_fallthru
      _
    // Predicated region
    $region34: #{vit_forward.1} parent=1 // pred_check
      _
    $region35: #{vit_forward.1} parent=1 // pred_check_branch
      %90 = sbr.rel (0) target = $region37
    $region36: #{vit_forward.1} parent=1 // pred_region
      _
    $region37: #{vit_forward.1} parent=1 // pred_fallthru
      _
    // Predicated region
    $region38: #{vit_forward.1} parent=1 // pred_check
      _
    $region39: #{vit_forward.1} parent=1 // pred_check_branch
      %92 = sbr.rel (0) target = $region41
    $region40: #{vit_forward.1} parent=1 // pred_region
      _
    $region41: #{vit_forward.1} parent=1 // pred_fallthru
      _
    // Predicated region
    $region42: #{vit_forward.1} parent=1 // pred_check
      _
    $region43: #{vit_forward.1} parent=1 // pred_check_branch
      %94 = sbr.rel (0) target = $region45
    $region44: #{vit_forward.1} parent=1 // pred_region
      _
    $region45: #{vit_forward.1} parent=1 // pred_fallthru
      _
    // Predicated region
    $region46: #{vit_forward.1} parent=1 // pred_check
      _
    $region47: #{vit_forward.1} parent=1 // pred_check_branch
      %96 = sbr.rel (0) target = $region49
    $region48: #{vit_forward.1} parent=1 // pred_region
      _
    $region49: #{vit_forward.1} parent=1 // pred_fallthru
      _
    // Predicated region
    $region50: #{vit_forward.1} parent=1 // pred_check
      _
    $region51: #{vit_forward.1} parent=1 // pred_check_branch
      %98 = sbr.rel (0) target = $region53
    $region52: #{vit_forward.1} parent=1 // pred_region
      _
    $region53: #{vit_forward.1} parent=1 // pred_fallthru
      _
    // Predicated region
    $region54: #{vit_forward.1} parent=1 // pred_check
      _
    $region55: #{vit_forward.1} parent=1 // pred_check_branch
      %100 = sbr.rel (0) target = $region57
    $region56: #{vit_forward.1} parent=1 // pred_region
      _
    $region57: #{vit_forward.1} parent=1 // pred_fallthru
      _
    // Predicated region
    $region58: #{vit_forward.1} parent=1 // pred_check
      _
    $region59: #{vit_forward.1} parent=1 // pred_check_branch
      %102 = sbr.rel (0) target = $region61
    $region60: #{vit_forward.1} parent=1 // pred_region
      _
    $region61: #{vit_forward.1} parent=1 // pred_fallthru
      _
    // Predicated region
    $region62: #{vit_forward.1} parent=1 // pred_check
      _
    $region63: #{vit_forward.1} parent=1 // pred_check_branch
      %104 = sbr.rel (0) target = $region65
    $region64: #{vit_forward.1} parent=1 // pred_region
      _
    $region65: #{vit_forward.1} parent=1 // pred_fallthru
      _
    // Predicated region
    $region66: #{vit_forward.1} parent=1 // pred_check
      _
    $region67: #{vit_forward.1} parent=1 // pred_check_branch
      %106 = sbr.rel (0) target = $region69
    $region68: #{vit_forward.1} parent=1 // pred_region
      _
    $region69: #{vit_forward.1} parent=1 // pred_fallthru
      _
    // Predicated region
    $region70: #{vit_forward.1} parent=1 // pred_check
      _
    $region71: #{vit_forward.1} parent=1 // pred_check_branch
      %108 = sbr.rel (0) target = $region73
    $region72: #{vit_forward.1} parent=1 // pred_region
      _
    $region73: #{vit_forward.1} parent=1 // pred_fallthru
      _
    // Predicated region
    $region74: #{vit_forward.1} parent=1 // pred_check
      _
    $region75: #{vit_forward.1} parent=1 // pred_check_branch
      %110 = sbr.rel (0) target = $region77
    $region76: #{vit_forward.1} parent=1 // pred_region
      _
    $region77: #{vit_forward.1} parent=1 // pred_fallthru
      _
    // Predicated region
    $region78: #{vit_forward.1} parent=1 // pred_check
      _
    $region79: #{vit_forward.1} parent=1 // pred_check_branch
      %112 = sbr.rel (0) target = $region81
    $region80: #{vit_forward.1} parent=1 // pred_region
      _
    $region81: #{vit_forward.1} parent=1 // pred_fallthru
      _
    // Predicated region
    $region82: #{vit_forward.1} parent=1 // pred_check
      _
    $region83: #{vit_forward.1} parent=1 // pred_check_branch
      %114 = sbr.rel (0) target = $region85
    $region84: #{vit_forward.1} parent=1 // pred_region
      _
    $region85: #{vit_forward.1} parent=1 // pred_fallthru
      _
    // Predicated region
    $region86: #{vit_forward.1} parent=1 // pred_check
      _
    $region87: #{vit_forward.1} parent=1 // pred_check_branch
      %116 = sbr.rel (0) target = $region89
    $region88: #{vit_forward.1} parent=1 // pred_region
      _
    $region89: #{vit_forward.1} parent=1 // pred_fallthru
      _
    // Predicated region
    $region90: #{vit_forward.1} parent=1 // pred_check
      _
    $region91: #{vit_forward.1} parent=1 // pred_check_branch
      %118 = sbr.rel (0) target = $region93
    $region92: #{vit_forward.1} parent=1 // pred_region
      _
    $region93: #{vit_forward.1} parent=1 // pred_fallthru
      _
    // Predicated region
    $region94: #{vit_forward.1} parent=1 // pred_check
      _
    $region95: #{vit_forward.1} parent=1 // pred_check_branch
      %120 = sbr.rel (0) target = $region97
    $region96: #{vit_forward.1} parent=1 // pred_region
      _
    $region97: #{vit_forward.1} parent=1 // pred_fallthru
      _
    // Predicated region
    $region98: #{vit_forward.1} parent=1 // pred_check
      _
    $region99: #{vit_forward.1} parent=1 // pred_check_branch
      %122 = sbr.rel (0) target = $region101
    $region100: #{vit_forward.1} parent=1 // pred_region
      _
    $region101: #{vit_forward.1} parent=1 // pred_fallthru
      _
    // Predicated region
    $region102: #{vit_forward.1} parent=1 // pred_check
      _
    $region103: #{vit_forward.1} parent=1 // pred_check_branch
      %124 = sbr.rel (0) target = $region105
    $region104: #{vit_forward.1} parent=1 // pred_region
      _
    $region105: #{vit_forward.1} parent=1 // pred_fallthru
      _
    // Predicated region
    $region106: #{vit_forward.1} parent=1 // pred_check
      _
    $region107: #{vit_forward.1} parent=1 // pred_check_branch
      %126 = sbr.rel (0) target = $region109
    $region108: #{vit_forward.1} parent=1 // pred_region
      _
    $region109: #{vit_forward.1} parent=1 // pred_fallthru
      _
    // Predicated region
    $region110: #{vit_forward.1} parent=1 // pred_check
      _
    $region111: #{vit_forward.1} parent=1 // pred_check_branch
      %128 = sbr.rel (0) target = $region113
    $region112: #{vit_forward.1} parent=1 // pred_region
      _
    $region113: #{vit_forward.1} parent=1 // pred_fallthru
      _
    // Predicated region
    $region114: #{vit_forward.1} parent=1 // pred_check
      _
    $region115: #{vit_forward.1} parent=1 // pred_check_branch
      %130 = sbr.rel (0) target = $region117
    $region116: #{vit_forward.1} parent=1 // pred_region
      _
    $region117: #{vit_forward.1} parent=1 // pred_fallthru
      _
    // Predicated region
    $region118: #{vit_forward.1} parent=1 // pred_check
      _
    $region119: #{vit_forward.1} parent=1 // pred_check_branch
      %132 = sbr.rel (0) target = $region121
    $region120: #{vit_forward.1} parent=1 // pred_region
      _
    $region121: #{vit_forward.1} parent=1 // pred_fallthru
      _
    // Predicated region
    $region122: #{vit_forward.1} parent=1 // pred_check
      _
    $region123: #{vit_forward.1} parent=1 // pred_check_branch
      %134 = sbr.rel (0) target = $region125
    $region124: #{vit_forward.1} parent=1 // pred_region
      _
    $region125: #{vit_forward.1} parent=1 // pred_fallthru
      _
    // Predicated region
    $region126: #{vit_forward.1} parent=1 // pred_check
      _
    $region127: #{vit_forward.1} parent=1 // pred_check_branch
      %136 = sbr.rel (0) target = $region129
    $region128: #{vit_forward.1} parent=1 // pred_region
      _
    $region129: #{vit_forward.1} parent=1 // pred_fallthru
      _
    // Predicated region
    $region130: #{vit_forward.1} parent=1 // pred_check
      _
    $region131: #{vit_forward.1} parent=1 // pred_check_branch
      %138 = sbr.rel (0) target = $region133
    $region132: #{vit_forward.1} parent=1 // pred_region
      _
    $region133: #{vit_forward.1} parent=1 // pred_fallthru
      _
    %v139 = vld [vmem:[%s1] sm:$0xff]
    %v140 = vld [vmem:[%s1 + $0x8] sm:$0xff]
    %v141 = vld [vmem:[%s1 + $0x10] sm:$0xff]
    %v142 = vld [vmem:[%s1 + $0x18] sm:$0xff]
    %v143 = vld [vmem:[%s1 + $0x20] sm:$0xff]
    %v144 = vld [vmem:[%s1 + $0x28] sm:$0xff]
    %v145 = vld [vmem:[%s5] sm:$0xff]
    %v146 = vld [vmem:[%s5 + $0x8] sm:$0xff]
    %v147 = vld [vmem:[%s5 + $0x10] sm:$0xff]
    %v148 = vld [vmem:[%s5 + $0x18] sm:$0xff]
    %v149 = vld [vmem:[%s5 + $0x20] sm:$0xff]
    %v150 = vld [vmem:[%s5 + $0x28] sm:$0xff]
    %v151 = vld [vmem:[%s7] sm:$0x1]
    %v153 = vlaneseq
    %v154 = vshrl.u32 %v153, 7
    %v155 = vsub.s32 0, %v154
    %v156 = vrot.slane %v151, %v155
    %vm158 = vcmask 392192
    %v160 = vsel %vm158, %v139, 0
    %v163 = vsel %vm158, %v140, 0
    %v166 = vsel %vm158, %v141, 0
    %v169 = vsel %vm158, %v142, 0
    %v172 = vsel %vm158, %v143, 0
    %v175 = vsel %vm158, %v144, 0
    %177 = vmatprep.subr.mxu0 0.0
    %178 = vmatpush1.msra.mxu0 %v145
    %179 = vmatprep.subr.mxu0 0.0
    %180 = vmatpush1.msra.mxu0 %v146
    %181 = vmatprep.subr.mxu0 0.0
    %182 = vmatpush1.msra.mxu0 %v147
    %183 = vmatprep.subr.mxu0 0.0
    %184 = vmatpush1.msra.mxu0 %v148
    %185 = vmatprep.subr.mxu0 0.0
    %186 = vmatpush1.msra.mxu0 %v149
    %187 = vmatprep.subr.mxu0 0.0
    %188 = vmatpush1.msra.mxu0 %v150
    %189 = vmatprep.subr.mxu0 0.0
    %190 = vmatpush1.msra.mxu0 0.0
    %191 = vmatprep.subr.mxu0 0.0
    %192 = vmatpush1.msra.mxu0 0.0
    %193 = vmatprep.subr.mxu0 0.0
    %194 = vmatpush1.msra.mxu0 0.0
    %195 = vmatprep.subr.mxu0 0.0
    %196 = vmatpush1.msra.mxu0 0.0
    %197 = vmatprep.subr.mxu0 0.0
    %198 = vmatpush1.msra.mxu0 0.0
    %199 = vmatprep.subr.mxu0 0.0
    %200 = vmatpush1.msra.mxu0 0.0
    %201 = vmatprep.subr.mxu0 0.0
    %202 = vmatpush1.msra.mxu0 0.0
    %203 = vmatprep.subr.mxu0 0.0
    %204 = vmatpush1.msra.mxu0 0.0
    %205 = vmatprep.subr.mxu0 0.0
    %206 = vmatpush1.msra.mxu0 0.0
    %207 = vmatprep.subr.mxu0 0.0
    %208 = vmatpush1.msra.mxu0 0.0
    %209 = vmatprep.subr.mxu0 0.0
    %210 = vmatpush1.msra.mxu0 0.0
    %211 = vmatprep.subr.mxu0 0.0
    %212 = vmatpush1.msra.mxu0 0.0
    %213 = vmatprep.subr.mxu0 0.0
    %214 = vmatpush1.msra.mxu0 0.0
    %215 = vmatprep.subr.mxu0 0.0
    %216 = vmatpush1.msra.mxu0 0.0
    %217 = vmatprep.subr.mxu0 0.0
    %218 = vmatpush1.msra.mxu0 0.0
    %219 = vmatprep.subr.mxu0 0.0
    %220 = vmatpush1.msra.mxu0 0.0
    %221 = vmatprep.subr.mxu0 0.0
    %222 = vmatpush1.msra.mxu0 0.0
    %223 = vmatprep.subr.mxu0 0.0
    %224 = vmatpush1.msra.mxu0 0.0
    %225 = vmatprep.subr.mxu0 0.0
    %226 = vmatpush1.msra.mxu0 0.0
    %227 = vmatprep.subr.mxu0 0.0
    %228 = vmatpush1.msra.mxu0 0.0
    %229 = vmatprep.subr.mxu0 0.0
    %230 = vmatpush1.msra.mxu0 0.0
    %231 = vmatprep.subr.mxu0 0.0
    %232 = vmatpush1.msra.mxu0 0.0
    %233 = vmatprep.subr.mxu0 0.0
    %234 = vmatpush1.msra.mxu0 0.0
    %235 = vmatprep.subr.mxu0 0.0
    %236 = vmatpush1.msra.mxu0 0.0
    %237 = vmatprep.subr.mxu0 0.0
    %238 = vmatpush1.msra.mxu0 0.0
    %239 = vmatprep.subr.mxu0 0.0
    %240 = vmatpush1.msra.mxu0 0.0
    %241 = vmatprep.mubr.f32.mxu0 0.0
    %242 = vmatmul.mubr.f32.gmra.mrb[0].mxu0 %v160
    %v243 = vpop.f32.mrb[0].mxu0
    %v244 = vadd.f32 %v156, %v243
    %v245 = vpop.f32.mrb[0].mxu0
    %246 = vmatprep.mubr.f32.mxu0 0.0
    %247 = vmatmul.mubr.f32.gmra.mrb[0].mxu0 %v163
    %v248 = vpop.f32.mrb[0].mxu0
    %v249 = vadd.f32 %v156, %v248
    %v250 = vpop.f32.mrb[0].mxu0
    %251 = vmatprep.mubr.f32.mxu0 0.0
    %252 = vmatmul.mubr.f32.gmra.mrb[0].mxu0 %v166
    %v253 = vpop.f32.mrb[0].mxu0
    %v254 = vadd.f32 %v156, %v253
    %v255 = vpop.f32.mrb[0].mxu0
    %256 = vmatprep.mubr.f32.mxu0 0.0
    %257 = vmatmul.mubr.f32.gmra.mrb[0].mxu0 %v169
    %v258 = vpop.f32.mrb[0].mxu0
    %v259 = vadd.f32 %v156, %v258
    %v260 = vpop.f32.mrb[0].mxu0
    %261 = vmatprep.mubr.f32.mxu0 0.0
    %262 = vmatmul.mubr.f32.gmra.mrb[0].mxu0 %v172
    %v263 = vpop.f32.mrb[0].mxu0
    %v264 = vadd.f32 %v156, %v263
    %v265 = vpop.f32.mrb[0].mxu0
    %266 = vmatprep.mubr.f32.mxu0 0.0
    %267 = vmatmul.mubr.f32.gmra.mrb[0].mxu0 %v175
    %v268 = vpop.f32.mrb[0].mxu0
    %v269 = vadd.f32 %v156, %v268
    %v270 = vpop.f32.mrb[0].mxu0
    %271 = vdwg.mxu0
    %v272 = vld [vmem:[%s3] sm:$0xff]
    %v273 = vld [vmem:[%s3 + $0x8] sm:$0xff]
    %v274 = vld [vmem:[%s3 + $0x10] sm:$0xff]
    %v275 = vld [vmem:[%s3 + $0x18] sm:$0xff]
    %v276 = vld [vmem:[%s3 + $0x20] sm:$0xff]
    %v277 = vld [vmem:[%s3 + $0x28] sm:$0xff]
    %v278 = vadd.f32 %v244, %v272
    %v279 = vadd.f32 %v249, %v273
    %v280 = vadd.f32 %v254, %v274
    %v281 = vadd.f32 %v259, %v275
    %v282 = vadd.f32 %v264, %v276
    %v283 = vadd.f32 %v269, %v277
    %v284 = vld [vmem:[%s9] sm:$0xff]
    %v285 = vld [vmem:[%s9 + $0x8] sm:$0xff]
    %v286 = vld [vmem:[%s9 + $0x10] sm:$0xff]
    %v287 = vld [vmem:[%s9 + $0x18] sm:$0xff]
    %v288 = vld [vmem:[%s9 + $0x20] sm:$0xff]
    %v289 = vld [vmem:[%s9 + $0x28] sm:$0xff]
    %v290 = vld [vmem:[%s19] sm:$0x1]
    %v291 = vld [vmem:[%s21] sm:$0x1]
    %vm292 = vcmask 261120
    %v293 = vsel %vm292, %v278, 0.0
    %294 = vadd.xlane.f32.xlu0 %v293
    %v295 = vpop.xlane.xlu0 %294
    %v296 = vsel %vm292, %v279, 0.0
    %297 = vadd.xlane.f32.xlu0 %v296
    %v298 = vpop.xlane.xlu0 %297
    %v299 = vsel %vm292, %v280, 0.0
    %300 = vadd.xlane.f32.xlu0 %v299
    %v301 = vpop.xlane.xlu0 %300
    %v302 = vsel %vm292, %v281, 0.0
    %303 = vadd.xlane.f32.xlu0 %v302
    %v304 = vpop.xlane.xlu0 %303
    %v305 = vsel %vm292, %v282, 0.0
    %306 = vadd.xlane.f32.xlu0 %v305
    %v307 = vpop.xlane.xlu0 %306
    %v308 = vsel %vm292, %v283, 0.0
    %309 = vadd.xlane.f32.xlu0 %v308
    %v310 = vpop.xlane.xlu0 %309
    %v311 = vrcp.pop 32.0
    %v312 = vmul.f32 %v295, %v311
    %v313 = vmul.f32 %v298, %v311
    %v314 = vmul.f32 %v301, %v311
    %v315 = vmul.f32 %v304, %v311
    %v316 = vmul.f32 %v307, %v311
    %v317 = vmul.f32 %v310, %v311
    %v318 = vsub.f32 %v278, %v312
    %v319 = vsub.f32 %v279, %v313
    %v320 = vsub.f32 %v280, %v314
    %v321 = vsub.f32 %v281, %v315
    %v322 = vsub.f32 %v282, %v316
    %v323 = vsub.f32 %v283, %v317
    %v324 = vmul.f32 %v318, %v318
    %v325 = vmul.f32 %v319, %v319
    %v326 = vmul.f32 %v320, %v320
    %v327 = vmul.f32 %v321, %v321
    %v328 = vmul.f32 %v322, %v322
    %v329 = vmul.f32 %v323, %v323
    %v330 = vsel %vm292, %v324, 0.0
    %331 = vadd.xlane.f32.xlu0 %v330
    %v332 = vpop.xlane.xlu0 %331
    %v333 = vsel %vm292, %v325, 0.0
    %334 = vadd.xlane.f32.xlu0 %v333
    %v335 = vpop.xlane.xlu0 %334
    %v336 = vsel %vm292, %v326, 0.0
    %337 = vadd.xlane.f32.xlu0 %v336
    %v338 = vpop.xlane.xlu0 %337
    %v339 = vsel %vm292, %v327, 0.0
    %340 = vadd.xlane.f32.xlu0 %v339
    %v341 = vpop.xlane.xlu0 %340
    %v342 = vsel %vm292, %v328, 0.0
    %343 = vadd.xlane.f32.xlu0 %v342
    %v344 = vpop.xlane.xlu0 %343
    %v345 = vsel %vm292, %v329, 0.0
    %346 = vadd.xlane.f32.xlu0 %v345
    %v347 = vpop.xlane.xlu0 %346
    %v348 = vmul.f32 %v332, %v311
    %v349 = vmul.f32 %v335, %v311
    %v350 = vmul.f32 %v338, %v311
    %v351 = vmul.f32 %v341, %v311
    %v352 = vmul.f32 %v344, %v311
    %v353 = vmul.f32 %v347, %v311
    %v354 = vadd.f32 %v348, 1e-05
    %v355 = vadd.f32 %v349, 1e-05
    %v356 = vadd.f32 %v350, 1e-05
    %v357 = vadd.f32 %v351, 1e-05
    %v358 = vadd.f32 %v352, 1e-05
    %v359 = vadd.f32 %v353, 1e-05
    %v360 = vrsqrt.pop %v354
    %v361 = vrsqrt.pop %v355
    %v362 = vrsqrt.pop %v356
    %v363 = vrsqrt.pop %v357
    %v364 = vrsqrt.pop %v358
    %v365 = vrsqrt.pop %v359
    %v366 = vmul.f32 %v318, %v360
    %v367 = vmul.f32 %v319, %v361
    %v368 = vmul.f32 %v320, %v362
    %v369 = vmul.f32 %v321, %v363
    %v370 = vmul.f32 %v322, %v364
    %v371 = vmul.f32 %v323, %v365
    %v373 = vlaneseq
    %v374 = vshrl.u32 %v373, 7
    %v375 = vsub.s32 0, %v374
    %v376 = vrot.slane %v290, %v375
    %v378 = vmul.f32 %v366, %v376
    %v379 = vmul.f32 %v367, %v376
    %v380 = vmul.f32 %v368, %v376
    %v381 = vmul.f32 %v369, %v376
    %v382 = vmul.f32 %v370, %v376
    %v383 = vmul.f32 %v371, %v376
    %v385 = vlaneseq
    %v386 = vshrl.u32 %v385, 7
    %v387 = vsub.s32 0, %v386
    %v388 = vrot.slane %v291, %v387
    %v390 = vadd.f32 %v378, %v388
    %v391 = vadd.f32 %v379, %v388
    %v392 = vadd.f32 %v380, %v388
    %v393 = vadd.f32 %v381, %v388
    %v394 = vadd.f32 %v382, %v388
    %v395 = vadd.f32 %v383, %v388
    %v396 = vld [vmem:[%s23] sm:$0xff]
    %v397 = vld [vmem:[%s23 + $0x8] sm:$0xff]
    %v398 = vld [vmem:[%s23 + $0x10] sm:$0xff]
    %v399 = vld [vmem:[%s23 + $0x18] sm:$0xff]
    %v400 = vld [vmem:[%s25] sm:$0x1]
    %v402 = vlaneseq
    %v403 = vshrl.u32 %v402, 7
    %v404 = vsub.s32 0, %v403
    %v405 = vrot.slane %v400, %v404
    %v408 = vsel %vm292, %v390, 0
    %v411 = vsel %vm292, %v391, 0
    %v414 = vsel %vm292, %v392, 0
    %v417 = vsel %vm292, %v393, 0
    %v420 = vsel %vm292, %v394, 0
    %v423 = vsel %vm292, %v395, 0
    %425 = vmatprep.subr.mxu0 0.0
    %426 = vmatpush1.msra.mxu0 %v396
    %427 = vmatprep.subr.mxu0 0.0
    %428 = vmatpush1.msra.mxu0 %v397
    %429 = vmatprep.subr.mxu0 0.0
    %430 = vmatpush1.msra.mxu0 %v398
    %431 = vmatprep.subr.mxu0 0.0
    %432 = vmatpush1.msra.mxu0 %v399
    %433 = vmatprep.subr.mxu0 0.0
    %434 = vmatpush1.msra.mxu0 0.0
    %435 = vmatprep.subr.mxu0 0.0
    %436 = vmatpush1.msra.mxu0 0.0
    %437 = vmatprep.subr.mxu0 0.0
    %438 = vmatpush1.msra.mxu0 0.0
    %439 = vmatprep.subr.mxu0 0.0
    %440 = vmatpush1.msra.mxu0 0.0
    %441 = vmatprep.subr.mxu0 0.0
    %442 = vmatpush1.msra.mxu0 0.0
    %443 = vmatprep.subr.mxu0 0.0
    %444 = vmatpush1.msra.mxu0 0.0
    %445 = vmatprep.subr.mxu0 0.0
    %446 = vmatpush1.msra.mxu0 0.0
    %447 = vmatprep.subr.mxu0 0.0
    %448 = vmatpush1.msra.mxu0 0.0
    %449 = vmatprep.subr.mxu0 0.0
    %450 = vmatpush1.msra.mxu0 0.0
    %451 = vmatprep.subr.mxu0 0.0
    %452 = vmatpush1.msra.mxu0 0.0
    %453 = vmatprep.subr.mxu0 0.0
    %454 = vmatpush1.msra.mxu0 0.0
    %455 = vmatprep.subr.mxu0 0.0
    %456 = vmatpush1.msra.mxu0 0.0
    %457 = vmatprep.subr.mxu0 0.0
    %458 = vmatpush1.msra.mxu0 0.0
    %459 = vmatprep.subr.mxu0 0.0
    %460 = vmatpush1.msra.mxu0 0.0
    %461 = vmatprep.subr.mxu0 0.0
    %462 = vmatpush1.msra.mxu0 0.0
    %463 = vmatprep.subr.mxu0 0.0
    %464 = vmatpush1.msra.mxu0 0.0
    %465 = vmatprep.subr.mxu0 0.0
    %466 = vmatpush1.msra.mxu0 0.0
    %467 = vmatprep.subr.mxu0 0.0
    %468 = vmatpush1.msra.mxu0 0.0
    %469 = vmatprep.subr.mxu0 0.0
    %470 = vmatpush1.msra.mxu0 0.0
    %471 = vmatprep.subr.mxu0 0.0
    %472 = vmatpush1.msra.mxu0 0.0
    %473 = vmatprep.subr.mxu0 0.0
    %474 = vmatpush1.msra.mxu0 0.0
    %475 = vmatprep.subr.mxu0 0.0
    %476 = vmatpush1.msra.mxu0 0.0
    %477 = vmatprep.subr.mxu0 0.0
    %478 = vmatpush1.msra.mxu0 0.0
    %479 = vmatprep.subr.mxu0 0.0
    %480 = vmatpush1.msra.mxu0 0.0
    %481 = vmatprep.subr.mxu0 0.0
    %482 = vmatpush1.msra.mxu0 0.0
    %483 = vmatprep.subr.mxu0 0.0
    %484 = vmatpush1.msra.mxu0 0.0
    %485 = vmatprep.subr.mxu0 0.0
    %486 = vmatpush1.msra.mxu0 0.0
    %487 = vmatprep.subr.mxu0 0.0
    %488 = vmatpush1.msra.mxu0 0.0
    %489 = vmatprep.mubr.f32.mxu0 0.0
    %490 = vmatmul.mubr.f32.gmra.mrb[0].mxu0 %v408
    %v491 = vpop.f32.mrb[0].mxu0
    %v492 = vadd.f32 %v405, %v491
    %v493 = vpop.f32.mrb[0].mxu0
    %494 = vmatprep.mubr.f32.mxu0 0.0
    %495 = vmatmul.mubr.f32.gmra.mrb[0].mxu0 %v411
    %v496 = vpop.f32.mrb[0].mxu0
    %v497 = vadd.f32 %v405, %v496
    %v498 = vpop.f32.mrb[0].mxu0
    %499 = vmatprep.mubr.f32.mxu0 0.0
    %500 = vmatmul.mubr.f32.gmra.mrb[0].mxu0 %v414
    %v501 = vpop.f32.mrb[0].mxu0
    %v502 = vadd.f32 %v405, %v501
    %v503 = vpop.f32.mrb[0].mxu0
    %504 = vmatprep.mubr.f32.mxu0 0.0
    %505 = vmatmul.mubr.f32.gmra.mrb[0].mxu0 %v417
    %v506 = vpop.f32.mrb[0].mxu0
    %v507 = vadd.f32 %v405, %v506
    %v508 = vpop.f32.mrb[0].mxu0
    %509 = vmatprep.mubr.f32.mxu0 0.0
    %510 = vmatmul.mubr.f32.gmra.mrb[0].mxu0 %v420
    %v511 = vpop.f32.mrb[0].mxu0
    %v512 = vadd.f32 %v405, %v511
    %v513 = vpop.f32.mrb[0].mxu0
    %514 = vmatprep.mubr.f32.mxu0 0.0
    %515 = vmatmul.mubr.f32.gmra.mrb[0].mxu0 %v423
    %v516 = vpop.f32.mrb[0].mxu0
    %v517 = vadd.f32 %v405, %v516
    %v518 = vpop.f32.mrb[0].mxu0
    %519 = vdwg.mxu0
    %526 = vrot.lane.b32.xlu0 %v492, 96
    %v527 = vpop.permute.xlu0 %526
    %528 = vrot.lane.b32.xlu0 %v497, 96
    %v529 = vpop.permute.xlu0 %528
    %530 = vrot.lane.b32.xlu0 %v502, 96
    %v531 = vpop.permute.xlu0 %530
    %532 = vrot.lane.b32.xlu0 %v507, 96
    %v533 = vpop.permute.xlu0 %532
    %534 = vrot.lane.b32.xlu0 %v512, 96
    %v535 = vpop.permute.xlu0 %534
    %536 = vrot.lane.b32.xlu0 %v517, 96
    %v537 = vpop.permute.xlu0 %536
    %vm538 = vcmask 64512
    %v539 = vsel %vm538, %v492, 0
    %v541 = vsel %vm538, %v497, 0
    %v543 = vsel %vm538, %v502, 0
    %v545 = vsel %vm538, %v507, 0
    %v547 = vsel %vm538, %v512, 0
    %v549 = vsel %vm538, %v517, 0
    %v551 = vsel %vm538, %v527, 0
    %v553 = vsel %vm538, %v529, 0
    %v555 = vsel %vm538, %v531, 0
    %v557 = vsel %vm538, %v533, 0
    %v559 = vsel %vm538, %v535, 0
    %v561 = vsel %vm538, %v537, 0
    %563 = vmatprep.subr.mxu0 0.0
    %564 = vmatpush1.xpose.msra.mxu0 %v551
    %565 = vmatprep.subr.mxu0 0.0
    %566 = vmatpush1.xpose.msra.mxu0 %v553
    %567 = vmatprep.subr.mxu0 0.0
    %568 = vmatpush1.xpose.msra.mxu0 %v555
    %569 = vmatprep.subr.mxu0 0.0
    %570 = vmatpush1.xpose.msra.mxu0 %v557
    %571 = vmatprep.subr.mxu0 0.0
    %572 = vmatpush1.xpose.msra.mxu0 %v559
    %573 = vmatprep.subr.mxu0 0.0
    %574 = vmatpush1.xpose.msra.mxu0 %v561
    %575 = vmatprep.subr.mxu0 0.0
    %576 = vmatpush1.xpose.msra.mxu0 0.0
    %577 = vmatprep.subr.mxu0 0.0
    %578 = vmatpush1.xpose.msra.mxu0 0.0
    %579 = vmatprep.subr.mxu0 0.0
    %580 = vmatpush1.xpose.msra.mxu0 0.0
    %581 = vmatprep.subr.mxu0 0.0
    %582 = vmatpush1.xpose.msra.mxu0 0.0
    %583 = vmatprep.subr.mxu0 0.0
    %584 = vmatpush1.xpose.msra.mxu0 0.0
    %585 = vmatprep.subr.mxu0 0.0
    %586 = vmatpush1.xpose.msra.mxu0 0.0
    %587 = vmatprep.subr.mxu0 0.0
    %588 = vmatpush1.xpose.msra.mxu0 0.0
    %589 = vmatprep.subr.mxu0 0.0
    %590 = vmatpush1.xpose.msra.mxu0 0.0
    %591 = vmatprep.subr.mxu0 0.0
    %592 = vmatpush1.xpose.msra.mxu0 0.0
    %593 = vmatprep.subr.mxu0 0.0
    %594 = vmatpush1.xpose.msra.mxu0 0.0
    %595 = vmatprep.subr.mxu0 0.0
    %596 = vmatpush1.xpose.msra.mxu0 0.0
    %597 = vmatprep.subr.mxu0 0.0
    %598 = vmatpush1.xpose.msra.mxu0 0.0
    %599 = vmatprep.subr.mxu0 0.0
    %600 = vmatpush1.xpose.msra.mxu0 0.0
    %601 = vmatprep.subr.mxu0 0.0
    %602 = vmatpush1.xpose.msra.mxu0 0.0
    %603 = vmatprep.subr.mxu0 0.0
    %604 = vmatpush1.xpose.msra.mxu0 0.0
    %605 = vmatprep.subr.mxu0 0.0
    %606 = vmatpush1.xpose.msra.mxu0 0.0
    %607 = vmatprep.subr.mxu0 0.0
    %608 = vmatpush1.xpose.msra.mxu0 0.0
    %609 = vmatprep.subr.mxu0 0.0
    %610 = vmatpush1.xpose.msra.mxu0 0.0
    %611 = vmatprep.subr.mxu0 0.0
    %612 = vmatpush1.xpose.msra.mxu0 0.0
    %613 = vmatprep.subr.mxu0 0.0
    %614 = vmatpush1.xpose.msra.mxu0 0.0
    %615 = vmatprep.subr.mxu0 0.0
    %616 = vmatpush1.xpose.msra.mxu0 0.0
    %617 = vmatprep.subr.mxu0 0.0
    %618 = vmatpush1.xpose.msra.mxu0 0.0
    %619 = vmatprep.subr.mxu0 0.0
    %620 = vmatpush1.xpose.msra.mxu0 0.0
    %621 = vmatprep.subr.mxu0 0.0
    %622 = vmatpush1.xpose.msra.mxu0 0.0
    %623 = vmatprep.subr.mxu0 0.0
    %624 = vmatpush1.xpose.msra.mxu0 0.0
    %625 = vmatprep.subr.mxu0 0.0
    %626 = vmatpush1.xpose.msra.mxu0 0.0
    %627 = vmatprep.mubr.f32.mxu0 0.0
    %628 = vmatmul.mubr.f32.gmra.mrb[0].mxu0 %v539
    %v629 = vpop.f32.mrb[0].mxu0
    %v630 = vadd.f32 0.0, %v629
    %v631 = vpop.f32.mrb[0].mxu0
    %632 = vmatprep.mubr.f32.mxu0 0.0
    %633 = vmatmul.mubr.f32.gmra.mrb[0].mxu0 %v541
    %v634 = vpop.f32.mrb[0].mxu0
    %v635 = vadd.f32 0.0, %v634
    %v636 = vpop.f32.mrb[0].mxu0
    %637 = vmatprep.mubr.f32.mxu0 0.0
    %638 = vmatmul.mubr.f32.gmra.mrb[0].mxu0 %v543
    %v639 = vpop.f32.mrb[0].mxu0
    %v640 = vadd.f32 0.0, %v639
    %v641 = vpop.f32.mrb[0].mxu0
    %642 = vmatprep.mubr.f32.mxu0 0.0
    %643 = vmatmul.mubr.f32.gmra.mrb[0].mxu0 %v545
    %v644 = vpop.f32.mrb[0].mxu0
    %v645 = vadd.f32 0.0, %v644
    %v646 = vpop.f32.mrb[0].mxu0
    %647 = vmatprep.mubr.f32.mxu0 0.0
    %648 = vmatmul.mubr.f32.gmra.mrb[0].mxu0 %v547
    %v649 = vpop.f32.mrb[0].mxu0
    %v650 = vadd.f32 0.0, %v649
    %v651 = vpop.f32.mrb[0].mxu0
    %652 = vmatprep.mubr.f32.mxu0 0.0
    %653 = vmatmul.mubr.f32.gmra.mrb[0].mxu0 %v549
    %v654 = vpop.f32.mrb[0].mxu0
    %v655 = vadd.f32 0.0, %v654
    %v656 = vpop.f32.mrb[0].mxu0
    %657 = vdwg.mxu0
    %v658 = vmul.f32 %v630, 0.17677669
    %v659 = vmul.f32 %v635, 0.17677669
    %v660 = vmul.f32 %v640, 0.17677669
    %v661 = vmul.f32 %v645, 0.17677669
    %v662 = vmul.f32 %v650, 0.17677669
    %v663 = vmul.f32 %v655, 0.17677669
    %v664 = vadd.f32 %v658, %v284
    %v665 = vadd.f32 %v659, %v285
    %v666 = vadd.f32 %v660, %v286
    %v667 = vadd.f32 %v661, %v287
    %v668 = vadd.f32 %v662, %v288
    %v669 = vadd.f32 %v663, %v289
    %v670 = vsel %vm158, %v664, -inf
    %671 = vmax.xlane.f32.xlu0 %v670
    %v672 = vpop.xlane.xlu0 %671
    %v673 = vsel %vm158, %v665, -inf
    %674 = vmax.xlane.f32.xlu0 %v673
    %v675 = vpop.xlane.xlu0 %674
    %v676 = vsel %vm158, %v666, -inf
    %677 = vmax.xlane.f32.xlu0 %v676
    %v678 = vpop.xlane.xlu0 %677
    %v679 = vsel %vm158, %v667, -inf
    %680 = vmax.xlane.f32.xlu0 %v679
    %v681 = vpop.xlane.xlu0 %680
    %v682 = vsel %vm158, %v668, -inf
    %683 = vmax.xlane.f32.xlu0 %v682
    %v684 = vpop.xlane.xlu0 %683
    %v685 = vsel %vm158, %v669, -inf
    %686 = vmax.xlane.f32.xlu0 %v685
    %v687 = vpop.xlane.xlu0 %686
    %v688 = vsub.f32 %v664, %v672
    %v689 = vsub.f32 %v665, %v675
    %v690 = vsub.f32 %v666, %v678
    %v691 = vsub.f32 %v667, %v681
    %v692 = vsub.f32 %v668, %v684
    %v693 = vsub.f32 %v669, %v687
    %v694 = vmul.f32 %v688, 1.442695
    %v695 = vpow.pop %v694
    %v696 = vmul.f32 %v689, 1.442695
    %v697 = vpow.pop %v696
    %v698 = vmul.f32 %v690, 1.442695
    %v699 = vpow.pop %v698
    %v700 = vmul.f32 %v691, 1.442695
    %v701 = vpow.pop %v700
    %v702 = vmul.f32 %v692, 1.442695
    %v703 = vpow.pop %v702
    %v704 = vmul.f32 %v693, 1.442695
    %v705 = vpow.pop %v704
    %v706 = vsel %vm158, %v695, 0.0
    %707 = vadd.xlane.f32.xlu0 %v706
    %v708 = vpop.xlane.xlu0 %707
    %v709 = vsel %vm158, %v697, 0.0
    %710 = vadd.xlane.f32.xlu0 %v709
    %v711 = vpop.xlane.xlu0 %710
    %v712 = vsel %vm158, %v699, 0.0
    %713 = vadd.xlane.f32.xlu0 %v712
    %v714 = vpop.xlane.xlu0 %713
    %v715 = vsel %vm158, %v701, 0.0
    %716 = vadd.xlane.f32.xlu0 %v715
    %v717 = vpop.xlane.xlu0 %716
    %v718 = vsel %vm158, %v703, 0.0
    %719 = vadd.xlane.f32.xlu0 %v718
    %v720 = vpop.xlane.xlu0 %719
    %v721 = vsel %vm158, %v705, 0.0
    %722 = vadd.xlane.f32.xlu0 %v721
    %v723 = vpop.xlane.xlu0 %722
    %v724 = vrcp.pop %v708
    %v725 = vmul.f32 %v695, %v724
    %v726 = vrcp.pop %v711
    %v727 = vmul.f32 %v697, %v726
    %v728 = vrcp.pop %v714
    %v729 = vmul.f32 %v699, %v728
    %v730 = vrcp.pop %v717
    %v731 = vmul.f32 %v701, %v730
    %v732 = vrcp.pop %v720
    %v733 = vmul.f32 %v703, %v732
    %v734 = vrcp.pop %v723
    %v735 = vmul.f32 %v705, %v734
    %736 = vrot.lane.b32.xlu0 %v492, 64
    %v737 = vpop.permute.xlu0 %736
    %738 = vrot.lane.b32.xlu0 %v497, 64
    %v739 = vpop.permute.xlu0 %738
    %740 = vrot.lane.b32.xlu0 %v502, 64
    %v741 = vpop.permute.xlu0 %740
    %742 = vrot.lane.b32.xlu0 %v507, 64
    %v743 = vpop.permute.xlu0 %742
    %744 = vrot.lane.b32.xlu0 %v512, 64
    %v745 = vpop.permute.xlu0 %744
    %746 = vrot.lane.b32.xlu0 %v517, 64
    %v747 = vpop.permute.xlu0 %746
    %v755 = vsel %vm158, %v725, 0
    %v758 = vsel %vm158, %v727, 0
    %v761 = vsel %vm158, %v729, 0
    %v764 = vsel %vm158, %v731, 0
    %v767 = vsel %vm158, %v733, 0
    %v770 = vsel %vm158, %v735, 0
    %772 = vmatprep.subr.mxu0 0.0
    %773 = vmatpush1.msra.mxu0 %v737
    %774 = vmatprep.subr.mxu0 0.0
    %775 = vmatpush1.msra.mxu0 %v739
    %776 = vmatprep.subr.mxu0 0.0
    %777 = vmatpush1.msra.mxu0 %v741
    %778 = vmatprep.subr.mxu0 0.0
    %779 = vmatpush1.msra.mxu0 %v743
    %780 = vmatprep.subr.mxu0 0.0
    %781 = vmatpush1.msra.mxu0 %v745
    %782 = vmatprep.subr.mxu0 0.0
    %783 = vmatpush1.msra.mxu0 %v747
    %784 = vmatprep.subr.mxu0 0.0
    %785 = vmatpush1.msra.mxu0 0.0
    %786 = vmatprep.subr.mxu0 0.0
    %787 = vmatpush1.msra.mxu0 0.0
    %788 = vmatprep.subr.mxu0 0.0
    %789 = vmatpush1.msra.mxu0 0.0
    %790 = vmatprep.subr.mxu0 0.0
    %791 = vmatpush1.msra.mxu0 0.0
    %792 = vmatprep.subr.mxu0 0.0
    %793 = vmatpush1.msra.mxu0 0.0
    %794 = vmatprep.subr.mxu0 0.0
    %795 = vmatpush1.msra.mxu0 0.0
    %796 = vmatprep.subr.mxu0 0.0
    %797 = vmatpush1.msra.mxu0 0.0
    %798 = vmatprep.subr.mxu0 0.0
    %799 = vmatpush1.msra.mxu0 0.0
    %800 = vmatprep.subr.mxu0 0.0
    %801 = vmatpush1.msra.mxu0 0.0
    %802 = vmatprep.subr.mxu0 0.0
    %803 = vmatpush1.msra.mxu0 0.0
    %804 = vmatprep.subr.mxu0 0.0
    %805 = vmatpush1.msra.mxu0 0.0
    %806 = vmatprep.subr.mxu0 0.0
    %807 = vmatpush1.msra.mxu0 0.0
    %808 = vmatprep.subr.mxu0 0.0
    %809 = vmatpush1.msra.mxu0 0.0
    %810 = vmatprep.subr.mxu0 0.0
    %811 = vmatpush1.msra.mxu0 0.0
    %812 = vmatprep.subr.mxu0 0.0
    %813 = vmatpush1.msra.mxu0 0.0
    %814 = vmatprep.subr.mxu0 0.0
    %815 = vmatpush1.msra.mxu0 0.0
    %816 = vmatprep.subr.mxu0 0.0
    %817 = vmatpush1.msra.mxu0 0.0
    %818 = vmatprep.subr.mxu0 0.0
    %819 = vmatpush1.msra.mxu0 0.0
    %820 = vmatprep.subr.mxu0 0.0
    %821 = vmatpush1.msra.mxu0 0.0
    %822 = vmatprep.subr.mxu0 0.0
    %823 = vmatpush1.msra.mxu0 0.0
    %824 = vmatprep.subr.mxu0 0.0
    %825 = vmatpush1.msra.mxu0 0.0
    %826 = vmatprep.subr.mxu0 0.0
    %827 = vmatpush1.msra.mxu0 0.0
    %828 = vmatprep.subr.mxu0 0.0
    %829 = vmatpush1.msra.mxu0 0.0
    %830 = vmatprep.subr.mxu0 0.0
    %831 = vmatpush1.msra.mxu0 0.0
    %832 = vmatprep.subr.mxu0 0.0
    %833 = vmatpush1.msra.mxu0 0.0
    %834 = vmatprep.subr.mxu0 0.0
    %835 = vmatpush1.msra.mxu0 0.0
    %836 = vmatprep.mubr.f32.mxu0 0.0
    %837 = vmatmul.mubr.f32.gmra.mrb[0].mxu0 %v755
    %v838 = vpop.f32.mrb[0].mxu0
    %v839 = vadd.f32 0.0, %v838
    %v840 = vpop.f32.mrb[0].mxu0
    %841 = vmatprep.mubr.f32.mxu0 0.0
    %842 = vmatmul.mubr.f32.gmra.mrb[0].mxu0 %v758
    %v843 = vpop.f32.mrb[0].mxu0
    %v844 = vadd.f32 0.0, %v843
    %v845 = vpop.f32.mrb[0].mxu0
    %846 = vmatprep.mubr.f32.mxu0 0.0
    %847 = vmatmul.mubr.f32.gmra.mrb[0].mxu0 %v761
    %v848 = vpop.f32.mrb[0].mxu0
    %v849 = vadd.f32 0.0, %v848
    %v850 = vpop.f32.mrb[0].mxu0
    %851 = vmatprep.mubr.f32.mxu0 0.0
    %852 = vmatmul.mubr.f32.gmra.mrb[0].mxu0 %v764
    %v853 = vpop.f32.mrb[0].mxu0
    %v854 = vadd.f32 0.0, %v853
    %v855 = vpop.f32.mrb[0].mxu0
    %856 = vmatprep.mubr.f32.mxu0 0.0
    %857 = vmatmul.mubr.f32.gmra.mrb[0].mxu0 %v767
    %v858 = vpop.f32.mrb[0].mxu0
    %v859 = vadd.f32 0.0, %v858
    %v860 = vpop.f32.mrb[0].mxu0
    %861 = vmatprep.mubr.f32.mxu0 0.0
    %862 = vmatmul.mubr.f32.gmra.mrb[0].mxu0 %v770
    %v863 = vpop.f32.mrb[0].mxu0
    %v864 = vadd.f32 0.0, %v863
    %v865 = vpop.f32.mrb[0].mxu0
    %866 = vdwg.mxu0
    %867 = vst.msk [vmem:[#allocation2] sm:$0xff] %vm538, %v839
    %868 = vst.msk [vmem:[#allocation2 + $0x8] sm:$0xff] %vm538, %v844
    %869 = vst.msk [vmem:[#allocation2 + $0x10] sm:$0xff] %vm538, %v849
    %870 = vst.msk [vmem:[#allocation2 + $0x18] sm:$0xff] %vm538, %v854
    %871 = vst.msk [vmem:[#allocation2 + $0x20] sm:$0xff] %vm538, %v859
    %872 = vst.msk [vmem:[#allocation2 + $0x28] sm:$0xff] %vm538, %v864
    %873 = vrot.lane.b32.xlu0 %v492, 120
    %v874 = vpop.permute.xlu0 %873
    %875 = vrot.lane.b32.xlu0 %v497, 120
    %v876 = vpop.permute.xlu0 %875
    %877 = vrot.lane.b32.xlu0 %v502, 120
    %v878 = vpop.permute.xlu0 %877
    %879 = vrot.lane.b32.xlu0 %v507, 120
    %v880 = vpop.permute.xlu0 %879
    %881 = vrot.lane.b32.xlu0 %v512, 120
    %v882 = vpop.permute.xlu0 %881
    %883 = vrot.lane.b32.xlu0 %v517, 120
    %v884 = vpop.permute.xlu0 %883
    %885 = vrot.lane.b32.xlu0 %v492, 88
    %v886 = vpop.permute.xlu0 %885
    %887 = vrot.lane.b32.xlu0 %v497, 88
    %v888 = vpop.permute.xlu0 %887
    %889 = vrot.lane.b32.xlu0 %v502, 88
    %v890 = vpop.permute.xlu0 %889
    %891 = vrot.lane.b32.xlu0 %v507, 88
    %v892 = vpop.permute.xlu0 %891
    %893 = vrot.lane.b32.xlu0 %v512, 88
    %v894 = vpop.permute.xlu0 %893
    %895 = vrot.lane.b32.xlu0 %v517, 88
    %v896 = vpop.permute.xlu0 %895
    %v897 = vsel %vm538, %v874, 0
    %v899 = vsel %vm538, %v876, 0
    %v901 = vsel %vm538, %v878, 0
    %v903 = vsel %vm538, %v880, 0
    %v905 = vsel %vm538, %v882, 0
    %v907 = vsel %vm538, %v884, 0
    %v909 = vsel %vm538, %v886, 0
    %v911 = vsel %vm538, %v888, 0
    %v913 = vsel %vm538, %v890, 0
    %v915 = vsel %vm538, %v892, 0
    %v917 = vsel %vm538, %v894, 0
    %v919 = vsel %vm538, %v896, 0
    %921 = vmatprep.subr.mxu0 0.0
    %922 = vmatpush1.xpose.msra.mxu0 %v909
    %923 = vmatprep.subr.mxu0 0.0
    %924 = vmatpush1.xpose.msra.mxu0 %v911
    %925 = vmatprep.subr.mxu0 0.0
    %926 = vmatpush1.xpose.msra.mxu0 %v913
    %927 = vmatprep.subr.mxu0 0.0
    %928 = vmatpush1.xpose.msra.mxu0 %v915
    %929 = vmatprep.subr.mxu0 0.0
    %930 = vmatpush1.xpose.msra.mxu0 %v917
    %931 = vmatprep.subr.mxu0 0.0
    %932 = vmatpush1.xpose.msra.mxu0 %v919
    %933 = vmatprep.subr.mxu0 0.0
    %934 = vmatpush1.xpose.msra.mxu0 0.0
    %935 = vmatprep.subr.mxu0 0.0
    %936 = vmatpush1.xpose.msra.mxu0 0.0
    %937 = vmatprep.subr.mxu0 0.0
    %938 = vmatpush1.xpose.msra.mxu0 0.0
    %939 = vmatprep.subr.mxu0 0.0
    %940 = vmatpush1.xpose.msra.mxu0 0.0
    %941 = vmatprep.subr.mxu0 0.0
    %942 = vmatpush1.xpose.msra.mxu0 0.0
    %943 = vmatprep.subr.mxu0 0.0
    %944 = vmatpush1.xpose.msra.mxu0 0.0
    %945 = vmatprep.subr.mxu0 0.0
    %946 = vmatpush1.xpose.msra.mxu0 0.0
    %947 = vmatprep.subr.mxu0 0.0
    %948 = vmatpush1.xpose.msra.mxu0 0.0
    %949 = vmatprep.subr.mxu0 0.0
    %950 = vmatpush1.xpose.msra.mxu0 0.0
    %951 = vmatprep.subr.mxu0 0.0
    %952 = vmatpush1.xpose.msra.mxu0 0.0
    %953 = vmatprep.subr.mxu0 0.0
    %954 = vmatpush1.xpose.msra.mxu0 0.0
    %955 = vmatprep.subr.mxu0 0.0
    %956 = vmatpush1.xpose.msra.mxu0 0.0
    %957 = vmatprep.subr.mxu0 0.0
    %958 = vmatpush1.xpose.msra.mxu0 0.0
    %959 = vmatprep.subr.mxu0 0.0
    %960 = vmatpush1.xpose.msra.mxu0 0.0
    %961 = vmatprep.subr.mxu0 0.0
    %962 = vmatpush1.xpose.msra.mxu0 0.0
    %963 = vmatprep.subr.mxu0 0.0
    %964 = vmatpush1.xpose.msra.mxu0 0.0
    %965 = vmatprep.subr.mxu0 0.0
    %966 = vmatpush1.xpose.msra.mxu0 0.0
    %967 = vmatprep.subr.mxu0 0.0
    %968 = vmatpush1.xpose.msra.mxu0 0.0
    %969 = vmatprep.subr.mxu0 0.0
    %970 = vmatpush1.xpose.msra.mxu0 0.0
    %971 = vmatprep.subr.mxu0 0.0
    %972 = vmatpush1.xpose.msra.mxu0 0.0
    %973 = vmatprep.subr.mxu0 0.0
    %974 = vmatpush1.xpose.msra.mxu0 0.0
    %975 = vmatprep.subr.mxu0 0.0
    %976 = vmatpush1.xpose.msra.mxu0 0.0
    %977 = vmatprep.subr.mxu0 0.0
    %978 = vmatpush1.xpose.msra.mxu0 0.0
    %979 = vmatprep.subr.mxu0 0.0
    %980 = vmatpush1.xpose.msra.mxu0 0.0
    %981 = vmatprep.subr.mxu0 0.0
    %982 = vmatpush1.xpose.msra.mxu0 0.0
    %983 = vmatprep.subr.mxu0 0.0
    %984 = vmatpush1.xpose.msra.mxu0 0.0
    %985 = vmatprep.mubr.f32.mxu0 0.0
    %986 = vmatmul.mubr.f32.gmra.mrb[0].mxu0 %v897
    %v987 = vpop.f32.mrb[0].mxu0
    %v988 = vadd.f32 0.0, %v987
    %v989 = vpop.f32.mrb[0].mxu0
    %990 = vmatprep.mubr.f32.mxu0 0.0
    %991 = vmatmul.mubr.f32.gmra.mrb[0].mxu0 %v899
    %v992 = vpop.f32.mrb[0].mxu0
    %v993 = vadd.f32 0.0, %v992
    %v994 = vpop.f32.mrb[0].mxu0
    %995 = vmatprep.mubr.f32.mxu0 0.0
    %996 = vmatmul.mubr.f32.gmra.mrb[0].mxu0 %v901
    %v997 = vpop.f32.mrb[0].mxu0
    %v998 = vadd.f32 0.0, %v997
    %v999 = vpop.f32.mrb[0].mxu0
    %1000 = vmatprep.mubr.f32.mxu0 0.0
    %1001 = vmatmul.mubr.f32.gmra.mrb[0].mxu0 %v903
    %v1002 = vpop.f32.mrb[0].mxu0
    %v1003 = vadd.f32 0.0, %v1002
    %v1004 = vpop.f32.mrb[0].mxu0
    %1005 = vmatprep.mubr.f32.mxu0 0.0
    %1006 = vmatmul.mubr.f32.gmra.mrb[0].mxu0 %v905
    %v1007 = vpop.f32.mrb[0].mxu0
    %v1008 = vadd.f32 0.0, %v1007
    %v1009 = vpop.f32.mrb[0].mxu0
    %1010 = vmatprep.mubr.f32.mxu0 0.0
    %1011 = vmatmul.mubr.f32.gmra.mrb[0].mxu0 %v907
    %v1012 = vpop.f32.mrb[0].mxu0
    %v1013 = vadd.f32 0.0, %v1012
    %v1014 = vpop.f32.mrb[0].mxu0
    %1015 = vdwg.mxu0
    %v1016 = vmul.f32 %v988, 0.17677669
    %v1017 = vmul.f32 %v993, 0.17677669
    %v1018 = vmul.f32 %v998, 0.17677669
    %v1019 = vmul.f32 %v1003, 0.17677669
    %v1020 = vmul.f32 %v1008, 0.17677669
    %v1021 = vmul.f32 %v1013, 0.17677669
    %v1022 = vadd.f32 %v1016, %v284
    %v1023 = vadd.f32 %v1017, %v285
    %v1024 = vadd.f32 %v1018, %v286
    %v1025 = vadd.f32 %v1019, %v287
    %v1026 = vadd.f32 %v1020, %v288
    %v1027 = vadd.f32 %v1021, %v289
    %v1028 = vsel %vm158, %v1022, -inf
    %1029 = vmax.xlane.f32.xlu0 %v1028
    %v1030 = vpop.xlane.xlu0 %1029
    %v1031 = vsel %vm158, %v1023, -inf
    %1032 = vmax.xlane.f32.xlu0 %v1031
    %v1033 = vpop.xlane.xlu0 %1032
    %v1034 = vsel %vm158, %v1024, -inf
    %1035 = vmax.xlane.f32.xlu0 %v1034
    %v1036 = vpop.xlane.xlu0 %1035
    %v1037 = vsel %vm158, %v1025, -inf
    %1038 = vmax.xlane.f32.xlu0 %v1037
    %v1039 = vpop.xlane.xlu0 %1038
    %v1040 = vsel %vm158, %v1026, -inf
    %1041 = vmax.xlane.f32.xlu0 %v1040
    %v1042 = vpop.xlane.xlu0 %1041
    %v1043 = vsel %vm158, %v1027, -inf
    %1044 = vmax.xlane.f32.xlu0 %v1043
    %v1045 = vpop.xlane.xlu0 %1044
    %v1046 = vsub.f32 %v1022, %v1030
    %v1047 = vsub.f32 %v1023, %v1033
    %v1048 = vsub.f32 %v1024, %v1036
    %v1049 = vsub.f32 %v1025, %v1039
    %v1050 = vsub.f32 %v1026, %v1042
    %v1051 = vsub.f32 %v1027, %v1045
    %v1052 = vmul.f32 %v1046, 1.442695
    %v1053 = vpow.pop %v1052
    %v1054 = vmul.f32 %v1047, 1.442695
    %v1055 = vpow.pop %v1054
    %v1056 = vmul.f32 %v1048, 1.442695
    %v1057 = vpow.pop %v1056
    %v1058 = vmul.f32 %v1049, 1.442695
    %v1059 = vpow.pop %v1058
    %v1060 = vmul.f32 %v1050, 1.442695
    %v1061 = vpow.pop %v1060
    %v1062 = vmul.f32 %v1051, 1.442695
    %v1063 = vpow.pop %v1062
    %v1064 = vsel %vm158, %v1053, 0.0
    %1065 = vadd.xlane.f32.xlu0 %v1064
    %v1066 = vpop.xlane.xlu0 %1065
    %v1067 = vsel %vm158, %v1055, 0.0
    %1068 = vadd.xlane.f32.xlu0 %v1067
    %v1069 = vpop.xlane.xlu0 %1068
    %v1070 = vsel %vm158, %v1057, 0.0
    %1071 = vadd.xlane.f32.xlu0 %v1070
    %v1072 = vpop.xlane.xlu0 %1071
    %v1073 = vsel %vm158, %v1059, 0.0
    %1074 = vadd.xlane.f32.xlu0 %v1073
    %v1075 = vpop.xlane.xlu0 %1074
    %v1076 = vsel %vm158, %v1061, 0.0
    %1077 = vadd.xlane.f32.xlu0 %v1076
    %v1078 = vpop.xlane.xlu0 %1077
    %v1079 = vsel %vm158, %v1063, 0.0
    %1080 = vadd.xlane.f32.xlu0 %v1079
    %v1081 = vpop.xlane.xlu0 %1080
    %v1082 = vrcp.pop %v1066
    %v1083 = vmul.f32 %v1053, %v1082
    %v1084 = vrcp.pop %v1069
    %v1085 = vmul.f32 %v1055, %v1084
    %v1086 = vrcp.pop %v1072
    %v1087 = vmul.f32 %v1057, %v1086
    %v1088 = vrcp.pop %v1075
    %v1089 = vmul.f32 %v1059, %v1088
    %v1090 = vrcp.pop %v1078
    %v1091 = vmul.f32 %v1061, %v1090
    %v1092 = vrcp.pop %v1081
    %v1093 = vmul.f32 %v1063, %v1092
    %1094 = vrot.lane.b32.xlu0 %v492, 56
    %v1095 = vpop.permute.xlu0 %1094
    %1096 = vrot.lane.b32.xlu0 %v497, 56
    %v1097 = vpop.permute.xlu0 %1096
    %1098 = vrot.lane.b32.xlu0 %v502, 56
    %v1099 = vpop.permute.xlu0 %1098
    %1100 = vrot.lane.b32.xlu0 %v507, 56
    %v1101 = vpop.permute.xlu0 %1100
    %1102 = vrot.lane.b32.xlu0 %v512, 56
    %v1103 = vpop.permute.xlu0 %1102
    %1104 = vrot.lane.b32.xlu0 %v517, 56
    %v1105 = vpop.permute.xlu0 %1104
    %v1113 = vsel %vm158, %v1083, 0
    %v1116 = vsel %vm158, %v1085, 0
    %v1119 = vsel %vm158, %v1087, 0
    %v1122 = vsel %vm158, %v1089, 0
    %v1125 = vsel %vm158, %v1091, 0
    %v1128 = vsel %vm158, %v1093, 0
    %1130 = vmatprep.subr.mxu0 0.0
    %1131 = vmatpush1.msra.mxu0 %v1095
    %1132 = vmatprep.subr.mxu0 0.0
    %1133 = vmatpush1.msra.mxu0 %v1097
    %1134 = vmatprep.subr.mxu0 0.0
    %1135 = vmatpush1.msra.mxu0 %v1099
    %1136 = vmatprep.subr.mxu0 0.0
    %1137 = vmatpush1.msra.mxu0 %v1101
    %1138 = vmatprep.subr.mxu0 0.0
    %1139 = vmatpush1.msra.mxu0 %v1103
    %1140 = vmatprep.subr.mxu0 0.0
    %1141 = vmatpush1.msra.mxu0 %v1105
    %1142 = vmatprep.subr.mxu0 0.0
    %1143 = vmatpush1.msra.mxu0 0.0
    %1144 = vmatprep.subr.mxu0 0.0
    %1145 = vmatpush1.msra.mxu0 0.0
    %1146 = vmatprep.subr.mxu0 0.0
    %1147 = vmatpush1.msra.mxu0 0.0
    %1148 = vmatprep.subr.mxu0 0.0
    %1149 = vmatpush1.msra.mxu0 0.0
    %1150 = vmatprep.subr.mxu0 0.0
    %1151 = vmatpush1.msra.mxu0 0.0
    %1152 = vmatprep.subr.mxu0 0.0
    %1153 = vmatpush1.msra.mxu0 0.0
    %1154 = vmatprep.subr.mxu0 0.0
    %1155 = vmatpush1.msra.mxu0 0.0
    %1156 = vmatprep.subr.mxu0 0.0
    %1157 = vmatpush1.msra.mxu0 0.0
    %1158 = vmatprep.subr.mxu0 0.0
    %1159 = vmatpush1.msra.mxu0 0.0
    %1160 = vmatprep.subr.mxu0 0.0
    %1161 = vmatpush1.msra.mxu0 0.0
    %1162 = vmatprep.subr.mxu0 0.0
    %1163 = vmatpush1.msra.mxu0 0.0
    %1164 = vmatprep.subr.mxu0 0.0
    %1165 = vmatpush1.msra.mxu0 0.0
    %1166 = vmatprep.subr.mxu0 0.0
    %1167 = vmatpush1.msra.mxu0 0.0
    %1168 = vmatprep.subr.mxu0 0.0
    %1169 = vmatpush1.msra.mxu0 0.0
    %1170 = vmatprep.subr.mxu0 0.0
    %1171 = vmatpush1.msra.mxu0 0.0
    %1172 = vmatprep.subr.mxu0 0.0
    %1173 = vmatpush1.msra.mxu0 0.0
    %1174 = vmatprep.subr.mxu0 0.0
    %1175 = vmatpush1.msra.mxu0 0.0
    %1176 = vmatprep.subr.mxu0 0.0
    %1177 = vmatpush1.msra.mxu0 0.0
    %1178 = vmatprep.subr.mxu0 0.0
    %1179 = vmatpush1.msra.mxu0 0.0
    %1180 = vmatprep.subr.mxu0 0.0
    %1181 = vmatpush1.msra.mxu0 0.0
    %1182 = vmatprep.subr.mxu0 0.0
    %1183 = vmatpush1.msra.mxu0 0.0
    %1184 = vmatprep.subr.mxu0 0.0
    %1185 = vmatpush1.msra.mxu0 0.0
    %1186 = vmatprep.subr.mxu0 0.0
    %1187 = vmatpush1.msra.mxu0 0.0
    %1188 = vmatprep.subr.mxu0 0.0
    %1189 = vmatpush1.msra.mxu0 0.0
    %1190 = vmatprep.subr.mxu0 0.0
    %1191 = vmatpush1.msra.mxu0 0.0
    %1192 = vmatprep.subr.mxu0 0.0
    %1193 = vmatpush1.msra.mxu0 0.0
    %1194 = vmatprep.mubr.f32.mxu0 0.0
    %1195 = vmatmul.mubr.f32.gmra.mrb[0].mxu0 %v1113
    %v1196 = vpop.f32.mrb[0].mxu0
    %v1197 = vadd.f32 0.0, %v1196
    %v1198 = vpop.f32.mrb[0].mxu0
    %1199 = vmatprep.mubr.f32.mxu0 0.0
    %1200 = vmatmul.mubr.f32.gmra.mrb[0].mxu0 %v1116
    %v1201 = vpop.f32.mrb[0].mxu0
    %v1202 = vadd.f32 0.0, %v1201
    %v1203 = vpop.f32.mrb[0].mxu0
    %1204 = vmatprep.mubr.f32.mxu0 0.0
    %1205 = vmatmul.mubr.f32.gmra.mrb[0].mxu0 %v1119
    %v1206 = vpop.f32.mrb[0].mxu0
    %v1207 = vadd.f32 0.0, %v1206
    %v1208 = vpop.f32.mrb[0].mxu0
    %1209 = vmatprep.mubr.f32.mxu0 0.0
    %1210 = vmatmul.mubr.f32.gmra.mrb[0].mxu0 %v1122
    %v1211 = vpop.f32.mrb[0].mxu0
    %v1212 = vadd.f32 0.0, %v1211
    %v1213 = vpop.f32.mrb[0].mxu0
    %1214 = vmatprep.mubr.f32.mxu0 0.0
    %1215 = vmatmul.mubr.f32.gmra.mrb[0].mxu0 %v1125
    %v1216 = vpop.f32.mrb[0].mxu0
    %v1217 = vadd.f32 0.0, %v1216
    %v1218 = vpop.f32.mrb[0].mxu0
    %1219 = vmatprep.mubr.f32.mxu0 0.0
    %1220 = vmatmul.mubr.f32.gmra.mrb[0].mxu0 %v1128
    %v1221 = vpop.f32.mrb[0].mxu0
    %v1222 = vadd.f32 0.0, %v1221
    %v1223 = vpop.f32.mrb[0].mxu0
    %1224 = vdwg.mxu0
    %1231 = vrot.lane.b32.xlu0 %v1197, 8
    %v1232 = vpop.permute.xlu0 %1231
    %1233 = vrot.lane.b32.xlu0 %v1202, 8
    %v1234 = vpop.permute.xlu0 %1233
    %1235 = vrot.lane.b32.xlu0 %v1207, 8
    %v1236 = vpop.permute.xlu0 %1235
    %1237 = vrot.lane.b32.xlu0 %v1212, 8
    %v1238 = vpop.permute.xlu0 %1237
    %1239 = vrot.lane.b32.xlu0 %v1217, 8
    %v1240 = vpop.permute.xlu0 %1239
    %1241 = vrot.lane.b32.xlu0 %v1222, 8
    %v1242 = vpop.permute.xlu0 %1241
    %vm1249 = vcmask 130112
    %1250 = vst.msk [vmem:[#allocation2] sm:$0xff] %vm1249, %v1232
    %1251 = vst.msk [vmem:[#allocation2 + $0x8] sm:$0xff] %vm1249, %v1234
    %1252 = vst.msk [vmem:[#allocation2 + $0x10] sm:$0xff] %vm1249, %v1236
    %1253 = vst.msk [vmem:[#allocation2 + $0x18] sm:$0xff] %vm1249, %v1238
    %1254 = vst.msk [vmem:[#allocation2 + $0x20] sm:$0xff] %vm1249, %v1240
    %1255 = vst.msk [vmem:[#allocation2 + $0x28] sm:$0xff] %vm1249, %v1242
    %1256 = vrot.lane.b32.xlu0 %v492, 112
    %v1257 = vpop.permute.xlu0 %1256
    %1258 = vrot.lane.b32.xlu0 %v497, 112
    %v1259 = vpop.permute.xlu0 %1258
    %1260 = vrot.lane.b32.xlu0 %v502, 112
    %v1261 = vpop.permute.xlu0 %1260
    %1262 = vrot.lane.b32.xlu0 %v507, 112
    %v1263 = vpop.permute.xlu0 %1262
    %1264 = vrot.lane.b32.xlu0 %v512, 112
    %v1265 = vpop.permute.xlu0 %1264
    %1266 = vrot.lane.b32.xlu0 %v517, 112
    %v1267 = vpop.permute.xlu0 %1266
    %1268 = vrot.lane.b32.xlu0 %v492, 80
    %v1269 = vpop.permute.xlu0 %1268
    %1270 = vrot.lane.b32.xlu0 %v497, 80
    %v1271 = vpop.permute.xlu0 %1270
    %1272 = vrot.lane.b32.xlu0 %v502, 80
    %v1273 = vpop.permute.xlu0 %1272
    %1274 = vrot.lane.b32.xlu0 %v507, 80
    %v1275 = vpop.permute.xlu0 %1274
    %1276 = vrot.lane.b32.xlu0 %v512, 80
    %v1277 = vpop.permute.xlu0 %1276
    %1278 = vrot.lane.b32.xlu0 %v517, 80
    %v1279 = vpop.permute.xlu0 %1278
    %v1280 = vsel %vm538, %v1257, 0
    %v1282 = vsel %vm538, %v1259, 0
    %v1284 = vsel %vm538, %v1261, 0
    %v1286 = vsel %vm538, %v1263, 0
    %v1288 = vsel %vm538, %v1265, 0
    %v1290 = vsel %vm538, %v1267, 0
    %v1292 = vsel %vm538, %v1269, 0
    %v1294 = vsel %vm538, %v1271, 0
    %v1296 = vsel %vm538, %v1273, 0
    %v1298 = vsel %vm538, %v1275, 0
    %v1300 = vsel %vm538, %v1277, 0
    %v1302 = vsel %vm538, %v1279, 0
    %1304 = vmatprep.subr.mxu0 0.0
    %1305 = vmatpush1.xpose.msra.mxu0 %v1292
    %1306 = vmatprep.subr.mxu0 0.0
    %1307 = vmatpush1.xpose.msra.mxu0 %v1294
    %1308 = vmatprep.subr.mxu0 0.0
    %1309 = vmatpush1.xpose.msra.mxu0 %v1296
    %1310 = vmatprep.subr.mxu0 0.0
    %1311 = vmatpush1.xpose.msra.mxu0 %v1298
    %1312 = vmatprep.subr.mxu0 0.0
    %1313 = vmatpush1.xpose.msra.mxu0 %v1300
    %1314 = vmatprep.subr.mxu0 0.0
    %1315 = vmatpush1.xpose.msra.mxu0 %v1302
    %1316 = vmatprep.subr.mxu0 0.0
    %1317 = vmatpush1.xpose.msra.mxu0 0.0
    %1318 = vmatprep.subr.mxu0 0.0
    %1319 = vmatpush1.xpose.msra.mxu0 0.0
    %1320 = vmatprep.subr.mxu0 0.0
    %1321 = vmatpush1.xpose.msra.mxu0 0.0
    %1322 = vmatprep.subr.mxu0 0.0
    %1323 = vmatpush1.xpose.msra.mxu0 0.0
    %1324 = vmatprep.subr.mxu0 0.0
    %1325 = vmatpush1.xpose.msra.mxu0 0.0
    %1326 = vmatprep.subr.mxu0 0.0
    %1327 = vmatpush1.xpose.msra.mxu0 0.0
    %1328 = vmatprep.subr.mxu0 0.0
    %1329 = vmatpush1.xpose.msra.mxu0 0.0
    %1330 = vmatprep.subr.mxu0 0.0
    %1331 = vmatpush1.xpose.msra.mxu0 0.0
    %1332 = vmatprep.subr.mxu0 0.0
    %1333 = vmatpush1.xpose.msra.mxu0 0.0
    %1334 = vmatprep.subr.mxu0 0.0
    %1335 = vmatpush1.xpose.msra.mxu0 0.0
    %1336 = vmatprep.subr.mxu0 0.0
    %1337 = vmatpush1.xpose.msra.mxu0 0.0
    %1338 = vmatprep.subr.mxu0 0.0
    %1339 = vmatpush1.xpose.msra.mxu0 0.0
    %1340 = vmatprep.subr.mxu0 0.0
    %1341 = vmatpush1.xpose.msra.mxu0 0.0
    %1342 = vmatprep.subr.mxu0 0.0
    %1343 = vmatpush1.xpose.msra.mxu0 0.0
    %1344 = vmatprep.subr.mxu0 0.0
    %1345 = vmatpush1.xpose.msra.mxu0 0.0
    %1346 = vmatprep.subr.mxu0 0.0
    %1347 = vmatpush1.xpose.msra.mxu0 0.0
    %1348 = vmatprep.subr.mxu0 0.0
    %1349 = vmatpush1.xpose.msra.mxu0 0.0
    %1350 = vmatprep.subr.mxu0 0.0
    %1351 = vmatpush1.xpose.msra.mxu0 0.0
    %1352 = vmatprep.subr.mxu0 0.0
    %1353 = vmatpush1.xpose.msra.mxu0 0.0
    %1354 = vmatprep.subr.mxu0 0.0
    %1355 = vmatpush1.xpose.msra.mxu0 0.0
    %1356 = vmatprep.subr.mxu0 0.0
    %1357 = vmatpush1.xpose.msra.mxu0 0.0
    %1358 = vmatprep.subr.mxu0 0.0
    %1359 = vmatpush1.xpose.msra.mxu0 0.0
    %1360 = vmatprep.subr.mxu0 0.0
    %1361 = vmatpush1.xpose.msra.mxu0 0.0
    %1362 = vmatprep.subr.mxu0 0.0
    %1363 = vmatpush1.xpose.msra.mxu0 0.0
    %1364 = vmatprep.subr.mxu0 0.0
    %1365 = vmatpush1.xpose.msra.mxu0 0.0
    %1366 = vmatprep.subr.mxu0 0.0
    %1367 = vmatpush1.xpose.msra.mxu0 0.0
    %1368 = vmatprep.mubr.f32.mxu0 0.0
    %1369 = vmatmul.mubr.f32.gmra.mrb[0].mxu0 %v1280
    %v1370 = vpop.f32.mrb[0].mxu0
    %v1371 = vadd.f32 0.0, %v1370
    %v1372 = vpop.f32.mrb[0].mxu0
    %1373 = vmatprep.mubr.f32.mxu0 0.0
    %1374 = vmatmul.mubr.f32.gmra.mrb[0].mxu0 %v1282
    %v1375 = vpop.f32.mrb[0].mxu0
    %v1376 = vadd.f32 0.0, %v1375
    %v1377 = vpop.f32.mrb[0].mxu0
    %1378 = vmatprep.mubr.f32.mxu0 0.0
    %1379 = vmatmul.mubr.f32.gmra.mrb[0].mxu0 %v1284
    %v1380 = vpop.f32.mrb[0].mxu0
    %v1381 = vadd.f32 0.0, %v1380
    %v1382 = vpop.f32.mrb[0].mxu0
    %1383 = vmatprep.mubr.f32.mxu0 0.0
    %1384 = vmatmul.mubr.f32.gmra.mrb[0].mxu0 %v1286
    %v1385 = vpop.f32.mrb[0].mxu0
    %v1386 = vadd.f32 0.0, %v1385
    %v1387 = vpop.f32.mrb[0].mxu0
    %1388 = vmatprep.mubr.f32.mxu0 0.0
    %1389 = vmatmul.mubr.f32.gmra.mrb[0].mxu0 %v1288
    %v1390 = vpop.f32.mrb[0].mxu0
    %v1391 = vadd.f32 0.0, %v1390
    %v1392 = vpop.f32.mrb[0].mxu0
    %1393 = vmatprep.mubr.f32.mxu0 0.0
    %1394 = vmatmul.mubr.f32.gmra.mrb[0].mxu0 %v1290
    %v1395 = vpop.f32.mrb[0].mxu0
    %v1396 = vadd.f32 0.0, %v1395
    %v1397 = vpop.f32.mrb[0].mxu0
    %1398 = vdwg.mxu0
    %v1399 = vmul.f32 %v1371, 0.17677669
    %v1400 = vmul.f32 %v1376, 0.17677669
    %v1401 = vmul.f32 %v1381, 0.17677669
    %v1402 = vmul.f32 %v1386, 0.17677669
    %v1403 = vmul.f32 %v1391, 0.17677669
    %v1404 = vmul.f32 %v1396, 0.17677669
    %v1405 = vadd.f32 %v1399, %v284
    %v1406 = vadd.f32 %v1400, %v285
    %v1407 = vadd.f32 %v1401, %v286
    %v1408 = vadd.f32 %v1402, %v287
    %v1409 = vadd.f32 %v1403, %v288
    %v1410 = vadd.f32 %v1404, %v289
    %v1411 = vsel %vm158, %v1405, -inf
    %1412 = vmax.xlane.f32.xlu0 %v1411
    %v1413 = vpop.xlane.xlu0 %1412
    %v1414 = vsel %vm158, %v1406, -inf
    %1415 = vmax.xlane.f32.xlu0 %v1414
    %v1416 = vpop.xlane.xlu0 %1415
    %v1417 = vsel %vm158, %v1407, -inf
    %1418 = vmax.xlane.f32.xlu0 %v1417
    %v1419 = vpop.xlane.xlu0 %1418
    %v1420 = vsel %vm158, %v1408, -inf
    %1421 = vmax.xlane.f32.xlu0 %v1420
    %v1422 = vpop.xlane.xlu0 %1421
    %v1423 = vsel %vm158, %v1409, -inf
    %1424 = vmax.xlane.f32.xlu0 %v1423
    %v1425 = vpop.xlane.xlu0 %1424
    %v1426 = vsel %vm158, %v1410, -inf
    %1427 = vmax.xlane.f32.xlu0 %v1426
    %v1428 = vpop.xlane.xlu0 %1427
    %v1429 = vsub.f32 %v1405, %v1413
    %v1430 = vsub.f32 %v1406, %v1416
    %v1431 = vsub.f32 %v1407, %v1419
    %v1432 = vsub.f32 %v1408, %v1422
    %v1433 = vsub.f32 %v1409, %v1425
    %v1434 = vsub.f32 %v1410, %v1428
    %v1435 = vmul.f32 %v1429, 1.442695
    %v1436 = vpow.pop %v1435
    %v1437 = vmul.f32 %v1430, 1.442695
    %v1438 = vpow.pop %v1437
    %v1439 = vmul.f32 %v1431, 1.442695
    %v1440 = vpow.pop %v1439
    %v1441 = vmul.f32 %v1432, 1.442695
    %v1442 = vpow.pop %v1441
    %v1443 = vmul.f32 %v1433, 1.442695
    %v1444 = vpow.pop %v1443
    %v1445 = vmul.f32 %v1434, 1.442695
    %v1446 = vpow.pop %v1445
    %v1447 = vsel %vm158, %v1436, 0.0
    %1448 = vadd.xlane.f32.xlu0 %v1447
    %v1449 = vpop.xlane.xlu0 %1448
    %v1450 = vsel %vm158, %v1438, 0.0
    %1451 = vadd.xlane.f32.xlu0 %v1450
    %v1452 = vpop.xlane.xlu0 %1451
    %v1453 = vsel %vm158, %v1440, 0.0
    %1454 = vadd.xlane.f32.xlu0 %v1453
    %v1455 = vpop.xlane.xlu0 %1454
    %v1456 = vsel %vm158, %v1442, 0.0
    %1457 = vadd.xlane.f32.xlu0 %v1456
    %v1458 = vpop.xlane.xlu0 %1457
    %v1459 = vsel %vm158, %v1444, 0.0
    %1460 = vadd.xlane.f32.xlu0 %v1459
    %v1461 = vpop.xlane.xlu0 %1460
    %v1462 = vsel %vm158, %v1446, 0.0
    %1463 = vadd.xlane.f32.xlu0 %v1462
    %v1464 = vpop.xlane.xlu0 %1463
    %v1465 = vrcp.pop %v1449
    %v1466 = vmul.f32 %v1436, %v1465
    %v1467 = vrcp.pop %v1452
    %v1468 = vmul.f32 %v1438, %v1467
    %v1469 = vrcp.pop %v1455
    %v1470 = vmul.f32 %v1440, %v1469
    %v1471 = vrcp.pop %v1458
    %v1472 = vmul.f32 %v1442, %v1471
    %v1473 = vrcp.pop %v1461
    %v1474 = vmul.f32 %v1444, %v1473
    %v1475 = vrcp.pop %v1464
    %v1476 = vmul.f32 %v1446, %v1475
    %1477 = vrot.lane.b32.xlu0 %v492, 48
    %v1478 = vpop.permute.xlu0 %1477
    %1479 = vrot.lane.b32.xlu0 %v497, 48
    %v1480 = vpop.permute.xlu0 %1479
    %1481 = vrot.lane.b32.xlu0 %v502, 48
    %v1482 = vpop.permute.xlu0 %1481
    %1483 = vrot.lane.b32.xlu0 %v507, 48
    %v1484 = vpop.permute.xlu0 %1483
    %1485 = vrot.lane.b32.xlu0 %v512, 48
    %v1486 = vpop.permute.xlu0 %1485
    %1487 = vrot.lane.b32.xlu0 %v517, 48
    %v1488 = vpop.permute.xlu0 %1487
    %v1496 = vsel %vm158, %v1466, 0
    %v1499 = vsel %vm158, %v1468, 0
    %v1502 = vsel %vm158, %v1470, 0
    %v1505 = vsel %vm158, %v1472, 0
    %v1508 = vsel %vm158, %v1474, 0
    %v1511 = vsel %vm158, %v1476, 0
    %1513 = vmatprep.subr.mxu0 0.0
    %1514 = vmatpush1.msra.mxu0 %v1478
    %1515 = vmatprep.subr.mxu0 0.0
    %1516 = vmatpush1.msra.mxu0 %v1480
    %1517 = vmatprep.subr.mxu0 0.0
    %1518 = vmatpush1.msra.mxu0 %v1482
    %1519 = vmatprep.subr.mxu0 0.0
    %1520 = vmatpush1.msra.mxu0 %v1484
    %1521 = vmatprep.subr.mxu0 0.0
    %1522 = vmatpush1.msra.mxu0 %v1486
    %1523 = vmatprep.subr.mxu0 0.0
    %1524 = vmatpush1.msra.mxu0 %v1488
    %1525 = vmatprep.subr.mxu0 0.0
    %1526 = vmatpush1.msra.mxu0 0.0
    %1527 = vmatprep.subr.mxu0 0.0
    %1528 = vmatpush1.msra.mxu0 0.0
    %1529 = vmatprep.subr.mxu0 0.0
    %1530 = vmatpush1.msra.mxu0 0.0
    %1531 = vmatprep.subr.mxu0 0.0
    %1532 = vmatpush1.msra.mxu0 0.0
    %1533 = vmatprep.subr.mxu0 0.0
    %1534 = vmatpush1.msra.mxu0 0.0
    %1535 = vmatprep.subr.mxu0 0.0
    %1536 = vmatpush1.msra.mxu0 0.0
    %1537 = vmatprep.subr.mxu0 0.0
    %1538 = vmatpush1.msra.mxu0 0.0
    %1539 = vmatprep.subr.mxu0 0.0
    %1540 = vmatpush1.msra.mxu0 0.0
    %1541 = vmatprep.subr.mxu0 0.0
    %1542 = vmatpush1.msra.mxu0 0.0
    %1543 = vmatprep.subr.mxu0 0.0
    %1544 = vmatpush1.msra.mxu0 0.0
    %1545 = vmatprep.subr.mxu0 0.0
    %1546 = vmatpush1.msra.mxu0 0.0
    %1547 = vmatprep.subr.mxu0 0.0
    %1548 = vmatpush1.msra.mxu0 0.0
    %1549 = vmatprep.subr.mxu0 0.0
    %1550 = vmatpush1.msra.mxu0 0.0
    %1551 = vmatprep.subr.mxu0 0.0
    %1552 = vmatpush1.msra.mxu0 0.0
    %1553 = vmatprep.subr.mxu0 0.0
    %1554 = vmatpush1.msra.mxu0 0.0
    %1555 = vmatprep.subr.mxu0 0.0
    %1556 = vmatpush1.msra.mxu0 0.0
    %1557 = vmatprep.subr.mxu0 0.0
    %1558 = vmatpush1.msra.mxu0 0.0
    %1559 = vmatprep.subr.mxu0 0.0
    %1560 = vmatpush1.msra.mxu0 0.0
    %1561 = vmatprep.subr.mxu0 0.0
    %1562 = vmatpush1.msra.mxu0 0.0
    %1563 = vmatprep.subr.mxu0 0.0
    %1564 = vmatpush1.msra.mxu0 0.0
    %1565 = vmatprep.subr.mxu0 0.0
    %1566 = vmatpush1.msra.mxu0 0.0
    %1567 = vmatprep.subr.mxu0 0.0
    %1568 = vmatpush1.msra.mxu0 0.0
    %1569 = vmatprep.subr.mxu0 0.0
    %1570 = vmatpush1.msra.mxu0 0.0
    %1571 = vmatprep.subr.mxu0 0.0
    %1572 = vmatpush1.msra.mxu0 0.0
    %1573 = vmatprep.subr.mxu0 0.0
    %1574 = vmatpush1.msra.mxu0 0.0
    %1575 = vmatprep.subr.mxu0 0.0
    %1576 = vmatpush1.msra.mxu0 0.0
    %1577 = vmatprep.mubr.f32.mxu0 0.0
    %1578 = vmatmul.mubr.f32.gmra.mrb[0].mxu0 %v1496
    %v1579 = vpop.f32.mrb[0].mxu0
    %v1580 = vadd.f32 0.0, %v1579
    %v1581 = vpop.f32.mrb[0].mxu0
    %1582 = vmatprep.mubr.f32.mxu0 0.0
    %1583 = vmatmul.mubr.f32.gmra.mrb[0].mxu0 %v1499
    %v1584 = vpop.f32.mrb[0].mxu0
    %v1585 = vadd.f32 0.0, %v1584
    %v1586 = vpop.f32.mrb[0].mxu0
    %1587 = vmatprep.mubr.f32.mxu0 0.0
    %1588 = vmatmul.mubr.f32.gmra.mrb[0].mxu0 %v1502
    %v1589 = vpop.f32.mrb[0].mxu0
    %v1590 = vadd.f32 0.0, %v1589
    %v1591 = vpop.f32.mrb[0].mxu0
    %1592 = vmatprep.mubr.f32.mxu0 0.0
    %1593 = vmatmul.mubr.f32.gmra.mrb[0].mxu0 %v1505
    %v1594 = vpop.f32.mrb[0].mxu0
    %v1595 = vadd.f32 0.0, %v1594
    %v1596 = vpop.f32.mrb[0].mxu0
    %1597 = vmatprep.mubr.f32.mxu0 0.0
    %1598 = vmatmul.mubr.f32.gmra.mrb[0].mxu0 %v1508
    %v1599 = vpop.f32.mrb[0].mxu0
    %v1600 = vadd.f32 0.0, %v1599
    %v1601 = vpop.f32.mrb[0].mxu0
    %1602 = vmatprep.mubr.f32.mxu0 0.0
    %1603 = vmatmul.mubr.f32.gmra.mrb[0].mxu0 %v1511
    %v1604 = vpop.f32.mrb[0].mxu0
    %v1605 = vadd.f32 0.0, %v1604
    %v1606 = vpop.f32.mrb[0].mxu0
    %1607 = vdwg.mxu0
    %1614 = vrot.lane.b32.xlu0 %v1580, 16
    %v1615 = vpop.permute.xlu0 %1614
    %1616 = vrot.lane.b32.xlu0 %v1585, 16
    %v1617 = vpop.permute.xlu0 %1616
    %1618 = vrot.lane.b32.xlu0 %v1590, 16
    %v1619 = vpop.permute.xlu0 %1618
    %1620 = vrot.lane.b32.xlu0 %v1595, 16
    %v1621 = vpop.permute.xlu0 %1620
    %1622 = vrot.lane.b32.xlu0 %v1600, 16
    %v1623 = vpop.permute.xlu0 %1622
    %1624 = vrot.lane.b32.xlu0 %v1605, 16
    %v1625 = vpop.permute.xlu0 %1624
    %vm1632 = vcmask 195712
    %1633 = vst.msk [vmem:[#allocation2] sm:$0xff] %vm1632, %v1615
    %1634 = vst.msk [vmem:[#allocation2 + $0x8] sm:$0xff] %vm1632, %v1617
    %1635 = vst.msk [vmem:[#allocation2 + $0x10] sm:$0xff] %vm1632, %v1619
    %1636 = vst.msk [vmem:[#allocation2 + $0x18] sm:$0xff] %vm1632, %v1621
    %1637 = vst.msk [vmem:[#allocation2 + $0x20] sm:$0xff] %vm1632, %v1623
    %1638 = vst.msk [vmem:[#allocation2 + $0x28] sm:$0xff] %vm1632, %v1625
    %1639 = vrot.lane.b32.xlu0 %v492, 104
    %v1640 = vpop.permute.xlu0 %1639
    %1641 = vrot.lane.b32.xlu0 %v497, 104
    %v1642 = vpop.permute.xlu0 %1641
    %1643 = vrot.lane.b32.xlu0 %v502, 104
    %v1644 = vpop.permute.xlu0 %1643
    %1645 = vrot.lane.b32.xlu0 %v507, 104
    %v1646 = vpop.permute.xlu0 %1645
    %1647 = vrot.lane.b32.xlu0 %v512, 104
    %v1648 = vpop.permute.xlu0 %1647
    %1649 = vrot.lane.b32.xlu0 %v517, 104
    %v1650 = vpop.permute.xlu0 %1649
    %1651 = vrot.lane.b32.xlu0 %v492, 72
    %v1652 = vpop.permute.xlu0 %1651
    %1653 = vrot.lane.b32.xlu0 %v497, 72
    %v1654 = vpop.permute.xlu0 %1653
    %1655 = vrot.lane.b32.xlu0 %v502, 72
    %v1656 = vpop.permute.xlu0 %1655
    %1657 = vrot.lane.b32.xlu0 %v507, 72
    %v1658 = vpop.permute.xlu0 %1657
    %1659 = vrot.lane.b32.xlu0 %v512, 72
    %v1660 = vpop.permute.xlu0 %1659
    %1661 = vrot.lane.b32.xlu0 %v517, 72
    %v1662 = vpop.permute.xlu0 %1661
    %v1663 = vsel %vm538, %v1640, 0
    %v1665 = vsel %vm538, %v1642, 0
    %v1667 = vsel %vm538, %v1644, 0
    %v1669 = vsel %vm538, %v1646, 0
    %v1671 = vsel %vm538, %v1648, 0
    %v1673 = vsel %vm538, %v1650, 0
    %v1675 = vsel %vm538, %v1652, 0
    %v1677 = vsel %vm538, %v1654, 0
    %v1679 = vsel %vm538, %v1656, 0
    %v1681 = vsel %vm538, %v1658, 0
    %v1683 = vsel %vm538, %v1660, 0
    %v1685 = vsel %vm538, %v1662, 0
    %1687 = vmatprep.subr.mxu0 0.0
    %1688 = vmatpush1.xpose.msra.mxu0 %v1675
    %1689 = vmatprep.subr.mxu0 0.0
    %1690 = vmatpush1.xpose.msra.mxu0 %v1677
    %1691 = vmatprep.subr.mxu0 0.0
    %1692 = vmatpush1.xpose.msra.mxu0 %v1679
    %1693 = vmatprep.subr.mxu0 0.0
    %1694 = vmatpush1.xpose.msra.mxu0 %v1681
    %1695 = vmatprep.subr.mxu0 0.0
    %1696 = vmatpush1.xpose.msra.mxu0 %v1683
    %1697 = vmatprep.subr.mxu0 0.0
    %1698 = vmatpush1.xpose.msra.mxu0 %v1685
    %1699 = vmatprep.subr.mxu0 0.0
    %1700 = vmatpush1.xpose.msra.mxu0 0.0
    %1701 = vmatprep.subr.mxu0 0.0
    %1702 = vmatpush1.xpose.msra.mxu0 0.0
    %1703 = vmatprep.subr.mxu0 0.0
    %1704 = vmatpush1.xpose.msra.mxu0 0.0
    %1705 = vmatprep.subr.mxu0 0.0
    %1706 = vmatpush1.xpose.msra.mxu0 0.0
    %1707 = vmatprep.subr.mxu0 0.0
    %1708 = vmatpush1.xpose.msra.mxu0 0.0
    %1709 = vmatprep.subr.mxu0 0.0
    %1710 = vmatpush1.xpose.msra.mxu0 0.0
    %1711 = vmatprep.subr.mxu0 0.0
    %1712 = vmatpush1.xpose.msra.mxu0 0.0
    %1713 = vmatprep.subr.mxu0 0.0
    %1714 = vmatpush1.xpose.msra.mxu0 0.0
    %1715 = vmatprep.subr.mxu0 0.0
    %1716 = vmatpush1.xpose.msra.mxu0 0.0
    %1717 = vmatprep.subr.mxu0 0.0
    %1718 = vmatpush1.xpose.msra.mxu0 0.0
    %1719 = vmatprep.subr.mxu0 0.0
    %1720 = vmatpush1.xpose.msra.mxu0 0.0
    %1721 = vmatprep.subr.mxu0 0.0
    %1722 = vmatpush1.xpose.msra.mxu0 0.0
    %1723 = vmatprep.subr.mxu0 0.0
    %1724 = vmatpush1.xpose.msra.mxu0 0.0
    %1725 = vmatprep.subr.mxu0 0.0
    %1726 = vmatpush1.xpose.msra.mxu0 0.0
    %1727 = vmatprep.subr.mxu0 0.0
    %1728 = vmatpush1.xpose.msra.mxu0 0.0
    %1729 = vmatprep.subr.mxu0 0.0
    %1730 = vmatpush1.xpose.msra.mxu0 0.0
    %1731 = vmatprep.subr.mxu0 0.0
    %1732 = vmatpush1.xpose.msra.mxu0 0.0
    %1733 = vmatprep.subr.mxu0 0.0
    %1734 = vmatpush1.xpose.msra.mxu0 0.0
    %1735 = vmatprep.subr.mxu0 0.0
    %1736 = vmatpush1.xpose.msra.mxu0 0.0
    %1737 = vmatprep.subr.mxu0 0.0
    %1738 = vmatpush1.xpose.msra.mxu0 0.0
    %1739 = vmatprep.subr.mxu0 0.0
    %1740 = vmatpush1.xpose.msra.mxu0 0.0
    %1741 = vmatprep.subr.mxu0 0.0
    %1742 = vmatpush1.xpose.msra.mxu0 0.0
    %1743 = vmatprep.subr.mxu0 0.0
    %1744 = vmatpush1.xpose.msra.mxu0 0.0
    %1745 = vmatprep.subr.mxu0 0.0
    %1746 = vmatpush1.xpose.msra.mxu0 0.0
    %1747 = vmatprep.subr.mxu0 0.0
    %1748 = vmatpush1.xpose.msra.mxu0 0.0
    %1749 = vmatprep.subr.mxu0 0.0
    %1750 = vmatpush1.xpose.msra.mxu0 0.0
    %1751 = vmatprep.mubr.f32.mxu0 0.0
    %1752 = vmatmul.mubr.f32.gmra.mrb[0].mxu0 %v1663
    %v1753 = vpop.f32.mrb[0].mxu0
    %v1754 = vadd.f32 0.0, %v1753
    %v1755 = vpop.f32.mrb[0].mxu0
    %1756 = vmatprep.mubr.f32.mxu0 0.0
    %1757 = vmatmul.mubr.f32.gmra.mrb[0].mxu0 %v1665
    %v1758 = vpop.f32.mrb[0].mxu0
    %v1759 = vadd.f32 0.0, %v1758
    %v1760 = vpop.f32.mrb[0].mxu0
    %1761 = vmatprep.mubr.f32.mxu0 0.0
    %1762 = vmatmul.mubr.f32.gmra.mrb[0].mxu0 %v1667
    %v1763 = vpop.f32.mrb[0].mxu0
    %v1764 = vadd.f32 0.0, %v1763
    %v1765 = vpop.f32.mrb[0].mxu0
    %1766 = vmatprep.mubr.f32.mxu0 0.0
    %1767 = vmatmul.mubr.f32.gmra.mrb[0].mxu0 %v1669
    %v1768 = vpop.f32.mrb[0].mxu0
    %v1769 = vadd.f32 0.0, %v1768
    %v1770 = vpop.f32.mrb[0].mxu0
    %1771 = vmatprep.mubr.f32.mxu0 0.0
    %1772 = vmatmul.mubr.f32.gmra.mrb[0].mxu0 %v1671
    %v1773 = vpop.f32.mrb[0].mxu0
    %v1774 = vadd.f32 0.0, %v1773
    %v1775 = vpop.f32.mrb[0].mxu0
    %1776 = vmatprep.mubr.f32.mxu0 0.0
    %1777 = vmatmul.mubr.f32.gmra.mrb[0].mxu0 %v1673
    %v1778 = vpop.f32.mrb[0].mxu0
    %v1779 = vadd.f32 0.0, %v1778
    %v1780 = vpop.f32.mrb[0].mxu0
    %1781 = vdwg.mxu0
    %v1782 = vmul.f32 %v1754, 0.17677669
    %v1783 = vmul.f32 %v1759, 0.17677669
    %v1784 = vmul.f32 %v1764, 0.17677669
    %v1785 = vmul.f32 %v1769, 0.17677669
    %v1786 = vmul.f32 %v1774, 0.17677669
    %v1787 = vmul.f32 %v1779, 0.17677669
    %v1788 = vadd.f32 %v1782, %v284
    %v1789 = vadd.f32 %v1783, %v285
    %v1790 = vadd.f32 %v1784, %v286
    %v1791 = vadd.f32 %v1785, %v287
    %v1792 = vadd.f32 %v1786, %v288
    %v1793 = vadd.f32 %v1787, %v289
    %v1794 = vsel %vm158, %v1788, -inf
    %1795 = vmax.xlane.f32.xlu0 %v1794
    %v1796 = vpop.xlane.xlu0 %1795
    %v1797 = vsel %vm158, %v1789, -inf
    %1798 = vmax.xlane.f32.xlu0 %v1797
    %v1799 = vpop.xlane.xlu0 %1798
    %v1800 = vsel %vm158, %v1790, -inf
    %1801 = vmax.xlane.f32.xlu0 %v1800
    %v1802 = vpop.xlane.xlu0 %1801
    %v1803 = vsel %vm158, %v1791, -inf
    %1804 = vmax.xlane.f32.xlu0 %v1803
    %v1805 = vpop.xlane.xlu0 %1804
    %v1806 = vsel %vm158, %v1792, -inf
    %1807 = vmax.xlane.f32.xlu0 %v1806
    %v1808 = vpop.xlane.xlu0 %1807
    %v1809 = vsel %vm158, %v1793, -inf
    %1810 = vmax.xlane.f32.xlu0 %v1809
    %v1811 = vpop.xlane.xlu0 %1810
    %v1812 = vsub.f32 %v1788, %v1796
    %v1813 = vsub.f32 %v1789, %v1799
    %v1814 = vsub.f32 %v1790, %v1802
    %v1815 = vsub.f32 %v1791, %v1805
    %v1816 = vsub.f32 %v1792, %v1808
    %v1817 = vsub.f32 %v1793, %v1811
    %v1818 = vmul.f32 %v1812, 1.442695
    %v1819 = vpow.pop %v1818
    %v1820 = vmul.f32 %v1813, 1.442695
    %v1821 = vpow.pop %v1820
    %v1822 = vmul.f32 %v1814, 1.442695
    %v1823 = vpow.pop %v1822
    %v1824 = vmul.f32 %v1815, 1.442695
    %v1825 = vpow.pop %v1824
    %v1826 = vmul.f32 %v1816, 1.442695
    %v1827 = vpow.pop %v1826
    %v1828 = vmul.f32 %v1817, 1.442695
    %v1829 = vpow.pop %v1828
    %v1830 = vsel %vm158, %v1819, 0.0
    %1831 = vadd.xlane.f32.xlu0 %v1830
    %v1832 = vpop.xlane.xlu0 %1831
    %v1833 = vsel %vm158, %v1821, 0.0
    %1834 = vadd.xlane.f32.xlu0 %v1833
    %v1835 = vpop.xlane.xlu0 %1834
    %v1836 = vsel %vm158, %v1823, 0.0
    %1837 = vadd.xlane.f32.xlu0 %v1836
    %v1838 = vpop.xlane.xlu0 %1837
    %v1839 = vsel %vm158, %v1825, 0.0
    %1840 = vadd.xlane.f32.xlu0 %v1839
    %v1841 = vpop.xlane.xlu0 %1840
    %v1842 = vsel %vm158, %v1827, 0.0
    %1843 = vadd.xlane.f32.xlu0 %v1842
    %v1844 = vpop.xlane.xlu0 %1843
    %v1845 = vsel %vm158, %v1829, 0.0
    %1846 = vadd.xlane.f32.xlu0 %v1845
    %v1847 = vpop.xlane.xlu0 %1846
    %v1848 = vrcp.pop %v1832
    %v1849 = vmul.f32 %v1819, %v1848
    %v1850 = vrcp.pop %v1835
    %v1851 = vmul.f32 %v1821, %v1850
    %v1852 = vrcp.pop %v1838
    %v1853 = vmul.f32 %v1823, %v1852
    %v1854 = vrcp.pop %v1841
    %v1855 = vmul.f32 %v1825, %v1854
    %v1856 = vrcp.pop %v1844
    %v1857 = vmul.f32 %v1827, %v1856
    %v1858 = vrcp.pop %v1847
    %v1859 = vmul.f32 %v1829, %v1858
    %1860 = vrot.lane.b32.xlu0 %v492, 40
    %v1861 = vpop.permute.xlu0 %1860
    %1862 = vrot.lane.b32.xlu0 %v497, 40
    %v1863 = vpop.permute.xlu0 %1862
    %1864 = vrot.lane.b32.xlu0 %v502, 40
    %v1865 = vpop.permute.xlu0 %1864
    %1866 = vrot.lane.b32.xlu0 %v507, 40
    %v1867 = vpop.permute.xlu0 %1866
    %1868 = vrot.lane.b32.xlu0 %v512, 40
    %v1869 = vpop.permute.xlu0 %1868
    %1870 = vrot.lane.b32.xlu0 %v517, 40
    %v1871 = vpop.permute.xlu0 %1870
    %v1879 = vsel %vm158, %v1849, 0
    %v1882 = vsel %vm158, %v1851, 0
    %v1885 = vsel %vm158, %v1853, 0
    %v1888 = vsel %vm158, %v1855, 0
    %v1891 = vsel %vm158, %v1857, 0
    %v1894 = vsel %vm158, %v1859, 0
    %1896 = vmatprep.subr.mxu0 0.0
    %1897 = vmatpush1.msra.mxu0 %v1861
    %1898 = vmatprep.subr.mxu0 0.0
    %1899 = vmatpush1.msra.mxu0 %v1863
    %1900 = vmatprep.subr.mxu0 0.0
    %1901 = vmatpush1.msra.mxu0 %v1865
    %1902 = vmatprep.subr.mxu0 0.0
    %1903 = vmatpush1.msra.mxu0 %v1867
    %1904 = vmatprep.subr.mxu0 0.0
    %1905 = vmatpush1.msra.mxu0 %v1869
    %1906 = vmatprep.subr.mxu0 0.0
    %1907 = vmatpush1.msra.mxu0 %v1871
    %1908 = vmatprep.subr.mxu0 0.0
    %1909 = vmatpush1.msra.mxu0 0.0
    %1910 = vmatprep.subr.mxu0 0.0
    %1911 = vmatpush1.msra.mxu0 0.0
    %1912 = vmatprep.subr.mxu0 0.0
    %1913 = vmatpush1.msra.mxu0 0.0
    %1914 = vmatprep.subr.mxu0 0.0
    %1915 = vmatpush1.msra.mxu0 0.0
    %1916 = vmatprep.subr.mxu0 0.0
    %1917 = vmatpush1.msra.mxu0 0.0
    %1918 = vmatprep.subr.mxu0 0.0
    %1919 = vmatpush1.msra.mxu0 0.0
    %1920 = vmatprep.subr.mxu0 0.0
    %1921 = vmatpush1.msra.mxu0 0.0
    %1922 = vmatprep.subr.mxu0 0.0
    %1923 = vmatpush1.msra.mxu0 0.0
    %1924 = vmatprep.subr.mxu0 0.0
    %1925 = vmatpush1.msra.mxu0 0.0
    %1926 = vmatprep.subr.mxu0 0.0
    %1927 = vmatpush1.msra.mxu0 0.0
    %1928 = vmatprep.subr.mxu0 0.0
    %1929 = vmatpush1.msra.mxu0 0.0
    %1930 = vmatprep.subr.mxu0 0.0
    %1931 = vmatpush1.msra.mxu0 0.0
    %1932 = vmatprep.subr.mxu0 0.0
    %1933 = vmatpush1.msra.mxu0 0.0
    %1934 = vmatprep.subr.mxu0 0.0
    %1935 = vmatpush1.msra.mxu0 0.0
    %1936 = vmatprep.subr.mxu0 0.0
    %1937 = vmatpush1.msra.mxu0 0.0
    %1938 = vmatprep.subr.mxu0 0.0
    %1939 = vmatpush1.msra.mxu0 0.0
    %1940 = vmatprep.subr.mxu0 0.0
    %1941 = vmatpush1.msra.mxu0 0.0
    %1942 = vmatprep.subr.mxu0 0.0
    %1943 = vmatpush1.msra.mxu0 0.0
    %1944 = vmatprep.subr.mxu0 0.0
    %1945 = vmatpush1.msra.mxu0 0.0
    %1946 = vmatprep.subr.mxu0 0.0
    %1947 = vmatpush1.msra.mxu0 0.0
    %1948 = vmatprep.subr.mxu0 0.0
    %1949 = vmatpush1.msra.mxu0 0.0
    %1950 = vmatprep.subr.mxu0 0.0
    %1951 = vmatpush1.msra.mxu0 0.0
    %1952 = vmatprep.subr.mxu0 0.0
    %1953 = vmatpush1.msra.mxu0 0.0
    %1954 = vmatprep.subr.mxu0 0.0
    %1955 = vmatpush1.msra.mxu0 0.0
    %1956 = vmatprep.subr.mxu0 0.0
    %1957 = vmatpush1.msra.mxu0 0.0
    %1958 = vmatprep.subr.mxu0 0.0
    %1959 = vmatpush1.msra.mxu0 0.0
    %1960 = vmatprep.mubr.f32.mxu0 0.0
    %1961 = vmatmul.mubr.f32.gmra.mrb[0].mxu0 %v1879
    %v1962 = vpop.f32.mrb[0].mxu0
    %v1963 = vadd.f32 0.0, %v1962
    %v1964 = vpop.f32.mrb[0].mxu0
    %1965 = vmatprep.mubr.f32.mxu0 0.0
    %1966 = vmatmul.mubr.f32.gmra.mrb[0].mxu0 %v1882
    %v1967 = vpop.f32.mrb[0].mxu0
    %v1968 = vadd.f32 0.0, %v1967
    %v1969 = vpop.f32.mrb[0].mxu0
    %1970 = vmatprep.mubr.f32.mxu0 0.0
    %1971 = vmatmul.mubr.f32.gmra.mrb[0].mxu0 %v1885
    %v1972 = vpop.f32.mrb[0].mxu0
    %v1973 = vadd.f32 0.0, %v1972
    %v1974 = vpop.f32.mrb[0].mxu0
    %1975 = vmatprep.mubr.f32.mxu0 0.0
    %1976 = vmatmul.mubr.f32.gmra.mrb[0].mxu0 %v1888
    %v1977 = vpop.f32.mrb[0].mxu0
    %v1978 = vadd.f32 0.0, %v1977
    %v1979 = vpop.f32.mrb[0].mxu0
    %1980 = vmatprep.mubr.f32.mxu0 0.0
    %1981 = vmatmul.mubr.f32.gmra.mrb[0].mxu0 %v1891
    %v1982 = vpop.f32.mrb[0].mxu0
    %v1983 = vadd.f32 0.0, %v1982
    %v1984 = vpop.f32.mrb[0].mxu0
    %1985 = vmatprep.mubr.f32.mxu0 0.0
    %1986 = vmatmul.mubr.f32.gmra.mrb[0].mxu0 %v1894
    %v1987 = vpop.f32.mrb[0].mxu0
    %v1988 = vadd.f32 0.0, %v1987
    %v1989 = vpop.f32.mrb[0].mxu0
    %1990 = vdwg.mxu0
    %1997 = vrot.lane.b32.xlu0 %v1963, 24
    %v1998 = vpop.permute.xlu0 %1997
    %1999 = vrot.lane.b32.xlu0 %v1968, 24
    %v2000 = vpop.permute.xlu0 %1999
    %2001 = vrot.lane.b32.xlu0 %v1973, 24
    %v2002 = vpop.permute.xlu0 %2001
    %2003 = vrot.lane.b32.xlu0 %v1978, 24
    %v2004 = vpop.permute.xlu0 %2003
    %2005 = vrot.lane.b32.xlu0 %v1983, 24
    %v2006 = vpop.permute.xlu0 %2005
    %2007 = vrot.lane.b32.xlu0 %v1988, 24
    %v2008 = vpop.permute.xlu0 %2007
    %vm2015 = vcmask 261312
    %2016 = vst.msk [vmem:[#allocation2] sm:$0xff] %vm2015, %v1998
    %2017 = vst.msk [vmem:[#allocation2 + $0x8] sm:$0xff] %vm2015, %v2000
    %2018 = vst.msk [vmem:[#allocation2 + $0x10] sm:$0xff] %vm2015, %v2002
    %2019 = vst.msk [vmem:[#allocation2 + $0x18] sm:$0xff] %vm2015, %v2004
    %2020 = vst.msk [vmem:[#allocation2 + $0x20] sm:$0xff] %vm2015, %v2006
    %2021 = vst.msk [vmem:[#allocation2 + $0x28] sm:$0xff] %vm2015, %v2008
    %v2022 = vld [vmem:[#allocation2] sm:$0xff]
    %v2023 = vld [vmem:[#allocation2 + $0x8] sm:$0xff]
    %v2024 = vld [vmem:[#allocation2 + $0x10] sm:$0xff]
    %v2025 = vld [vmem:[#allocation2 + $0x18] sm:$0xff]
    %v2026 = vld [vmem:[#allocation2 + $0x20] sm:$0xff]
    %v2027 = vld [vmem:[#allocation2 + $0x28] sm:$0xff]
    %v2028 = vld [vmem:[%s27] sm:$0xff]
    %v2029 = vld [vmem:[%s27 + $0x8] sm:$0xff]
    %v2030 = vld [vmem:[%s27 + $0x10] sm:$0xff]
    %v2031 = vld [vmem:[%s27 + $0x18] sm:$0xff]
    %v2032 = vld [vmem:[%s29] sm:$0x1]
    %v2034 = vlaneseq
    %v2035 = vshrl.u32 %v2034, 7
    %v2036 = vsub.s32 0, %v2035
    %v2037 = vrot.slane %v2032, %v2036
    %v2040 = vsel %vm292, %v2022, 0
    %v2043 = vsel %vm292, %v2023, 0
    %v2046 = vsel %vm292, %v2024, 0
    %v2049 = vsel %vm292, %v2025, 0
    %v2052 = vsel %vm292, %v2026, 0
    %v2055 = vsel %vm292, %v2027, 0
    %2057 = vmatprep.subr.mxu0 0.0
    %2058 = vmatpush1.msra.mxu0 %v2028
    %2059 = vmatprep.subr.mxu0 0.0
    %2060 = vmatpush1.msra.mxu0 %v2029
    %2061 = vmatprep.subr.mxu0 0.0
    %2062 = vmatpush1.msra.mxu0 %v2030
    %2063 = vmatprep.subr.mxu0 0.0
    %2064 = vmatpush1.msra.mxu0 %v2031
    %2065 = vmatprep.subr.mxu0 0.0
    %2066 = vmatpush1.msra.mxu0 0.0
    %2067 = vmatprep.subr.mxu0 0.0
    %2068 = vmatpush1.msra.mxu0 0.0
    %2069 = vmatprep.subr.mxu0 0.0
    %2070 = vmatpush1.msra.mxu0 0.0
    %2071 = vmatprep.subr.mxu0 0.0
    %2072 = vmatpush1.msra.mxu0 0.0
    %2073 = vmatprep.subr.mxu0 0.0
    %2074 = vmatpush1.msra.mxu0 0.0
    %2075 = vmatprep.subr.mxu0 0.0
    %2076 = vmatpush1.msra.mxu0 0.0
    %2077 = vmatprep.subr.mxu0 0.0
    %2078 = vmatpush1.msra.mxu0 0.0
    %2079 = vmatprep.subr.mxu0 0.0
    %2080 = vmatpush1.msra.mxu0 0.0
    %2081 = vmatprep.subr.mxu0 0.0
    %2082 = vmatpush1.msra.mxu0 0.0
    %2083 = vmatprep.subr.mxu0 0.0
    %2084 = vmatpush1.msra.mxu0 0.0
    %2085 = vmatprep.subr.mxu0 0.0
    %2086 = vmatpush1.msra.mxu0 0.0
    %2087 = vmatprep.subr.mxu0 0.0
    %2088 = vmatpush1.msra.mxu0 0.0
    %2089 = vmatprep.subr.mxu0 0.0
    %2090 = vmatpush1.msra.mxu0 0.0
    %2091 = vmatprep.subr.mxu0 0.0
    %2092 = vmatpush1.msra.mxu0 0.0
    %2093 = vmatprep.subr.mxu0 0.0
    %2094 = vmatpush1.msra.mxu0 0.0
    %2095 = vmatprep.subr.mxu0 0.0
    %2096 = vmatpush1.msra.mxu0 0.0
    %2097 = vmatprep.subr.mxu0 0.0
    %2098 = vmatpush1.msra.mxu0 0.0
    %2099 = vmatprep.subr.mxu0 0.0
    %2100 = vmatpush1.msra.mxu0 0.0
    %2101 = vmatprep.subr.mxu0 0.0
    %2102 = vmatpush1.msra.mxu0 0.0
    %2103 = vmatprep.subr.mxu0 0.0
    %2104 = vmatpush1.msra.mxu0 0.0
    %2105 = vmatprep.subr.mxu0 0.0
    %2106 = vmatpush1.msra.mxu0 0.0
    %2107 = vmatprep.subr.mxu0 0.0
    %2108 = vmatpush1.msra.mxu0 0.0
    %2109 = vmatprep.subr.mxu0 0.0
    %2110 = vmatpush1.msra.mxu0 0.0
    %2111 = vmatprep.subr.mxu0 0.0
    %2112 = vmatpush1.msra.mxu0 0.0
    %2113 = vmatprep.subr.mxu0 0.0
    %2114 = vmatpush1.msra.mxu0 0.0
    %2115 = vmatprep.subr.mxu0 0.0
    %2116 = vmatpush1.msra.mxu0 0.0
    %2117 = vmatprep.subr.mxu0 0.0
    %2118 = vmatpush1.msra.mxu0 0.0
    %2119 = vmatprep.subr.mxu0 0.0
    %2120 = vmatpush1.msra.mxu0 0.0
    %2121 = vmatprep.mubr.f32.mxu0 0.0
    %2122 = vmatmul.mubr.f32.gmra.mrb[0].mxu0 %v2040
    %v2123 = vpop.f32.mrb[0].mxu0
    %v2124 = vadd.f32 %v2037, %v2123
    %v2125 = vpop.f32.mrb[0].mxu0
    %2126 = vmatprep.mubr.f32.mxu0 0.0
    %2127 = vmatmul.mubr.f32.gmra.mrb[0].mxu0 %v2043
    %v2128 = vpop.f32.mrb[0].mxu0
    %v2129 = vadd.f32 %v2037, %v2128
    %v2130 = vpop.f32.mrb[0].mxu0
    %2131 = vmatprep.mubr.f32.mxu0 0.0
    %2132 = vmatmul.mubr.f32.gmra.mrb[0].mxu0 %v2046
    %v2133 = vpop.f32.mrb[0].mxu0
    %v2134 = vadd.f32 %v2037, %v2133
    %v2135 = vpop.f32.mrb[0].mxu0
    %2136 = vmatprep.mubr.f32.mxu0 0.0
    %2137 = vmatmul.mubr.f32.gmra.mrb[0].mxu0 %v2049
    %v2138 = vpop.f32.mrb[0].mxu0
    %v2139 = vadd.f32 %v2037, %v2138
    %v2140 = vpop.f32.mrb[0].mxu0
    %2141 = vmatprep.mubr.f32.mxu0 0.0
    %2142 = vmatmul.mubr.f32.gmra.mrb[0].mxu0 %v2052
    %v2143 = vpop.f32.mrb[0].mxu0
    %v2144 = vadd.f32 %v2037, %v2143
    %v2145 = vpop.f32.mrb[0].mxu0
    %2146 = vmatprep.mubr.f32.mxu0 0.0
    %2147 = vmatmul.mubr.f32.gmra.mrb[0].mxu0 %v2055
    %v2148 = vpop.f32.mrb[0].mxu0
    %v2149 = vadd.f32 %v2037, %v2148
    %v2150 = vpop.f32.mrb[0].mxu0
    %2151 = vdwg.mxu0
    %v2152 = vadd.f32 %v278, %v2124
    %v2153 = vadd.f32 %v279, %v2129
    %v2154 = vadd.f32 %v280, %v2134
    %v2155 = vadd.f32 %v281, %v2139
    %v2156 = vadd.f32 %v282, %v2144
    %v2157 = vadd.f32 %v283, %v2149
    %v2158 = vld [vmem:[%s31] sm:$0x1]
    %v2159 = vld [vmem:[%s33] sm:$0x1]
    %v2160 = vsel %vm292, %v2152, 0.0
    %2161 = vadd.xlane.f32.xlu0 %v2160
    %v2162 = vpop.xlane.xlu0 %2161
    %v2163 = vsel %vm292, %v2153, 0.0
    %2164 = vadd.xlane.f32.xlu0 %v2163
    %v2165 = vpop.xlane.xlu0 %2164
    %v2166 = vsel %vm292, %v2154, 0.0
    %2167 = vadd.xlane.f32.xlu0 %v2166
    %v2168 = vpop.xlane.xlu0 %2167
    %v2169 = vsel %vm292, %v2155, 0.0
    %2170 = vadd.xlane.f32.xlu0 %v2169
    %v2171 = vpop.xlane.xlu0 %2170
    %v2172 = vsel %vm292, %v2156, 0.0
    %2173 = vadd.xlane.f32.xlu0 %v2172
    %v2174 = vpop.xlane.xlu0 %2173
    %v2175 = vsel %vm292, %v2157, 0.0
    %2176 = vadd.xlane.f32.xlu0 %v2175
    %v2177 = vpop.xlane.xlu0 %2176
    %v2178 = vmul.f32 %v2162, %v311
    %v2179 = vmul.f32 %v2165, %v311
    %v2180 = vmul.f32 %v2168, %v311
    %v2181 = vmul.f32 %v2171, %v311
    %v2182 = vmul.f32 %v2174, %v311
    %v2183 = vmul.f32 %v2177, %v311
    %v2184 = vsub.f32 %v2152, %v2178
    %v2185 = vsub.f32 %v2153, %v2179
    %v2186 = vsub.f32 %v2154, %v2180
    %v2187 = vsub.f32 %v2155, %v2181
    %v2188 = vsub.f32 %v2156, %v2182
    %v2189 = vsub.f32 %v2157, %v2183
    %v2190 = vmul.f32 %v2184, %v2184
    %v2191 = vmul.f32 %v2185, %v2185
    %v2192 = vmul.f32 %v2186, %v2186
    %v2193 = vmul.f32 %v2187, %v2187
    %v2194 = vmul.f32 %v2188, %v2188
    %v2195 = vmul.f32 %v2189, %v2189
    %v2196 = vsel %vm292, %v2190, 0.0
    %2197 = vadd.xlane.f32.xlu0 %v2196
    %v2198 = vpop.xlane.xlu0 %2197
    %v2199 = vsel %vm292, %v2191, 0.0
    %2200 = vadd.xlane.f32.xlu0 %v2199
    %v2201 = vpop.xlane.xlu0 %2200
    %v2202 = vsel %vm292, %v2192, 0.0
    %2203 = vadd.xlane.f32.xlu0 %v2202
    %v2204 = vpop.xlane.xlu0 %2203
    %v2205 = vsel %vm292, %v2193, 0.0
    %2206 = vadd.xlane.f32.xlu0 %v2205
    %v2207 = vpop.xlane.xlu0 %2206
    %v2208 = vsel %vm292, %v2194, 0.0
    %2209 = vadd.xlane.f32.xlu0 %v2208
    %v2210 = vpop.xlane.xlu0 %2209
    %v2211 = vsel %vm292, %v2195, 0.0
    %2212 = vadd.xlane.f32.xlu0 %v2211
    %v2213 = vpop.xlane.xlu0 %2212
    %v2214 = vmul.f32 %v2198, %v311
    %v2215 = vmul.f32 %v2201, %v311
    %v2216 = vmul.f32 %v2204, %v311
    %v2217 = vmul.f32 %v2207, %v311
    %v2218 = vmul.f32 %v2210, %v311
    %v2219 = vmul.f32 %v2213, %v311
    %v2220 = vadd.f32 %v2214, 1e-05
    %v2221 = vadd.f32 %v2215, 1e-05
    %v2222 = vadd.f32 %v2216, 1e-05
    %v2223 = vadd.f32 %v2217, 1e-05
    %v2224 = vadd.f32 %v2218, 1e-05
    %v2225 = vadd.f32 %v2219, 1e-05
    %v2226 = vrsqrt.pop %v2220
    %v2227 = vrsqrt.pop %v2221
    %v2228 = vrsqrt.pop %v2222
    %v2229 = vrsqrt.pop %v2223
    %v2230 = vrsqrt.pop %v2224
    %v2231 = vrsqrt.pop %v2225
    %v2232 = vmul.f32 %v2184, %v2226
    %v2233 = vmul.f32 %v2185, %v2227
    %v2234 = vmul.f32 %v2186, %v2228
    %v2235 = vmul.f32 %v2187, %v2229
    %v2236 = vmul.f32 %v2188, %v2230
    %v2237 = vmul.f32 %v2189, %v2231
    %v2239 = vlaneseq
    %v2240 = vshrl.u32 %v2239, 7
    %v2241 = vsub.s32 0, %v2240
    %v2242 = vrot.slane %v2158, %v2241
    %v2244 = vmul.f32 %v2232, %v2242
    %v2245 = vmul.f32 %v2233, %v2242
    %v2246 = vmul.f32 %v2234, %v2242
    %v2247 = vmul.f32 %v2235, %v2242
    %v2248 = vmul.f32 %v2236, %v2242
    %v2249 = vmul.f32 %v2237, %v2242
    %v2251 = vlaneseq
    %v2252 = vshrl.u32 %v2251, 7
    %v2253 = vsub.s32 0, %v2252
    %v2254 = vrot.slane %v2159, %v2253
    %v2256 = vadd.f32 %v2244, %v2254
    %v2257 = vadd.f32 %v2245, %v2254
    %v2258 = vadd.f32 %v2246, %v2254
    %v2259 = vadd.f32 %v2247, %v2254
    %v2260 = vadd.f32 %v2248, %v2254
    %v2261 = vadd.f32 %v2249, %v2254
    %v2262 = vld [vmem:[%s35] sm:$0xff]
    %v2263 = vld [vmem:[%s35 + $0x8] sm:$0xff]
    %v2264 = vld [vmem:[%s35 + $0x10] sm:$0xff]
    %v2265 = vld [vmem:[%s35 + $0x18] sm:$0xff]
    %v2266 = vld [vmem:[%s37] sm:$0x1]
    %v2268 = vlaneseq
    %v2269 = vshrl.u32 %v2268, 7
    %v2270 = vsub.s32 0, %v2269
    %v2271 = vrot.slane %v2266, %v2270
    %v2274 = vsel %vm292, %v2256, 0
    %v2277 = vsel %vm292, %v2257, 0
    %v2280 = vsel %vm292, %v2258, 0
    %v2283 = vsel %vm292, %v2259, 0
    %v2286 = vsel %vm292, %v2260, 0
    %v2289 = vsel %vm292, %v2261, 0
    %2291 = vmatprep.subr.mxu0 0.0
    %2292 = vmatpush1.msra.mxu0 %v2262
    %2293 = vmatprep.subr.mxu0 0.0
    %2294 = vmatpush1.msra.mxu0 %v2263
    %2295 = vmatprep.subr.mxu0 0.0
    %2296 = vmatpush1.msra.mxu0 %v2264
    %2297 = vmatprep.subr.mxu0 0.0
    %2298 = vmatpush1.msra.mxu0 %v2265
    %2299 = vmatprep.subr.mxu0 0.0
    %2300 = vmatpush1.msra.mxu0 0.0
    %2301 = vmatprep.subr.mxu0 0.0
    %2302 = vmatpush1.msra.mxu0 0.0
    %2303 = vmatprep.subr.mxu0 0.0
    %2304 = vmatpush1.msra.mxu0 0.0
    %2305 = vmatprep.subr.mxu0 0.0
    %2306 = vmatpush1.msra.mxu0 0.0
    %2307 = vmatprep.subr.mxu0 0.0
    %2308 = vmatpush1.msra.mxu0 0.0
    %2309 = vmatprep.subr.mxu0 0.0
    %2310 = vmatpush1.msra.mxu0 0.0
    %2311 = vmatprep.subr.mxu0 0.0
    %2312 = vmatpush1.msra.mxu0 0.0
    %2313 = vmatprep.subr.mxu0 0.0
    %2314 = vmatpush1.msra.mxu0 0.0
    %2315 = vmatprep.subr.mxu0 0.0
    %2316 = vmatpush1.msra.mxu0 0.0
    %2317 = vmatprep.subr.mxu0 0.0
    %2318 = vmatpush1.msra.mxu0 0.0
    %2319 = vmatprep.subr.mxu0 0.0
    %2320 = vmatpush1.msra.mxu0 0.0
    %2321 = vmatprep.subr.mxu0 0.0
    %2322 = vmatpush1.msra.mxu0 0.0
    %2323 = vmatprep.subr.mxu0 0.0
    %2324 = vmatpush1.msra.mxu0 0.0
    %2325 = vmatprep.subr.mxu0 0.0
    %2326 = vmatpush1.msra.mxu0 0.0
    %2327 = vmatprep.subr.mxu0 0.0
    %2328 = vmatpush1.msra.mxu0 0.0
    %2329 = vmatprep.subr.mxu0 0.0
    %2330 = vmatpush1.msra.mxu0 0.0
    %2331 = vmatprep.subr.mxu0 0.0
    %2332 = vmatpush1.msra.mxu0 0.0
    %2333 = vmatprep.subr.mxu0 0.0
    %2334 = vmatpush1.msra.mxu0 0.0
    %2335 = vmatprep.subr.mxu0 0.0
    %2336 = vmatpush1.msra.mxu0 0.0
    %2337 = vmatprep.subr.mxu0 0.0
    %2338 = vmatpush1.msra.mxu0 0.0
    %2339 = vmatprep.subr.mxu0 0.0
    %2340 = vmatpush1.msra.mxu0 0.0
    %2341 = vmatprep.subr.mxu0 0.0
    %2342 = vmatpush1.msra.mxu0 0.0
    %2343 = vmatprep.subr.mxu0 0.0
    %2344 = vmatpush1.msra.mxu0 0.0
    %2345 = vmatprep.subr.mxu0 0.0
    %2346 = vmatpush1.msra.mxu0 0.0
    %2347 = vmatprep.subr.mxu0 0.0
    %2348 = vmatpush1.msra.mxu0 0.0
    %2349 = vmatprep.subr.mxu0 0.0
    %2350 = vmatpush1.msra.mxu0 0.0
    %2351 = vmatprep.subr.mxu0 0.0
    %2352 = vmatpush1.msra.mxu0 0.0
    %2353 = vmatprep.subr.mxu0 0.0
    %2354 = vmatpush1.msra.mxu0 0.0
    %2355 = vmatprep.mubr.f32.mxu0 0.0
    %2356 = vmatmul.mubr.f32.gmra.mrb[0].mxu0 %v2274
    %v2357 = vpop.f32.mrb[0].mxu0
    %v2358 = vadd.f32 %v2271, %v2357
    %v2359 = vpop.f32.mrb[0].mxu0
    %2360 = vmatprep.mubr.f32.mxu0 0.0
    %2361 = vmatmul.mubr.f32.gmra.mrb[0].mxu0 %v2277
    %v2362 = vpop.f32.mrb[0].mxu0
    %v2363 = vadd.f32 %v2271, %v2362
    %v2364 = vpop.f32.mrb[0].mxu0
    %2365 = vmatprep.mubr.f32.mxu0 0.0
    %2366 = vmatmul.mubr.f32.gmra.mrb[0].mxu0 %v2280
    %v2367 = vpop.f32.mrb[0].mxu0
    %v2368 = vadd.f32 %v2271, %v2367
    %v2369 = vpop.f32.mrb[0].mxu0
    %2370 = vmatprep.mubr.f32.mxu0 0.0
    %2371 = vmatmul.mubr.f32.gmra.mrb[0].mxu0 %v2283
    %v2372 = vpop.f32.mrb[0].mxu0
    %v2373 = vadd.f32 %v2271, %v2372
    %v2374 = vpop.f32.mrb[0].mxu0
    %2375 = vmatprep.mubr.f32.mxu0 0.0
    %2376 = vmatmul.mubr.f32.gmra.mrb[0].mxu0 %v2286
    %v2377 = vpop.f32.mrb[0].mxu0
    %v2378 = vadd.f32 %v2271, %v2377
    %v2379 = vpop.f32.mrb[0].mxu0
    %2380 = vmatprep.mubr.f32.mxu0 0.0
    %2381 = vmatmul.mubr.f32.gmra.mrb[0].mxu0 %v2289
    %v2382 = vpop.f32.mrb[0].mxu0
    %v2383 = vadd.f32 %v2271, %v2382
    %v2384 = vpop.f32.mrb[0].mxu0
    %2385 = vdwg.mxu0
    %v2386 = vmul.f32 %v2358, %v2358
    %v2387 = vmul.f32 %v2363, %v2363
    %v2388 = vmul.f32 %v2368, %v2368
    %v2389 = vmul.f32 %v2373, %v2373
    %v2390 = vmul.f32 %v2378, %v2378
    %v2391 = vmul.f32 %v2383, %v2383
    %v2392 = vmul.f32 %v2358, %v2386
    %v2393 = vmul.f32 %v2363, %v2387
    %v2394 = vmul.f32 %v2368, %v2388
    %v2395 = vmul.f32 %v2373, %v2389
    %v2396 = vmul.f32 %v2378, %v2390
    %v2397 = vmul.f32 %v2383, %v2391
    %v2398 = vmul.f32 %v2392, 0.044715
    %v2399 = vmul.f32 %v2393, 0.044715
    %v2400 = vmul.f32 %v2394, 0.044715
    %v2401 = vmul.f32 %v2395, 0.044715
    %v2402 = vmul.f32 %v2396, 0.044715
    %v2403 = vmul.f32 %v2397, 0.044715
    %v2404 = vadd.f32 %v2358, %v2398
    %v2405 = vadd.f32 %v2363, %v2399
    %v2406 = vadd.f32 %v2368, %v2400
    %v2407 = vadd.f32 %v2373, %v2401
    %v2408 = vadd.f32 %v2378, %v2402
    %v2409 = vadd.f32 %v2383, %v2403
    %v2410 = vmul.f32 %v2404, 0.7978846
    %v2411 = vmul.f32 %v2405, 0.7978846
    %v2412 = vmul.f32 %v2406, 0.7978846
    %v2413 = vmul.f32 %v2407, 0.7978846
    %v2414 = vmul.f32 %v2408, 0.7978846
    %v2415 = vmul.f32 %v2409, 0.7978846
    %v2416 = vtanh.pop %v2410
    %v2417 = vtanh.pop %v2411
    %v2418 = vtanh.pop %v2412
    %v2419 = vtanh.pop %v2413
    %v2420 = vtanh.pop %v2414
    %v2421 = vtanh.pop %v2415
    %v2422 = vadd.f32 %v2416, 1.0
    %v2423 = vadd.f32 %v2417, 1.0
    %v2424 = vadd.f32 %v2418, 1.0
    %v2425 = vadd.f32 %v2419, 1.0
    %v2426 = vadd.f32 %v2420, 1.0
    %v2427 = vadd.f32 %v2421, 1.0
    %v2428 = vmul.f32 %v2422, 0.5
    %v2429 = vmul.f32 %v2423, 0.5
    %v2430 = vmul.f32 %v2424, 0.5
    %v2431 = vmul.f32 %v2425, 0.5
    %v2432 = vmul.f32 %v2426, 0.5
    %v2433 = vmul.f32 %v2427, 0.5
    %v2434 = vmul.f32 %v2358, %v2428
    %v2435 = vmul.f32 %v2363, %v2429
    %v2436 = vmul.f32 %v2368, %v2430
    %v2437 = vmul.f32 %v2373, %v2431
    %v2438 = vmul.f32 %v2378, %v2432
    %v2439 = vmul.f32 %v2383, %v2433
    %v2440 = vld [vmem:[%s39] sm:$0xff]
    %v2441 = vld [vmem:[%s39 + $0x8] sm:$0xff]
    %v2442 = vld [vmem:[%s39 + $0x10] sm:$0xff]
    %v2443 = vld [vmem:[%s39 + $0x18] sm:$0xff]
    %v2444 = vld [vmem:[%s39 + $0x20] sm:$0xff]
    %v2445 = vld [vmem:[%s39 + $0x28] sm:$0xff]
    %v2446 = vld [vmem:[%s39 + $0x30] sm:$0xff]
    %v2447 = vld [vmem:[%s39 + $0x38] sm:$0xff]
    %v2448 = vld [vmem:[%s41] sm:$0x1]
    %v2450 = vlaneseq
    %v2451 = vshrl.u32 %v2450, 7
    %v2452 = vsub.s32 0, %v2451
    %v2453 = vrot.slane %v2448, %v2452
    %vm2455 = vcmask 523264
    %v2457 = vsel %vm2455, %v2434, 0
    %v2460 = vsel %vm2455, %v2435, 0
    %v2463 = vsel %vm2455, %v2436, 0
    %v2466 = vsel %vm2455, %v2437, 0
    %v2469 = vsel %vm2455, %v2438, 0
    %v2472 = vsel %vm2455, %v2439, 0
    %2474 = vmatprep.subr.mxu0 0.0
    %2475 = vmatpush1.msra.mxu0 %v2440
    %2476 = vmatprep.subr.mxu0 0.0
    %2477 = vmatpush1.msra.mxu0 %v2441
    %2478 = vmatprep.subr.mxu0 0.0
    %2479 = vmatpush1.msra.mxu0 %v2442
    %2480 = vmatprep.subr.mxu0 0.0
    %2481 = vmatpush1.msra.mxu0 %v2443
    %2482 = vmatprep.subr.mxu0 0.0
    %2483 = vmatpush1.msra.mxu0 %v2444
    %2484 = vmatprep.subr.mxu0 0.0
    %2485 = vmatpush1.msra.mxu0 %v2445
    %2486 = vmatprep.subr.mxu0 0.0
    %2487 = vmatpush1.msra.mxu0 %v2446
    %2488 = vmatprep.subr.mxu0 0.0
    %2489 = vmatpush1.msra.mxu0 %v2447
    %2490 = vmatprep.subr.mxu0 0.0
    %2491 = vmatpush1.msra.mxu0 0.0
    %2492 = vmatprep.subr.mxu0 0.0
    %2493 = vmatpush1.msra.mxu0 0.0
    %2494 = vmatprep.subr.mxu0 0.0
    %2495 = vmatpush1.msra.mxu0 0.0
    %2496 = vmatprep.subr.mxu0 0.0
    %2497 = vmatpush1.msra.mxu0 0.0
    %2498 = vmatprep.subr.mxu0 0.0
    %2499 = vmatpush1.msra.mxu0 0.0
    %2500 = vmatprep.subr.mxu0 0.0
    %2501 = vmatpush1.msra.mxu0 0.0
    %2502 = vmatprep.subr.mxu0 0.0
    %2503 = vmatpush1.msra.mxu0 0.0
    %2504 = vmatprep.subr.mxu0 0.0
    %2505 = vmatpush1.msra.mxu0 0.0
    %2506 = vmatprep.subr.mxu0 0.0
    %2507 = vmatpush1.msra.mxu0 0.0
    %2508 = vmatprep.subr.mxu0 0.0
    %2509 = vmatpush1.msra.mxu0 0.0
    %2510 = vmatprep.subr.mxu0 0.0
    %2511 = vmatpush1.msra.mxu0 0.0
    %2512 = vmatprep.subr.mxu0 0.0
    %2513 = vmatpush1.msra.mxu0 0.0
    %2514 = vmatprep.subr.mxu0 0.0
    %2515 = vmatpush1.msra.mxu0 0.0
    %2516 = vmatprep.subr.mxu0 0.0
    %2517 = vmatpush1.msra.mxu0 0.0
    %2518 = vmatprep.subr.mxu0 0.0
    %2519 = vmatpush1.msra.mxu0 0.0
    %2520 = vmatprep.subr.mxu0 0.0
    %2521 = vmatpush1.msra.mxu0 0.0
    %2522 = vmatprep.subr.mxu0 0.0
    %2523 = vmatpush1.msra.mxu0 0.0
    %2524 = vmatprep.subr.mxu0 0.0
    %2525 = vmatpush1.msra.mxu0 0.0
    %2526 = vmatprep.subr.mxu0 0.0
    %2527 = vmatpush1.msra.mxu0 0.0
    %2528 = vmatprep.subr.mxu0 0.0
    %2529 = vmatpush1.msra.mxu0 0.0
    %2530 = vmatprep.subr.mxu0 0.0
    %2531 = vmatpush1.msra.mxu0 0.0
    %2532 = vmatprep.subr.mxu0 0.0
    %2533 = vmatpush1.msra.mxu0 0.0
    %2534 = vmatprep.subr.mxu0 0.0
    %2535 = vmatpush1.msra.mxu0 0.0
    %2536 = vmatprep.subr.mxu0 0.0
    %2537 = vmatpush1.msra.mxu0 0.0
    %2538 = vmatprep.mubr.f32.mxu0 0.0
    %2539 = vmatmul.mubr.f32.gmra.mrb[0].mxu0 %v2457
    %v2540 = vpop.f32.mrb[0].mxu0
    %v2541 = vadd.f32 %v2453, %v2540
    %v2542 = vpop.f32.mrb[0].mxu0
    %2543 = vmatprep.mubr.f32.mxu0 0.0
    %2544 = vmatmul.mubr.f32.gmra.mrb[0].mxu0 %v2460
    %v2545 = vpop.f32.mrb[0].mxu0
    %v2546 = vadd.f32 %v2453, %v2545
    %v2547 = vpop.f32.mrb[0].mxu0
    %2548 = vmatprep.mubr.f32.mxu0 0.0
    %2549 = vmatmul.mubr.f32.gmra.mrb[0].mxu0 %v2463
    %v2550 = vpop.f32.mrb[0].mxu0
    %v2551 = vadd.f32 %v2453, %v2550
    %v2552 = vpop.f32.mrb[0].mxu0
    %2553 = vmatprep.mubr.f32.mxu0 0.0
    %2554 = vmatmul.mubr.f32.gmra.mrb[0].mxu0 %v2466
    %v2555 = vpop.f32.mrb[0].mxu0
    %v2556 = vadd.f32 %v2453, %v2555
    %v2557 = vpop.f32.mrb[0].mxu0
    %2558 = vmatprep.mubr.f32.mxu0 0.0
    %2559 = vmatmul.mubr.f32.gmra.mrb[0].mxu0 %v2469
    %v2560 = vpop.f32.mrb[0].mxu0
    %v2561 = vadd.f32 %v2453, %v2560
    %v2562 = vpop.f32.mrb[0].mxu0
    %2563 = vmatprep.mubr.f32.mxu0 0.0
    %2564 = vmatmul.mubr.f32.gmra.mrb[0].mxu0 %v2472
    %v2565 = vpop.f32.mrb[0].mxu0
    %v2566 = vadd.f32 %v2453, %v2565
    %v2567 = vpop.f32.mrb[0].mxu0
    %2568 = vdwg.mxu0
    %v2569 = vmul.f32 %v2541, %v2541
    %v2570 = vmul.f32 %v2546, %v2546
    %v2571 = vmul.f32 %v2551, %v2551
    %v2572 = vmul.f32 %v2556, %v2556
    %v2573 = vmul.f32 %v2561, %v2561
    %v2574 = vmul.f32 %v2566, %v2566
    %v2575 = vmul.f32 %v2541, %v2569
    %v2576 = vmul.f32 %v2546, %v2570
    %v2577 = vmul.f32 %v2551, %v2571
    %v2578 = vmul.f32 %v2556, %v2572
    %v2579 = vmul.f32 %v2561, %v2573
    %v2580 = vmul.f32 %v2566, %v2574
    %v2581 = vmul.f32 %v2575, 0.044715
    %v2582 = vmul.f32 %v2576, 0.044715
    %v2583 = vmul.f32 %v2577, 0.044715
    %v2584 = vmul.f32 %v2578, 0.044715
    %v2585 = vmul.f32 %v2579, 0.044715
    %v2586 = vmul.f32 %v2580, 0.044715
    %v2587 = vadd.f32 %v2541, %v2581
    %v2588 = vadd.f32 %v2546, %v2582
    %v2589 = vadd.f32 %v2551, %v2583
    %v2590 = vadd.f32 %v2556, %v2584
    %v2591 = vadd.f32 %v2561, %v2585
    %v2592 = vadd.f32 %v2566, %v2586
    %v2593 = vmul.f32 %v2587, 0.7978846
    %v2594 = vmul.f32 %v2588, 0.7978846
    %v2595 = vmul.f32 %v2589, 0.7978846
    %v2596 = vmul.f32 %v2590, 0.7978846
    %v2597 = vmul.f32 %v2591, 0.7978846
    %v2598 = vmul.f32 %v2592, 0.7978846
    %v2599 = vtanh.pop %v2593
    %v2600 = vtanh.pop %v2594
    %v2601 = vtanh.pop %v2595
    %v2602 = vtanh.pop %v2596
    %v2603 = vtanh.pop %v2597
    %v2604 = vtanh.pop %v2598
    %v2605 = vadd.f32 %v2599, 1.0
    %v2606 = vadd.f32 %v2600, 1.0
    %v2607 = vadd.f32 %v2601, 1.0
    %v2608 = vadd.f32 %v2602, 1.0
    %v2609 = vadd.f32 %v2603, 1.0
    %v2610 = vadd.f32 %v2604, 1.0
    %v2611 = vmul.f32 %v2605, 0.5
    %v2612 = vmul.f32 %v2606, 0.5
    %v2613 = vmul.f32 %v2607, 0.5
    %v2614 = vmul.f32 %v2608, 0.5
    %v2615 = vmul.f32 %v2609, 0.5
    %v2616 = vmul.f32 %v2610, 0.5
    %v2617 = vmul.f32 %v2541, %v2611
    %v2618 = vmul.f32 %v2546, %v2612
    %v2619 = vmul.f32 %v2551, %v2613
    %v2620 = vmul.f32 %v2556, %v2614
    %v2621 = vmul.f32 %v2561, %v2615
    %v2622 = vmul.f32 %v2566, %v2616
    %v2623 = vadd.f32 %v2152, %v2617
    %v2624 = vadd.f32 %v2153, %v2618
    %v2625 = vadd.f32 %v2154, %v2619
    %v2626 = vadd.f32 %v2155, %v2620
    %v2627 = vadd.f32 %v2156, %v2621
    %v2628 = vadd.f32 %v2157, %v2622
    %v2629 = vld [vmem:[%s43] sm:$0x1]
    %v2630 = vld [vmem:[%s45] sm:$0x1]
    %v2631 = vsel %vm292, %v2623, 0.0
    %2632 = vadd.xlane.f32.xlu0 %v2631
    %v2633 = vpop.xlane.xlu0 %2632
    %v2634 = vsel %vm292, %v2624, 0.0
    %2635 = vadd.xlane.f32.xlu0 %v2634
    %v2636 = vpop.xlane.xlu0 %2635
    %v2637 = vsel %vm292, %v2625, 0.0
    %2638 = vadd.xlane.f32.xlu0 %v2637
    %v2639 = vpop.xlane.xlu0 %2638
    %v2640 = vsel %vm292, %v2626, 0.0
    %2641 = vadd.xlane.f32.xlu0 %v2640
    %v2642 = vpop.xlane.xlu0 %2641
    %v2643 = vsel %vm292, %v2627, 0.0
    %2644 = vadd.xlane.f32.xlu0 %v2643
    %v2645 = vpop.xlane.xlu0 %2644
    %v2646 = vsel %vm292, %v2628, 0.0
    %2647 = vadd.xlane.f32.xlu0 %v2646
    %v2648 = vpop.xlane.xlu0 %2647
    %v2649 = vmul.f32 %v2633, %v311
    %v2650 = vmul.f32 %v2636, %v311
    %v2651 = vmul.f32 %v2639, %v311
    %v2652 = vmul.f32 %v2642, %v311
    %v2653 = vmul.f32 %v2645, %v311
    %v2654 = vmul.f32 %v2648, %v311
    %v2655 = vsub.f32 %v2623, %v2649
    %v2656 = vsub.f32 %v2624, %v2650
    %v2657 = vsub.f32 %v2625, %v2651
    %v2658 = vsub.f32 %v2626, %v2652
    %v2659 = vsub.f32 %v2627, %v2653
    %v2660 = vsub.f32 %v2628, %v2654
    %v2661 = vmul.f32 %v2655, %v2655
    %v2662 = vmul.f32 %v2656, %v2656
    %v2663 = vmul.f32 %v2657, %v2657
    %v2664 = vmul.f32 %v2658, %v2658
    %v2665 = vmul.f32 %v2659, %v2659
    %v2666 = vmul.f32 %v2660, %v2660
    %v2667 = vsel %vm292, %v2661, 0.0
    %2668 = vadd.xlane.f32.xlu0 %v2667
    %v2669 = vpop.xlane.xlu0 %2668
    %v2670 = vsel %vm292, %v2662, 0.0
    %2671 = vadd.xlane.f32.xlu0 %v2670
    %v2672 = vpop.xlane.xlu0 %2671
    %v2673 = vsel %vm292, %v2663, 0.0
    %2674 = vadd.xlane.f32.xlu0 %v2673
    %v2675 = vpop.xlane.xlu0 %2674
    %v2676 = vsel %vm292, %v2664, 0.0
    %2677 = vadd.xlane.f32.xlu0 %v2676
    %v2678 = vpop.xlane.xlu0 %2677
    %v2679 = vsel %vm292, %v2665, 0.0
    %2680 = vadd.xlane.f32.xlu0 %v2679
    %v2681 = vpop.xlane.xlu0 %2680
    %v2682 = vsel %vm292, %v2666, 0.0
    %2683 = vadd.xlane.f32.xlu0 %v2682
    %v2684 = vpop.xlane.xlu0 %2683
    %v2685 = vmul.f32 %v2669, %v311
    %v2686 = vmul.f32 %v2672, %v311
    %v2687 = vmul.f32 %v2675, %v311
    %v2688 = vmul.f32 %v2678, %v311
    %v2689 = vmul.f32 %v2681, %v311
    %v2690 = vmul.f32 %v2684, %v311
    %v2691 = vadd.f32 %v2685, 1e-05
    %v2692 = vadd.f32 %v2686, 1e-05
    %v2693 = vadd.f32 %v2687, 1e-05
    %v2694 = vadd.f32 %v2688, 1e-05
    %v2695 = vadd.f32 %v2689, 1e-05
    %v2696 = vadd.f32 %v2690, 1e-05
    %v2697 = vrsqrt.pop %v2691
    %v2698 = vrsqrt.pop %v2692
    %v2699 = vrsqrt.pop %v2693
    %v2700 = vrsqrt.pop %v2694
    %v2701 = vrsqrt.pop %v2695
    %v2702 = vrsqrt.pop %v2696
    %v2703 = vmul.f32 %v2655, %v2697
    %v2704 = vmul.f32 %v2656, %v2698
    %v2705 = vmul.f32 %v2657, %v2699
    %v2706 = vmul.f32 %v2658, %v2700
    %v2707 = vmul.f32 %v2659, %v2701
    %v2708 = vmul.f32 %v2660, %v2702
    %v2710 = vlaneseq
    %v2711 = vshrl.u32 %v2710, 7
    %v2712 = vsub.s32 0, %v2711
    %v2713 = vrot.slane %v2629, %v2712
    %v2715 = vmul.f32 %v2703, %v2713
    %v2716 = vmul.f32 %v2704, %v2713
    %v2717 = vmul.f32 %v2705, %v2713
    %v2718 = vmul.f32 %v2706, %v2713
    %v2719 = vmul.f32 %v2707, %v2713
    %v2720 = vmul.f32 %v2708, %v2713
    %v2722 = vlaneseq
    %v2723 = vshrl.u32 %v2722, 7
    %v2724 = vsub.s32 0, %v2723
    %v2725 = vrot.slane %v2630, %v2724
    %v2727 = vadd.f32 %v2715, %v2725
    %v2728 = vadd.f32 %v2716, %v2725
    %v2729 = vadd.f32 %v2717, %v2725
    %v2730 = vadd.f32 %v2718, %v2725
    %v2731 = vadd.f32 %v2719, %v2725
    %v2732 = vadd.f32 %v2720, %v2725
    %v2733 = vld [vmem:[%s47] sm:$0xff]
    %v2734 = vld [vmem:[%s47 + $0x8] sm:$0xff]
    %v2735 = vld [vmem:[%s47 + $0x10] sm:$0xff]
    %v2736 = vld [vmem:[%s47 + $0x18] sm:$0xff]
    %v2737 = vld [vmem:[%s49] sm:$0x1]
    %v2739 = vlaneseq
    %v2740 = vshrl.u32 %v2739, 7
    %v2741 = vsub.s32 0, %v2740
    %v2742 = vrot.slane %v2737, %v2741
    %v2745 = vsel %vm292, %v2727, 0
    %v2748 = vsel %vm292, %v2728, 0
    %v2751 = vsel %vm292, %v2729, 0
    %v2754 = vsel %vm292, %v2730, 0
    %v2757 = vsel %vm292, %v2731, 0
    %v2760 = vsel %vm292, %v2732, 0
    %2762 = vmatprep.subr.mxu0 0.0
    %2763 = vmatpush1.msra.mxu0 %v2733
    %2764 = vmatprep.subr.mxu0 0.0
    %2765 = vmatpush1.msra.mxu0 %v2734
    %2766 = vmatprep.subr.mxu0 0.0
    %2767 = vmatpush1.msra.mxu0 %v2735
    %2768 = vmatprep.subr.mxu0 0.0
    %2769 = vmatpush1.msra.mxu0 %v2736
    %2770 = vmatprep.subr.mxu0 0.0
    %2771 = vmatpush1.msra.mxu0 0.0
    %2772 = vmatprep.subr.mxu0 0.0
    %2773 = vmatpush1.msra.mxu0 0.0
    %2774 = vmatprep.subr.mxu0 0.0
    %2775 = vmatpush1.msra.mxu0 0.0
    %2776 = vmatprep.subr.mxu0 0.0
    %2777 = vmatpush1.msra.mxu0 0.0
    %2778 = vmatprep.subr.mxu0 0.0
    %2779 = vmatpush1.msra.mxu0 0.0
    %2780 = vmatprep.subr.mxu0 0.0
    %2781 = vmatpush1.msra.mxu0 0.0
    %2782 = vmatprep.subr.mxu0 0.0
    %2783 = vmatpush1.msra.mxu0 0.0
    %2784 = vmatprep.subr.mxu0 0.0
    %2785 = vmatpush1.msra.mxu0 0.0
    %2786 = vmatprep.subr.mxu0 0.0
    %2787 = vmatpush1.msra.mxu0 0.0
    %2788 = vmatprep.subr.mxu0 0.0
    %2789 = vmatpush1.msra.mxu0 0.0
    %2790 = vmatprep.subr.mxu0 0.0
    %2791 = vmatpush1.msra.mxu0 0.0
    %2792 = vmatprep.subr.mxu0 0.0
    %2793 = vmatpush1.msra.mxu0 0.0
    %2794 = vmatprep.subr.mxu0 0.0
    %2795 = vmatpush1.msra.mxu0 0.0
    %2796 = vmatprep.subr.mxu0 0.0
    %2797 = vmatpush1.msra.mxu0 0.0
    %2798 = vmatprep.subr.mxu0 0.0
    %2799 = vmatpush1.msra.mxu0 0.0
    %2800 = vmatprep.subr.mxu0 0.0
    %2801 = vmatpush1.msra.mxu0 0.0
    %2802 = vmatprep.subr.mxu0 0.0
    %2803 = vmatpush1.msra.mxu0 0.0
    %2804 = vmatprep.subr.mxu0 0.0
    %2805 = vmatpush1.msra.mxu0 0.0
    %2806 = vmatprep.subr.mxu0 0.0
    %2807 = vmatpush1.msra.mxu0 0.0
    %2808 = vmatprep.subr.mxu0 0.0
    %2809 = vmatpush1.msra.mxu0 0.0
    %2810 = vmatprep.subr.mxu0 0.0
    %2811 = vmatpush1.msra.mxu0 0.0
    %2812 = vmatprep.subr.mxu0 0.0
    %2813 = vmatpush1.msra.mxu0 0.0
    %2814 = vmatprep.subr.mxu0 0.0
    %2815 = vmatpush1.msra.mxu0 0.0
    %2816 = vmatprep.subr.mxu0 0.0
    %2817 = vmatpush1.msra.mxu0 0.0
    %2818 = vmatprep.subr.mxu0 0.0
    %2819 = vmatpush1.msra.mxu0 0.0
    %2820 = vmatprep.subr.mxu0 0.0
    %2821 = vmatpush1.msra.mxu0 0.0
    %2822 = vmatprep.subr.mxu0 0.0
    %2823 = vmatpush1.msra.mxu0 0.0
    %2824 = vmatprep.subr.mxu0 0.0
    %2825 = vmatpush1.msra.mxu0 0.0
    %2826 = vmatprep.mubr.f32.mxu0 0.0
    %2827 = vmatmul.mubr.f32.gmra.mrb[0].mxu0 %v2745
    %v2828 = vpop.f32.mrb[0].mxu0
    %v2829 = vadd.f32 %v2742, %v2828
    %v2830 = vpop.f32.mrb[0].mxu0
    %2831 = vmatprep.mubr.f32.mxu0 0.0
    %2832 = vmatmul.mubr.f32.gmra.mrb[0].mxu0 %v2748
    %v2833 = vpop.f32.mrb[0].mxu0
    %v2834 = vadd.f32 %v2742, %v2833
    %v2835 = vpop.f32.mrb[0].mxu0
    %2836 = vmatprep.mubr.f32.mxu0 0.0
    %2837 = vmatmul.mubr.f32.gmra.mrb[0].mxu0 %v2751
    %v2838 = vpop.f32.mrb[0].mxu0
    %v2839 = vadd.f32 %v2742, %v2838
    %v2840 = vpop.f32.mrb[0].mxu0
    %2841 = vmatprep.mubr.f32.mxu0 0.0
    %2842 = vmatmul.mubr.f32.gmra.mrb[0].mxu0 %v2754
    %v2843 = vpop.f32.mrb[0].mxu0
    %v2844 = vadd.f32 %v2742, %v2843
    %v2845 = vpop.f32.mrb[0].mxu0
    %2846 = vmatprep.mubr.f32.mxu0 0.0
    %2847 = vmatmul.mubr.f32.gmra.mrb[0].mxu0 %v2757
    %v2848 = vpop.f32.mrb[0].mxu0
    %v2849 = vadd.f32 %v2742, %v2848
    %v2850 = vpop.f32.mrb[0].mxu0
    %2851 = vmatprep.mubr.f32.mxu0 0.0
    %2852 = vmatmul.mubr.f32.gmra.mrb[0].mxu0 %v2760
    %v2853 = vpop.f32.mrb[0].mxu0
    %v2854 = vadd.f32 %v2742, %v2853
    %v2855 = vpop.f32.mrb[0].mxu0
    %2856 = vdwg.mxu0
    %2863 = vrot.lane.b32.xlu0 %v2829, 96
    %v2864 = vpop.permute.xlu0 %2863
    %2865 = vrot.lane.b32.xlu0 %v2834, 96
    %v2866 = vpop.permute.xlu0 %2865
    %2867 = vrot.lane.b32.xlu0 %v2839, 96
    %v2868 = vpop.permute.xlu0 %2867
    %2869 = vrot.lane.b32.xlu0 %v2844, 96
    %v2870 = vpop.permute.xlu0 %2869
    %2871 = vrot.lane.b32.xlu0 %v2849, 96
    %v2872 = vpop.permute.xlu0 %2871
    %2873 = vrot.lane.b32.xlu0 %v2854, 96
    %v2874 = vpop.permute.xlu0 %2873
    %v2875 = vsel %vm538, %v2829, 0
    %v2877 = vsel %vm538, %v2834, 0
    %v2879 = vsel %vm538, %v2839, 0
    %v2881 = vsel %vm538, %v2844, 0
    %v2883 = vsel %vm538, %v2849, 0
    %v2885 = vsel %vm538, %v2854, 0
    %v2887 = vsel %vm538, %v2864, 0
    %v2889 = vsel %vm538, %v2866, 0
    %v2891 = vsel %vm538, %v2868, 0
    %v2893 = vsel %vm538, %v2870, 0
    %v2895 = vsel %vm538, %v2872, 0
    %v2897 = vsel %vm538, %v2874, 0
    %2899 = vmatprep.subr.mxu0 0.0
    %2900 = vmatpush1.xpose.msra.mxu0 %v2887
    %2901 = vmatprep.subr.mxu0 0.0
    %2902 = vmatpush1.xpose.msra.mxu0 %v2889
    %2903 = vmatprep.subr.mxu0 0.0
    %2904 = vmatpush1.xpose.msra.mxu0 %v2891
    %2905 = vmatprep.subr.mxu0 0.0
    %2906 = vmatpush1.xpose.msra.mxu0 %v2893
    %2907 = vmatprep.subr.mxu0 0.0
    %2908 = vmatpush1.xpose.msra.mxu0 %v2895
    %2909 = vmatprep.subr.mxu0 0.0
    %2910 = vmatpush1.xpose.msra.mxu0 %v2897
    %2911 = vmatprep.subr.mxu0 0.0
    %2912 = vmatpush1.xpose.msra.mxu0 0.0
    %2913 = vmatprep.subr.mxu0 0.0
    %2914 = vmatpush1.xpose.msra.mxu0 0.0
    %2915 = vmatprep.subr.mxu0 0.0
    %2916 = vmatpush1.xpose.msra.mxu0 0.0
    %2917 = vmatprep.subr.mxu0 0.0
    %2918 = vmatpush1.xpose.msra.mxu0 0.0
    %2919 = vmatprep.subr.mxu0 0.0
    %2920 = vmatpush1.xpose.msra.mxu0 0.0
    %2921 = vmatprep.subr.mxu0 0.0
    %2922 = vmatpush1.xpose.msra.mxu0 0.0
    %2923 = vmatprep.subr.mxu0 0.0
    %2924 = vmatpush1.xpose.msra.mxu0 0.0
    %2925 = vmatprep.subr.mxu0 0.0
    %2926 = vmatpush1.xpose.msra.mxu0 0.0
    %2927 = vmatprep.subr.mxu0 0.0
    %2928 = vmatpush1.xpose.msra.mxu0 0.0
    %2929 = vmatprep.subr.mxu0 0.0
    %2930 = vmatpush1.xpose.msra.mxu0 0.0
    %2931 = vmatprep.subr.mxu0 0.0
    %2932 = vmatpush1.xpose.msra.mxu0 0.0
    %2933 = vmatprep.subr.mxu0 0.0
    %2934 = vmatpush1.xpose.msra.mxu0 0.0
    %2935 = vmatprep.subr.mxu0 0.0
    %2936 = vmatpush1.xpose.msra.mxu0 0.0
    %2937 = vmatprep.subr.mxu0 0.0
    %2938 = vmatpush1.xpose.msra.mxu0 0.0
    %2939 = vmatprep.subr.mxu0 0.0
    %2940 = vmatpush1.xpose.msra.mxu0 0.0
    %2941 = vmatprep.subr.mxu0 0.0
    %2942 = vmatpush1.xpose.msra.mxu0 0.0
    %2943 = vmatprep.subr.mxu0 0.0
    %2944 = vmatpush1.xpose.msra.mxu0 0.0
    %2945 = vmatprep.subr.mxu0 0.0
    %2946 = vmatpush1.xpose.msra.mxu0 0.0
    %2947 = vmatprep.subr.mxu0 0.0
    %2948 = vmatpush1.xpose.msra.mxu0 0.0
    %2949 = vmatprep.subr.mxu0 0.0
    %2950 = vmatpush1.xpose.msra.mxu0 0.0
    %2951 = vmatprep.subr.mxu0 0.0
    %2952 = vmatpush1.xpose.msra.mxu0 0.0
    %2953 = vmatprep.subr.mxu0 0.0
    %2954 = vmatpush1.xpose.msra.mxu0 0.0
    %2955 = vmatprep.subr.mxu0 0.0
    %2956 = vmatpush1.xpose.msra.mxu0 0.0
    %2957 = vmatprep.subr.mxu0 0.0
    %2958 = vmatpush1.xpose.msra.mxu0 0.0
    %2959 = vmatprep.subr.mxu0 0.0
    %2960 = vmatpush1.xpose.msra.mxu0 0.0
    %2961 = vmatprep.subr.mxu0 0.0
    %2962 = vmatpush1.xpose.msra.mxu0 0.0
    %2963 = vmatprep.mubr.f32.mxu0 0.0
    %2964 = vmatmul.mubr.f32.gmra.mrb[0].mxu0 %v2875
    %v2965 = vpop.f32.mrb[0].mxu0
    %v2966 = vadd.f32 0.0, %v2965
    %v2967 = vpop.f32.mrb[0].mxu0
    %2968 = vmatprep.mubr.f32.mxu0 0.0
    %2969 = vmatmul.mubr.f32.gmra.mrb[0].mxu0 %v2877
    %v2970 = vpop.f32.mrb[0].mxu0
    %v2971 = vadd.f32 0.0, %v2970
    %v2972 = vpop.f32.mrb[0].mxu0
    %2973 = vmatprep.mubr.f32.mxu0 0.0
    %2974 = vmatmul.mubr.f32.gmra.mrb[0].mxu0 %v2879
    %v2975 = vpop.f32.mrb[0].mxu0
    %v2976 = vadd.f32 0.0, %v2975
    %v2977 = vpop.f32.mrb[0].mxu0
    %2978 = vmatprep.mubr.f32.mxu0 0.0
    %2979 = vmatmul.mubr.f32.gmra.mrb[0].mxu0 %v2881
    %v2980 = vpop.f32.mrb[0].mxu0
    %v2981 = vadd.f32 0.0, %v2980
    %v2982 = vpop.f32.mrb[0].mxu0
    %2983 = vmatprep.mubr.f32.mxu0 0.0
    %2984 = vmatmul.mubr.f32.gmra.mrb[0].mxu0 %v2883
    %v2985 = vpop.f32.mrb[0].mxu0
    %v2986 = vadd.f32 0.0, %v2985
    %v2987 = vpop.f32.mrb[0].mxu0
    %2988 = vmatprep.mubr.f32.mxu0 0.0
    %2989 = vmatmul.mubr.f32.gmra.mrb[0].mxu0 %v2885
    %v2990 = vpop.f32.mrb[0].mxu0
    %v2991 = vadd.f32 0.0, %v2990
    %v2992 = vpop.f32.mrb[0].mxu0
    %2993 = vdwg.mxu0
    %v2994 = vmul.f32 %v2966, 0.17677669
    %v2995 = vmul.f32 %v2971, 0.17677669
    %v2996 = vmul.f32 %v2976, 0.17677669
    %v2997 = vmul.f32 %v2981, 0.17677669
    %v2998 = vmul.f32 %v2986, 0.17677669
    %v2999 = vmul.f32 %v2991, 0.17677669
    %v3000 = vadd.f32 %v2994, %v284
    %v3001 = vadd.f32 %v2995, %v285
    %v3002 = vadd.f32 %v2996, %v286
    %v3003 = vadd.f32 %v2997, %v287
    %v3004 = vadd.f32 %v2998, %v288
    %v3005 = vadd.f32 %v2999, %v289
    %v3006 = vsel %vm158, %v3000, -inf
    %3007 = vmax.xlane.f32.xlu0 %v3006
    %v3008 = vpop.xlane.xlu0 %3007
    %v3009 = vsel %vm158, %v3001, -inf
    %3010 = vmax.xlane.f32.xlu0 %v3009
    %v3011 = vpop.xlane.xlu0 %3010
    %v3012 = vsel %vm158, %v3002, -inf
    %3013 = vmax.xlane.f32.xlu0 %v3012
    %v3014 = vpop.xlane.xlu0 %3013
    %v3015 = vsel %vm158, %v3003, -inf
    %3016 = vmax.xlane.f32.xlu0 %v3015
    %v3017 = vpop.xlane.xlu0 %3016
    %v3018 = vsel %vm158, %v3004, -inf
    %3019 = vmax.xlane.f32.xlu0 %v3018
    %v3020 = vpop.xlane.xlu0 %3019
    %v3021 = vsel %vm158, %v3005, -inf
    %3022 = vmax.xlane.f32.xlu0 %v3021
    %v3023 = vpop.xlane.xlu0 %3022
    %v3024 = vsub.f32 %v3000, %v3008
    %v3025 = vsub.f32 %v3001, %v3011
    %v3026 = vsub.f32 %v3002, %v3014
    %v3027 = vsub.f32 %v3003, %v3017
    %v3028 = vsub.f32 %v3004, %v3020
    %v3029 = vsub.f32 %v3005, %v3023
    %v3030 = vmul.f32 %v3024, 1.442695
    %v3031 = vpow.pop %v3030
    %v3032 = vmul.f32 %v3025, 1.442695
    %v3033 = vpow.pop %v3032
    %v3034 = vmul.f32 %v3026, 1.442695
    %v3035 = vpow.pop %v3034
    %v3036 = vmul.f32 %v3027, 1.442695
    %v3037 = vpow.pop %v3036
    %v3038 = vmul.f32 %v3028, 1.442695
    %v3039 = vpow.pop %v3038
    %v3040 = vmul.f32 %v3029, 1.442695
    %v3041 = vpow.pop %v3040
    %v3042 = vsel %vm158, %v3031, 0.0
    %3043 = vadd.xlane.f32.xlu0 %v3042
    %v3044 = vpop.xlane.xlu0 %3043
    %v3045 = vsel %vm158, %v3033, 0.0
    %3046 = vadd.xlane.f32.xlu0 %v3045
    %v3047 = vpop.xlane.xlu0 %3046
    %v3048 = vsel %vm158, %v3035, 0.0
    %3049 = vadd.xlane.f32.xlu0 %v3048
    %v3050 = vpop.xlane.xlu0 %3049
    %v3051 = vsel %vm158, %v3037, 0.0
    %3052 = vadd.xlane.f32.xlu0 %v3051
    %v3053 = vpop.xlane.xlu0 %3052
    %v3054 = vsel %vm158, %v3039, 0.0
    %3055 = vadd.xlane.f32.xlu0 %v3054
    %v3056 = vpop.xlane.xlu0 %3055
    %v3057 = vsel %vm158, %v3041, 0.0
    %3058 = vadd.xlane.f32.xlu0 %v3057
    %v3059 = vpop.xlane.xlu0 %3058
    %v3060 = vrcp.pop %v3044
    %v3061 = vmul.f32 %v3031, %v3060
    %v3062 = vrcp.pop %v3047
    %v3063 = vmul.f32 %v3033, %v3062
    %v3064 = vrcp.pop %v3050
    %v3065 = vmul.f32 %v3035, %v3064
    %v3066 = vrcp.pop %v3053
    %v3067 = vmul.f32 %v3037, %v3066
    %v3068 = vrcp.pop %v3056
    %v3069 = vmul.f32 %v3039, %v3068
    %v3070 = vrcp.pop %v3059
    %v3071 = vmul.f32 %v3041, %v3070
    %3072 = vrot.lane.b32.xlu0 %v2829, 64
    %v3073 = vpop.permute.xlu0 %3072
    %3074 = vrot.lane.b32.xlu0 %v2834, 64
    %v3075 = vpop.permute.xlu0 %3074
    %3076 = vrot.lane.b32.xlu0 %v2839, 64
    %v3077 = vpop.permute.xlu0 %3076
    %3078 = vrot.lane.b32.xlu0 %v2844, 64
    %v3079 = vpop.permute.xlu0 %3078
    %3080 = vrot.lane.b32.xlu0 %v2849, 64
    %v3081 = vpop.permute.xlu0 %3080
    %3082 = vrot.lane.b32.xlu0 %v2854, 64
    %v3083 = vpop.permute.xlu0 %3082
    %v3091 = vsel %vm158, %v3061, 0
    %v3094 = vsel %vm158, %v3063, 0
    %v3097 = vsel %vm158, %v3065, 0
    %v3100 = vsel %vm158, %v3067, 0
    %v3103 = vsel %vm158, %v3069, 0
    %v3106 = vsel %vm158, %v3071, 0
    %3108 = vmatprep.subr.mxu0 0.0
    %3109 = vmatpush1.msra.mxu0 %v3073
    %3110 = vmatprep.subr.mxu0 0.0
    %3111 = vmatpush1.msra.mxu0 %v3075
    %3112 = vmatprep.subr.mxu0 0.0
    %3113 = vmatpush1.msra.mxu0 %v3077
    %3114 = vmatprep.subr.mxu0 0.0
    %3115 = vmatpush1.msra.mxu0 %v3079
    %3116 = vmatprep.subr.mxu0 0.0
    %3117 = vmatpush1.msra.mxu0 %v3081
    %3118 = vmatprep.subr.mxu0 0.0
    %3119 = vmatpush1.msra.mxu0 %v3083
    %3120 = vmatprep.subr.mxu0 0.0
    %3121 = vmatpush1.msra.mxu0 0.0
    %3122 = vmatprep.subr.mxu0 0.0
    %3123 = vmatpush1.msra.mxu0 0.0
    %3124 = vmatprep.subr.mxu0 0.0
    %3125 = vmatpush1.msra.mxu0 0.0
    %3126 = vmatprep.subr.mxu0 0.0
    %3127 = vmatpush1.msra.mxu0 0.0
    %3128 = vmatprep.subr.mxu0 0.0
    %3129 = vmatpush1.msra.mxu0 0.0
    %3130 = vmatprep.subr.mxu0 0.0
    %3131 = vmatpush1.msra.mxu0 0.0
    %3132 = vmatprep.subr.mxu0 0.0
    %3133 = vmatpush1.msra.mxu0 0.0
    %3134 = vmatprep.subr.mxu0 0.0
    %3135 = vmatpush1.msra.mxu0 0.0
    %3136 = vmatprep.subr.mxu0 0.0
    %3137 = vmatpush1.msra.mxu0 0.0
    %3138 = vmatprep.subr.mxu0 0.0
    %3139 = vmatpush1.msra.mxu0 0.0
    %3140 = vmatprep.subr.mxu0 0.0
    %3141 = vmatpush1.msra.mxu0 0.0
    %3142 = vmatprep.subr.mxu0 0.0
    %3143 = vmatpush1.msra.mxu0 0.0
    %3144 = vmatprep.subr.mxu0 0.0
    %3145 = vmatpush1.msra.mxu0 0.0
    %3146 = vmatprep.subr.mxu0 0.0
    %3147 = vmatpush1.msra.mxu0 0.0
    %3148 = vmatprep.subr.mxu0 0.0
    %3149 = vmatpush1.msra.mxu0 0.0
    %3150 = vmatprep.subr.mxu0 0.0
    %3151 = vmatpush1.msra.mxu0 0.0
    %3152 = vmatprep.subr.mxu0 0.0
    %3153 = vmatpush1.msra.mxu0 0.0
    %3154 = vmatprep.subr.mxu0 0.0
    %3155 = vmatpush1.msra.mxu0 0.0
    %3156 = vmatprep.subr.mxu0 0.0
    %3157 = vmatpush1.msra.mxu0 0.0
    %3158 = vmatprep.subr.mxu0 0.0
    %3159 = vmatpush1.msra.mxu0 0.0
    %3160 = vmatprep.subr.mxu0 0.0
    %3161 = vmatpush1.msra.mxu0 0.0
    %3162 = vmatprep.subr.mxu0 0.0
    %3163 = vmatpush1.msra.mxu0 0.0
    %3164 = vmatprep.subr.mxu0 0.0
    %3165 = vmatpush1.msra.mxu0 0.0
    %3166 = vmatprep.subr.mxu0 0.0
    %3167 = vmatpush1.msra.mxu0 0.0
    %3168 = vmatprep.subr.mxu0 0.0
    %3169 = vmatpush1.msra.mxu0 0.0
    %3170 = vmatprep.subr.mxu0 0.0
    %3171 = vmatpush1.msra.mxu0 0.0
    %3172 = vmatprep.mubr.f32.mxu0 0.0
    %3173 = vmatmul.mubr.f32.gmra.mrb[0].mxu0 %v3091
    %v3174 = vpop.f32.mrb[0].mxu0
    %v3175 = vadd.f32 0.0, %v3174
    %v3176 = vpop.f32.mrb[0].mxu0
    %3177 = vmatprep.mubr.f32.mxu0 0.0
    %3178 = vmatmul.mubr.f32.gmra.mrb[0].mxu0 %v3094
    %v3179 = vpop.f32.mrb[0].mxu0
    %v3180 = vadd.f32 0.0, %v3179
    %v3181 = vpop.f32.mrb[0].mxu0
    %3182 = vmatprep.mubr.f32.mxu0 0.0
    %3183 = vmatmul.mubr.f32.gmra.mrb[0].mxu0 %v3097
    %v3184 = vpop.f32.mrb[0].mxu0
    %v3185 = vadd.f32 0.0, %v3184
    %v3186 = vpop.f32.mrb[0].mxu0
    %3187 = vmatprep.mubr.f32.mxu0 0.0
    %3188 = vmatmul.mubr.f32.gmra.mrb[0].mxu0 %v3100
    %v3189 = vpop.f32.mrb[0].mxu0
    %v3190 = vadd.f32 0.0, %v3189
    %v3191 = vpop.f32.mrb[0].mxu0
    %3192 = vmatprep.mubr.f32.mxu0 0.0
    %3193 = vmatmul.mubr.f32.gmra.mrb[0].mxu0 %v3103
    %v3194 = vpop.f32.mrb[0].mxu0
    %v3195 = vadd.f32 0.0, %v3194
    %v3196 = vpop.f32.mrb[0].mxu0
    %3197 = vmatprep.mubr.f32.mxu0 0.0
    %3198 = vmatmul.mubr.f32.gmra.mrb[0].mxu0 %v3106
    %v3199 = vpop.f32.mrb[0].mxu0
    %v3200 = vadd.f32 0.0, %v3199
    %v3201 = vpop.f32.mrb[0].mxu0
    %3202 = vdwg.mxu0
    %3203 = vst.msk [vmem:[#allocation2] sm:$0xff] %vm538, %v3175
    %3204 = vst.msk [vmem:[#allocation2 + $0x8] sm:$0xff] %vm538, %v3180
    %3205 = vst.msk [vmem:[#allocation2 + $0x10] sm:$0xff] %vm538, %v3185
    %3206 = vst.msk [vmem:[#allocation2 + $0x18] sm:$0xff] %vm538, %v3190
    %3207 = vst.msk [vmem:[#allocation2 + $0x20] sm:$0xff] %vm538, %v3195
    %3208 = vst.msk [vmem:[#allocation2 + $0x28] sm:$0xff] %vm538, %v3200
    %3209 = vrot.lane.b32.xlu0 %v2829, 120
    %v3210 = vpop.permute.xlu0 %3209
    %3211 = vrot.lane.b32.xlu0 %v2834, 120
    %v3212 = vpop.permute.xlu0 %3211
    %3213 = vrot.lane.b32.xlu0 %v2839, 120
    %v3214 = vpop.permute.xlu0 %3213
    %3215 = vrot.lane.b32.xlu0 %v2844, 120
    %v3216 = vpop.permute.xlu0 %3215
    %3217 = vrot.lane.b32.xlu0 %v2849, 120
    %v3218 = vpop.permute.xlu0 %3217
    %3219 = vrot.lane.b32.xlu0 %v2854, 120
    %v3220 = vpop.permute.xlu0 %3219
    %3221 = vrot.lane.b32.xlu0 %v2829, 88
    %v3222 = vpop.permute.xlu0 %3221
    %3223 = vrot.lane.b32.xlu0 %v2834, 88
    %v3224 = vpop.permute.xlu0 %3223
    %3225 = vrot.lane.b32.xlu0 %v2839, 88
    %v3226 = vpop.permute.xlu0 %3225
    %3227 = vrot.lane.b32.xlu0 %v2844, 88
    %v3228 = vpop.permute.xlu0 %3227
    %3229 = vrot.lane.b32.xlu0 %v2849, 88
    %v3230 = vpop.permute.xlu0 %3229
    %3231 = vrot.lane.b32.xlu0 %v2854, 88
    %v3232 = vpop.permute.xlu0 %3231
    %v3233 = vsel %vm538, %v3210, 0
    %v3235 = vsel %vm538, %v3212, 0
    %v3237 = vsel %vm538, %v3214, 0
    %v3239 = vsel %vm538, %v3216, 0
    %v3241 = vsel %vm538, %v3218, 0
    %v3243 = vsel %vm538, %v3220, 0
    %v3245 = vsel %vm538, %v3222, 0
    %v3247 = vsel %vm538, %v3224, 0
    %v3249 = vsel %vm538, %v3226, 0
    %v3251 = vsel %vm538, %v3228, 0
    %v3253 = vsel %vm538, %v3230, 0
    %v3255 = vsel %vm538, %v3232, 0
    %3257 = vmatprep.subr.mxu0 0.0
    %3258 = vmatpush1.xpose.msra.mxu0 %v3245
    %3259 = vmatprep.subr.mxu0 0.0
    %3260 = vmatpush1.xpose.msra.mxu0 %v3247
    %3261 = vmatprep.subr.mxu0 0.0
    %3262 = vmatpush1.xpose.msra.mxu0 %v3249
    %3263 = vmatprep.subr.mxu0 0.0
    %3264 = vmatpush1.xpose.msra.mxu0 %v3251
    %3265 = vmatprep.subr.mxu0 0.0
    %3266 = vmatpush1.xpose.msra.mxu0 %v3253
    %3267 = vmatprep.subr.mxu0 0.0
    %3268 = vmatpush1.xpose.msra.mxu0 %v3255
    %3269 = vmatprep.subr.mxu0 0.0
    %3270 = vmatpush1.xpose.msra.mxu0 0.0
    %3271 = vmatprep.subr.mxu0 0.0
    %3272 = vmatpush1.xpose.msra.mxu0 0.0
    %3273 = vmatprep.subr.mxu0 0.0
    %3274 = vmatpush1.xpose.msra.mxu0 0.0
    %3275 = vmatprep.subr.mxu0 0.0
    %3276 = vmatpush1.xpose.msra.mxu0 0.0
    %3277 = vmatprep.subr.mxu0 0.0
    %3278 = vmatpush1.xpose.msra.mxu0 0.0
    %3279 = vmatprep.subr.mxu0 0.0
    %3280 = vmatpush1.xpose.msra.mxu0 0.0
    %3281 = vmatprep.subr.mxu0 0.0
    %3282 = vmatpush1.xpose.msra.mxu0 0.0
    %3283 = vmatprep.subr.mxu0 0.0
    %3284 = vmatpush1.xpose.msra.mxu0 0.0
    %3285 = vmatprep.subr.mxu0 0.0
    %3286 = vmatpush1.xpose.msra.mxu0 0.0
    %3287 = vmatprep.subr.mxu0 0.0
    %3288 = vmatpush1.xpose.msra.mxu0 0.0
    %3289 = vmatprep.subr.mxu0 0.0
    %3290 = vmatpush1.xpose.msra.mxu0 0.0
    %3291 = vmatprep.subr.mxu0 0.0
    %3292 = vmatpush1.xpose.msra.mxu0 0.0
    %3293 = vmatprep.subr.mxu0 0.0
    %3294 = vmatpush1.xpose.msra.mxu0 0.0
    %3295 = vmatprep.subr.mxu0 0.0
    %3296 = vmatpush1.xpose.msra.mxu0 0.0
    %3297 = vmatprep.subr.mxu0 0.0
    %3298 = vmatpush1.xpose.msra.mxu0 0.0
    %3299 = vmatprep.subr.mxu0 0.0
    %3300 = vmatpush1.xpose.msra.mxu0 0.0
    %3301 = vmatprep.subr.mxu0 0.0
    %3302 = vmatpush1.xpose.msra.mxu0 0.0
    %3303 = vmatprep.subr.mxu0 0.0
    %3304 = vmatpush1.xpose.msra.mxu0 0.0
    %3305 = vmatprep.subr.mxu0 0.0
    %3306 = vmatpush1.xpose.msra.mxu0 0.0
    %3307 = vmatprep.subr.mxu0 0.0
    %3308 = vmatpush1.xpose.msra.mxu0 0.0
    %3309 = vmatprep.subr.mxu0 0.0
    %3310 = vmatpush1.xpose.msra.mxu0 0.0
    %3311 = vmatprep.subr.mxu0 0.0
    %3312 = vmatpush1.xpose.msra.mxu0 0.0
    %3313 = vmatprep.subr.mxu0 0.0
    %3314 = vmatpush1.xpose.msra.mxu0 0.0
    %3315 = vmatprep.subr.mxu0 0.0
    %3316 = vmatpush1.xpose.msra.mxu0 0.0
    %3317 = vmatprep.subr.mxu0 0.0
    %3318 = vmatpush1.xpose.msra.mxu0 0.0
    %3319 = vmatprep.subr.mxu0 0.0
    %3320 = vmatpush1.xpose.msra.mxu0 0.0
    %3321 = vmatprep.mubr.f32.mxu0 0.0
    %3322 = vmatmul.mubr.f32.gmra.mrb[0].mxu0 %v3233
    %v3323 = vpop.f32.mrb[0].mxu0
    %v3324 = vadd.f32 0.0, %v3323
    %v3325 = vpop.f32.mrb[0].mxu0
    %3326 = vmatprep.mubr.f32.mxu0 0.0
    %3327 = vmatmul.mubr.f32.gmra.mrb[0].mxu0 %v3235
    %v3328 = vpop.f32.mrb[0].mxu0
    %v3329 = vadd.f32 0.0, %v3328
    %v3330 = vpop.f32.mrb[0].mxu0
    %3331 = vmatprep.mubr.f32.mxu0 0.0
    %3332 = vmatmul.mubr.f32.gmra.mrb[0].mxu0 %v3237
    %v3333 = vpop.f32.mrb[0].mxu0
    %v3334 = vadd.f32 0.0, %v3333
    %v3335 = vpop.f32.mrb[0].mxu0
    %3336 = vmatprep.mubr.f32.mxu0 0.0
    %3337 = vmatmul.mubr.f32.gmra.mrb[0].mxu0 %v3239
    %v3338 = vpop.f32.mrb[0].mxu0
    %v3339 = vadd.f32 0.0, %v3338
    %v3340 = vpop.f32.mrb[0].mxu0
    %3341 = vmatprep.mubr.f32.mxu0 0.0
    %3342 = vmatmul.mubr.f32.gmra.mrb[0].mxu0 %v3241
    %v3343 = vpop.f32.mrb[0].mxu0
    %v3344 = vadd.f32 0.0, %v3343
    %v3345 = vpop.f32.mrb[0].mxu0
    %3346 = vmatprep.mubr.f32.mxu0 0.0
    %3347 = vmatmul.mubr.f32.gmra.mrb[0].mxu0 %v3243
    %v3348 = vpop.f32.mrb[0].mxu0
    %v3349 = vadd.f32 0.0, %v3348
    %v3350 = vpop.f32.mrb[0].mxu0
    %3351 = vdwg.mxu0
    %v3352 = vmul.f32 %v3324, 0.17677669
    %v3353 = vmul.f32 %v3329, 0.17677669
    %v3354 = vmul.f32 %v3334, 0.17677669
    %v3355 = vmul.f32 %v3339, 0.17677669
    %v3356 = vmul.f32 %v3344, 0.17677669
    %v3357 = vmul.f32 %v3349, 0.17677669
    %v3358 = vadd.f32 %v3352, %v284
    %v3359 = vadd.f32 %v3353, %v285
    %v3360 = vadd.f32 %v3354, %v286
    %v3361 = vadd.f32 %v3355, %v287
    %v3362 = vadd.f32 %v3356, %v288
    %v3363 = vadd.f32 %v3357, %v289
    %v3364 = vsel %vm158, %v3358, -inf
    %3365 = vmax.xlane.f32.xlu0 %v3364
    %v3366 = vpop.xlane.xlu0 %3365
    %v3367 = vsel %vm158, %v3359, -inf
    %3368 = vmax.xlane.f32.xlu0 %v3367
    %v3369 = vpop.xlane.xlu0 %3368
    %v3370 = vsel %vm158, %v3360, -inf
    %3371 = vmax.xlane.f32.xlu0 %v3370
    %v3372 = vpop.xlane.xlu0 %3371
    %v3373 = vsel %vm158, %v3361, -inf
    %3374 = vmax.xlane.f32.xlu0 %v3373
    %v3375 = vpop.xlane.xlu0 %3374
    %v3376 = vsel %vm158, %v3362, -inf
    %3377 = vmax.xlane.f32.xlu0 %v3376
    %v3378 = vpop.xlane.xlu0 %3377
    %v3379 = vsel %vm158, %v3363, -inf
    %3380 = vmax.xlane.f32.xlu0 %v3379
    %v3381 = vpop.xlane.xlu0 %3380
    %v3382 = vsub.f32 %v3358, %v3366
    %v3383 = vsub.f32 %v3359, %v3369
    %v3384 = vsub.f32 %v3360, %v3372
    %v3385 = vsub.f32 %v3361, %v3375
    %v3386 = vsub.f32 %v3362, %v3378
    %v3387 = vsub.f32 %v3363, %v3381
    %v3388 = vmul.f32 %v3382, 1.442695
    %v3389 = vpow.pop %v3388
    %v3390 = vmul.f32 %v3383, 1.442695
    %v3391 = vpow.pop %v3390
    %v3392 = vmul.f32 %v3384, 1.442695
    %v3393 = vpow.pop %v3392
    %v3394 = vmul.f32 %v3385, 1.442695
    %v3395 = vpow.pop %v3394
    %v3396 = vmul.f32 %v3386, 1.442695
    %v3397 = vpow.pop %v3396
    %v3398 = vmul.f32 %v3387, 1.442695
    %v3399 = vpow.pop %v3398
    %v3400 = vsel %vm158, %v3389, 0.0
    %3401 = vadd.xlane.f32.xlu0 %v3400
    %v3402 = vpop.xlane.xlu0 %3401
    %v3403 = vsel %vm158, %v3391, 0.0
    %3404 = vadd.xlane.f32.xlu0 %v3403
    %v3405 = vpop.xlane.xlu0 %3404
    %v3406 = vsel %vm158, %v3393, 0.0
    %3407 = vadd.xlane.f32.xlu0 %v3406
    %v3408 = vpop.xlane.xlu0 %3407
    %v3409 = vsel %vm158, %v3395, 0.0
    %3410 = vadd.xlane.f32.xlu0 %v3409
    %v3411 = vpop.xlane.xlu0 %3410
    %v3412 = vsel %vm158, %v3397, 0.0
    %3413 = vadd.xlane.f32.xlu0 %v3412
    %v3414 = vpop.xlane.xlu0 %3413
    %v3415 = vsel %vm158, %v3399, 0.0
    %3416 = vadd.xlane.f32.xlu0 %v3415
    %v3417 = vpop.xlane.xlu0 %3416
    %v3418 = vrcp.pop %v3402
    %v3419 = vmul.f32 %v3389, %v3418
    %v3420 = vrcp.pop %v3405
    %v3421 = vmul.f32 %v3391, %v3420
    %v3422 = vrcp.pop %v3408
    %v3423 = vmul.f32 %v3393, %v3422
    %v3424 = vrcp.pop %v3411
    %v3425 = vmul.f32 %v3395, %v3424
    %v3426 = vrcp.pop %v3414
    %v3427 = vmul.f32 %v3397, %v3426
    %v3428 = vrcp.pop %v3417
    %v3429 = vmul.f32 %v3399, %v3428
    %3430 = vrot.lane.b32.xlu0 %v2829, 56
    %v3431 = vpop.permute.xlu0 %3430
    %3432 = vrot.lane.b32.xlu0 %v2834, 56
    %v3433 = vpop.permute.xlu0 %3432
    %3434 = vrot.lane.b32.xlu0 %v2839, 56
    %v3435 = vpop.permute.xlu0 %3434
    %3436 = vrot.lane.b32.xlu0 %v2844, 56
    %v3437 = vpop.permute.xlu0 %3436
    %3438 = vrot.lane.b32.xlu0 %v2849, 56
    %v3439 = vpop.permute.xlu0 %3438
    %3440 = vrot.lane.b32.xlu0 %v2854, 56
    %v3441 = vpop.permute.xlu0 %3440
    %v3449 = vsel %vm158, %v3419, 0
    %v3452 = vsel %vm158, %v3421, 0
    %v3455 = vsel %vm158, %v3423, 0
    %v3458 = vsel %vm158, %v3425, 0
    %v3461 = vsel %vm158, %v3427, 0
    %v3464 = vsel %vm158, %v3429, 0
    %3466 = vmatprep.subr.mxu0 0.0
    %3467 = vmatpush1.msra.mxu0 %v3431
    %3468 = vmatprep.subr.mxu0 0.0
    %3469 = vmatpush1.msra.mxu0 %v3433
    %3470 = vmatprep.subr.mxu0 0.0
    %3471 = vmatpush1.msra.mxu0 %v3435
    %3472 = vmatprep.subr.mxu0 0.0
    %3473 = vmatpush1.msra.mxu0 %v3437
    %3474 = vmatprep.subr.mxu0 0.0
    %3475 = vmatpush1.msra.mxu0 %v3439
    %3476 = vmatprep.subr.mxu0 0.0
    %3477 = vmatpush1.msra.mxu0 %v3441
    %3478 = vmatprep.subr.mxu0 0.0
    %3479 = vmatpush1.msra.mxu0 0.0
    %3480 = vmatprep.subr.mxu0 0.0
    %3481 = vmatpush1.msra.mxu0 0.0
    %3482 = vmatprep.subr.mxu0 0.0
    %3483 = vmatpush1.msra.mxu0 0.0
    %3484 = vmatprep.subr.mxu0 0.0
    %3485 = vmatpush1.msra.mxu0 0.0
    %3486 = vmatprep.subr.mxu0 0.0
    %3487 = vmatpush1.msra.mxu0 0.0
    %3488 = vmatprep.subr.mxu0 0.0
    %3489 = vmatpush1.msra.mxu0 0.0
    %3490 = vmatprep.subr.mxu0 0.0
    %3491 = vmatpush1.msra.mxu0 0.0
    %3492 = vmatprep.subr.mxu0 0.0
    %3493 = vmatpush1.msra.mxu0 0.0
    %3494 = vmatprep.subr.mxu0 0.0
    %3495 = vmatpush1.msra.mxu0 0.0
    %3496 = vmatprep.subr.mxu0 0.0
    %3497 = vmatpush1.msra.mxu0 0.0
    %3498 = vmatprep.subr.mxu0 0.0
    %3499 = vmatpush1.msra.mxu0 0.0
    %3500 = vmatprep.subr.mxu0 0.0
    %3501 = vmatpush1.msra.mxu0 0.0
    %3502 = vmatprep.subr.mxu0 0.0
    %3503 = vmatpush1.msra.mxu0 0.0
    %3504 = vmatprep.subr.mxu0 0.0
    %3505 = vmatpush1.msra.mxu0 0.0
    %3506 = vmatprep.subr.mxu0 0.0
    %3507 = vmatpush1.msra.mxu0 0.0
    %3508 = vmatprep.subr.mxu0 0.0
    %3509 = vmatpush1.msra.mxu0 0.0
    %3510 = vmatprep.subr.mxu0 0.0
    %3511 = vmatpush1.msra.mxu0 0.0
    %3512 = vmatprep.subr.mxu0 0.0
    %3513 = vmatpush1.msra.mxu0 0.0
    %3514 = vmatprep.subr.mxu0 0.0
    %3515 = vmatpush1.msra.mxu0 0.0
    %3516 = vmatprep.subr.mxu0 0.0
    %3517 = vmatpush1.msra.mxu0 0.0
    %3518 = vmatprep.subr.mxu0 0.0
    %3519 = vmatpush1.msra.mxu0 0.0
    %3520 = vmatprep.subr.mxu0 0.0
    %3521 = vmatpush1.msra.mxu0 0.0
    %3522 = vmatprep.subr.mxu0 0.0
    %3523 = vmatpush1.msra.mxu0 0.0
    %3524 = vmatprep.subr.mxu0 0.0
    %3525 = vmatpush1.msra.mxu0 0.0
    %3526 = vmatprep.subr.mxu0 0.0
    %3527 = vmatpush1.msra.mxu0 0.0
    %3528 = vmatprep.subr.mxu0 0.0
    %3529 = vmatpush1.msra.mxu0 0.0
    %3530 = vmatprep.mubr.f32.mxu0 0.0
    %3531 = vmatmul.mubr.f32.gmra.mrb[0].mxu0 %v3449
    %v3532 = vpop.f32.mrb[0].mxu0
    %v3533 = vadd.f32 0.0, %v3532
    %v3534 = vpop.f32.mrb[0].mxu0
    %3535 = vmatprep.mubr.f32.mxu0 0.0
    %3536 = vmatmul.mubr.f32.gmra.mrb[0].mxu0 %v3452
    %v3537 = vpop.f32.mrb[0].mxu0
    %v3538 = vadd.f32 0.0, %v3537
    %v3539 = vpop.f32.mrb[0].mxu0
    %3540 = vmatprep.mubr.f32.mxu0 0.0
    %3541 = vmatmul.mubr.f32.gmra.mrb[0].mxu0 %v3455
    %v3542 = vpop.f32.mrb[0].mxu0
    %v3543 = vadd.f32 0.0, %v3542
    %v3544 = vpop.f32.mrb[0].mxu0
    %3545 = vmatprep.mubr.f32.mxu0 0.0
    %3546 = vmatmul.mubr.f32.gmra.mrb[0].mxu0 %v3458
    %v3547 = vpop.f32.mrb[0].mxu0
    %v3548 = vadd.f32 0.0, %v3547
    %v3549 = vpop.f32.mrb[0].mxu0
    %3550 = vmatprep.mubr.f32.mxu0 0.0
    %3551 = vmatmul.mubr.f32.gmra.mrb[0].mxu0 %v3461
    %v3552 = vpop.f32.mrb[0].mxu0
    %v3553 = vadd.f32 0.0, %v3552
    %v3554 = vpop.f32.mrb[0].mxu0
    %3555 = vmatprep.mubr.f32.mxu0 0.0
    %3556 = vmatmul.mubr.f32.gmra.mrb[0].mxu0 %v3464
    %v3557 = vpop.f32.mrb[0].mxu0
    %v3558 = vadd.f32 0.0, %v3557
    %v3559 = vpop.f32.mrb[0].mxu0
    %3560 = vdwg.mxu0
    %3567 = vrot.lane.b32.xlu0 %v3533, 8
    %v3568 = vpop.permute.xlu0 %3567
    %3569 = vrot.lane.b32.xlu0 %v3538, 8
    %v3570 = vpop.permute.xlu0 %3569
    %3571 = vrot.lane.b32.xlu0 %v3543, 8
    %v3572 = vpop.permute.xlu0 %3571
    %3573 = vrot.lane.b32.xlu0 %v3548, 8
    %v3574 = vpop.permute.xlu0 %3573
    %3575 = vrot.lane.b32.xlu0 %v3553, 8
    %v3576 = vpop.permute.xlu0 %3575
    %3577 = vrot.lane.b32.xlu0 %v3558, 8
    %v3578 = vpop.permute.xlu0 %3577
    %3585 = vst.msk [vmem:[#allocation2] sm:$0xff] %vm1249, %v3568
    %3586 = vst.msk [vmem:[#allocation2 + $0x8] sm:$0xff] %vm1249, %v3570
    %3587 = vst.msk [vmem:[#allocation2 + $0x10] sm:$0xff] %vm1249, %v3572
    %3588 = vst.msk [vmem:[#allocation2 + $0x18] sm:$0xff] %vm1249, %v3574
    %3589 = vst.msk [vmem:[#allocation2 + $0x20] sm:$0xff] %vm1249, %v3576
    %3590 = vst.msk [vmem:[#allocation2 + $0x28] sm:$0xff] %vm1249, %v3578
    %3591 = vrot.lane.b32.xlu0 %v2829, 112
    %v3592 = vpop.permute.xlu0 %3591
    %3593 = vrot.lane.b32.xlu0 %v2834, 112
    %v3594 = vpop.permute.xlu0 %3593
    %3595 = vrot.lane.b32.xlu0 %v2839, 112
    %v3596 = vpop.permute.xlu0 %3595
    %3597 = vrot.lane.b32.xlu0 %v2844, 112
    %v3598 = vpop.permute.xlu0 %3597
    %3599 = vrot.lane.b32.xlu0 %v2849, 112
    %v3600 = vpop.permute.xlu0 %3599
    %3601 = vrot.lane.b32.xlu0 %v2854, 112
    %v3602 = vpop.permute.xlu0 %3601
    %3603 = vrot.lane.b32.xlu0 %v2829, 80
    %v3604 = vpop.permute.xlu0 %3603
    %3605 = vrot.lane.b32.xlu0 %v2834, 80
    %v3606 = vpop.permute.xlu0 %3605
    %3607 = vrot.lane.b32.xlu0 %v2839, 80
    %v3608 = vpop.permute.xlu0 %3607
    %3609 = vrot.lane.b32.xlu0 %v2844, 80
    %v3610 = vpop.permute.xlu0 %3609
    %3611 = vrot.lane.b32.xlu0 %v2849, 80
    %v3612 = vpop.permute.xlu0 %3611
    %3613 = vrot.lane.b32.xlu0 %v2854, 80
    %v3614 = vpop.permute.xlu0 %3613
    %v3615 = vsel %vm538, %v3592, 0
    %v3617 = vsel %vm538, %v3594, 0
    %v3619 = vsel %vm538, %v3596, 0
    %v3621 = vsel %vm538, %v3598, 0
    %v3623 = vsel %vm538, %v3600, 0
    %v3625 = vsel %vm538, %v3602, 0
    %v3627 = vsel %vm538, %v3604, 0
    %v3629 = vsel %vm538, %v3606, 0
    %v3631 = vsel %vm538, %v3608, 0
    %v3633 = vsel %vm538, %v3610, 0
    %v3635 = vsel %vm538, %v3612, 0
    %v3637 = vsel %vm538, %v3614, 0
    %3639 = vmatprep.subr.mxu0 0.0
    %3640 = vmatpush1.xpose.msra.mxu0 %v3627
    %3641 = vmatprep.subr.mxu0 0.0
    %3642 = vmatpush1.xpose.msra.mxu0 %v3629
    %3643 = vmatprep.subr.mxu0 0.0
    %3644 = vmatpush1.xpose.msra.mxu0 %v3631
    %3645 = vmatprep.subr.mxu0 0.0
    %3646 = vmatpush1.xpose.msra.mxu0 %v3633
    %3647 = vmatprep.subr.mxu0 0.0
    %3648 = vmatpush1.xpose.msra.mxu0 %v3635
    %3649 = vmatprep.subr.mxu0 0.0
    %3650 = vmatpush1.xpose.msra.mxu0 %v3637
    %3651 = vmatprep.subr.mxu0 0.0
    %3652 = vmatpush1.xpose.msra.mxu0 0.0
    %3653 = vmatprep.subr.mxu0 0.0
    %3654 = vmatpush1.xpose.msra.mxu0 0.0
    %3655 = vmatprep.subr.mxu0 0.0
    %3656 = vmatpush1.xpose.msra.mxu0 0.0
    %3657 = vmatprep.subr.mxu0 0.0
    %3658 = vmatpush1.xpose.msra.mxu0 0.0
    %3659 = vmatprep.subr.mxu0 0.0
    %3660 = vmatpush1.xpose.msra.mxu0 0.0
    %3661 = vmatprep.subr.mxu0 0.0
    %3662 = vmatpush1.xpose.msra.mxu0 0.0
    %3663 = vmatprep.subr.mxu0 0.0
    %3664 = vmatpush1.xpose.msra.mxu0 0.0
    %3665 = vmatprep.subr.mxu0 0.0
    %3666 = vmatpush1.xpose.msra.mxu0 0.0
    %3667 = vmatprep.subr.mxu0 0.0
    %3668 = vmatpush1.xpose.msra.mxu0 0.0
    %3669 = vmatprep.subr.mxu0 0.0
    %3670 = vmatpush1.xpose.msra.mxu0 0.0
    %3671 = vmatprep.subr.mxu0 0.0
    %3672 = vmatpush1.xpose.msra.mxu0 0.0
    %3673 = vmatprep.subr.mxu0 0.0
    %3674 = vmatpush1.xpose.msra.mxu0 0.0
    %3675 = vmatprep.subr.mxu0 0.0
    %3676 = vmatpush1.xpose.msra.mxu0 0.0
    %3677 = vmatprep.subr.mxu0 0.0
    %3678 = vmatpush1.xpose.msra.mxu0 0.0
    %3679 = vmatprep.subr.mxu0 0.0
    %3680 = vmatpush1.xpose.msra.mxu0 0.0
    %3681 = vmatprep.subr.mxu0 0.0
    %3682 = vmatpush1.xpose.msra.mxu0 0.0
    %3683 = vmatprep.subr.mxu0 0.0
    %3684 = vmatpush1.xpose.msra.mxu0 0.0
    %3685 = vmatprep.subr.mxu0 0.0
    %3686 = vmatpush1.xpose.msra.mxu0 0.0
    %3687 = vmatprep.subr.mxu0 0.0
    %3688 = vmatpush1.xpose.msra.mxu0 0.0
    %3689 = vmatprep.subr.mxu0 0.0
    %3690 = vmatpush1.xpose.msra.mxu0 0.0
    %3691 = vmatprep.subr.mxu0 0.0
    %3692 = vmatpush1.xpose.msra.mxu0 0.0
    %3693 = vmatprep.subr.mxu0 0.0
    %3694 = vmatpush1.xpose.msra.mxu0 0.0
    %3695 = vmatprep.subr.mxu0 0.0
    %3696 = vmatpush1.xpose.msra.mxu0 0.0
    %3697 = vmatprep.subr.mxu0 0.0
    %3698 = vmatpush1.xpose.msra.mxu0 0.0
    %3699 = vmatprep.subr.mxu0 0.0
    %3700 = vmatpush1.xpose.msra.mxu0 0.0
    %3701 = vmatprep.subr.mxu0 0.0
    %3702 = vmatpush1.xpose.msra.mxu0 0.0
    %3703 = vmatprep.mubr.f32.mxu0 0.0
    %3704 = vmatmul.mubr.f32.gmra.mrb[0].mxu0 %v3615
    %v3705 = vpop.f32.mrb[0].mxu0
    %v3706 = vadd.f32 0.0, %v3705
    %v3707 = vpop.f32.mrb[0].mxu0
    %3708 = vmatprep.mubr.f32.mxu0 0.0
    %3709 = vmatmul.mubr.f32.gmra.mrb[0].mxu0 %v3617
    %v3710 = vpop.f32.mrb[0].mxu0
    %v3711 = vadd.f32 0.0, %v3710
    %v3712 = vpop.f32.mrb[0].mxu0
    %3713 = vmatprep.mubr.f32.mxu0 0.0
    %3714 = vmatmul.mubr.f32.gmra.mrb[0].mxu0 %v3619
    %v3715 = vpop.f32.mrb[0].mxu0
    %v3716 = vadd.f32 0.0, %v3715
    %v3717 = vpop.f32.mrb[0].mxu0
    %3718 = vmatprep.mubr.f32.mxu0 0.0
    %3719 = vmatmul.mubr.f32.gmra.mrb[0].mxu0 %v3621
    %v3720 = vpop.f32.mrb[0].mxu0
    %v3721 = vadd.f32 0.0, %v3720
    %v3722 = vpop.f32.mrb[0].mxu0
    %3723 = vmatprep.mubr.f32.mxu0 0.0
    %3724 = vmatmul.mubr.f32.gmra.mrb[0].mxu0 %v3623
    %v3725 = vpop.f32.mrb[0].mxu0
    %v3726 = vadd.f32 0.0, %v3725
    %v3727 = vpop.f32.mrb[0].mxu0
    %3728 = vmatprep.mubr.f32.mxu0 0.0
    %3729 = vmatmul.mubr.f32.gmra.mrb[0].mxu0 %v3625
    %v3730 = vpop.f32.mrb[0].mxu0
    %v3731 = vadd.f32 0.0, %v3730
    %v3732 = vpop.f32.mrb[0].mxu0
    %3733 = vdwg.mxu0
    %v3734 = vmul.f32 %v3706, 0.17677669
    %v3735 = vmul.f32 %v3711, 0.17677669
    %v3736 = vmul.f32 %v3716, 0.17677669
    %v3737 = vmul.f32 %v3721, 0.17677669
    %v3738 = vmul.f32 %v3726, 0.17677669
    %v3739 = vmul.f32 %v3731, 0.17677669
    %v3740 = vadd.f32 %v3734, %v284
    %v3741 = vadd.f32 %v3735, %v285
    %v3742 = vadd.f32 %v3736, %v286
    %v3743 = vadd.f32 %v3737, %v287
    %v3744 = vadd.f32 %v3738, %v288
    %v3745 = vadd.f32 %v3739, %v289
    %v3746 = vsel %vm158, %v3740, -inf
    %3747 = vmax.xlane.f32.xlu0 %v3746
    %v3748 = vpop.xlane.xlu0 %3747
    %v3749 = vsel %vm158, %v3741, -inf
    %3750 = vmax.xlane.f32.xlu0 %v3749
    %v3751 = vpop.xlane.xlu0 %3750
    %v3752 = vsel %vm158, %v3742, -inf
    %3753 = vmax.xlane.f32.xlu0 %v3752
    %v3754 = vpop.xlane.xlu0 %3753
    %v3755 = vsel %vm158, %v3743, -inf
    %3756 = vmax.xlane.f32.xlu0 %v3755
    %v3757 = vpop.xlane.xlu0 %3756
    %v3758 = vsel %vm158, %v3744, -inf
    %3759 = vmax.xlane.f32.xlu0 %v3758
    %v3760 = vpop.xlane.xlu0 %3759
    %v3761 = vsel %vm158, %v3745, -inf
    %3762 = vmax.xlane.f32.xlu0 %v3761
    %v3763 = vpop.xlane.xlu0 %3762
    %v3764 = vsub.f32 %v3740, %v3748
    %v3765 = vsub.f32 %v3741, %v3751
    %v3766 = vsub.f32 %v3742, %v3754
    %v3767 = vsub.f32 %v3743, %v3757
    %v3768 = vsub.f32 %v3744, %v3760
    %v3769 = vsub.f32 %v3745, %v3763
    %v3770 = vmul.f32 %v3764, 1.442695
    %v3771 = vpow.pop %v3770
    %v3772 = vmul.f32 %v3765, 1.442695
    %v3773 = vpow.pop %v3772
    %v3774 = vmul.f32 %v3766, 1.442695
    %v3775 = vpow.pop %v3774
    %v3776 = vmul.f32 %v3767, 1.442695
    %v3777 = vpow.pop %v3776
    %v3778 = vmul.f32 %v3768, 1.442695
    %v3779 = vpow.pop %v3778
    %v3780 = vmul.f32 %v3769, 1.442695
    %v3781 = vpow.pop %v3780
    %v3782 = vsel %vm158, %v3771, 0.0
    %3783 = vadd.xlane.f32.xlu0 %v3782
    %v3784 = vpop.xlane.xlu0 %3783
    %v3785 = vsel %vm158, %v3773, 0.0
    %3786 = vadd.xlane.f32.xlu0 %v3785
    %v3787 = vpop.xlane.xlu0 %3786
    %v3788 = vsel %vm158, %v3775, 0.0
    %3789 = vadd.xlane.f32.xlu0 %v3788
    %v3790 = vpop.xlane.xlu0 %3789
    %v3791 = vsel %vm158, %v3777, 0.0
    %3792 = vadd.xlane.f32.xlu0 %v3791
    %v3793 = vpop.xlane.xlu0 %3792
    %v3794 = vsel %vm158, %v3779, 0.0
    %3795 = vadd.xlane.f32.xlu0 %v3794
    %v3796 = vpop.xlane.xlu0 %3795
    %v3797 = vsel %vm158, %v3781, 0.0
    %3798 = vadd.xlane.f32.xlu0 %v3797
    %v3799 = vpop.xlane.xlu0 %3798
    %v3800 = vrcp.pop %v3784
    %v3801 = vmul.f32 %v3771, %v3800
    %v3802 = vrcp.pop %v3787
    %v3803 = vmul.f32 %v3773, %v3802
    %v3804 = vrcp.pop %v3790
    %v3805 = vmul.f32 %v3775, %v3804
    %v3806 = vrcp.pop %v3793
    %v3807 = vmul.f32 %v3777, %v3806
    %v3808 = vrcp.pop %v3796
    %v3809 = vmul.f32 %v3779, %v3808
    %v3810 = vrcp.pop %v3799
    %v3811 = vmul.f32 %v3781, %v3810
    %3812 = vrot.lane.b32.xlu0 %v2829, 48
    %v3813 = vpop.permute.xlu0 %3812
    %3814 = vrot.lane.b32.xlu0 %v2834, 48
    %v3815 = vpop.permute.xlu0 %3814
    %3816 = vrot.lane.b32.xlu0 %v2839, 48
    %v3817 = vpop.permute.xlu0 %3816
    %3818 = vrot.lane.b32.xlu0 %v2844, 48
    %v3819 = vpop.permute.xlu0 %3818
    %3820 = vrot.lane.b32.xlu0 %v2849, 48
    %v3821 = vpop.permute.xlu0 %3820
    %3822 = vrot.lane.b32.xlu0 %v2854, 48
    %v3823 = vpop.permute.xlu0 %3822
    %v3831 = vsel %vm158, %v3801, 0
    %v3834 = vsel %vm158, %v3803, 0
    %v3837 = vsel %vm158, %v3805, 0
    %v3840 = vsel %vm158, %v3807, 0
    %v3843 = vsel %vm158, %v3809, 0
    %v3846 = vsel %vm158, %v3811, 0
    %3848 = vmatprep.subr.mxu0 0.0
    %3849 = vmatpush1.msra.mxu0 %v3813
    %3850 = vmatprep.subr.mxu0 0.0
    %3851 = vmatpush1.msra.mxu0 %v3815
    %3852 = vmatprep.subr.mxu0 0.0
    %3853 = vmatpush1.msra.mxu0 %v3817
    %3854 = vmatprep.subr.mxu0 0.0
    %3855 = vmatpush1.msra.mxu0 %v3819
    %3856 = vmatprep.subr.mxu0 0.0
    %3857 = vmatpush1.msra.mxu0 %v3821
    %3858 = vmatprep.subr.mxu0 0.0
    %3859 = vmatpush1.msra.mxu0 %v3823
    %3860 = vmatprep.subr.mxu0 0.0
    %3861 = vmatpush1.msra.mxu0 0.0
    %3862 = vmatprep.subr.mxu0 0.0
    %3863 = vmatpush1.msra.mxu0 0.0
    %3864 = vmatprep.subr.mxu0 0.0
    %3865 = vmatpush1.msra.mxu0 0.0
    %3866 = vmatprep.subr.mxu0 0.0
    %3867 = vmatpush1.msra.mxu0 0.0
    %3868 = vmatprep.subr.mxu0 0.0
    %3869 = vmatpush1.msra.mxu0 0.0
    %3870 = vmatprep.subr.mxu0 0.0
    %3871 = vmatpush1.msra.mxu0 0.0
    %3872 = vmatprep.subr.mxu0 0.0
    %3873 = vmatpush1.msra.mxu0 0.0
    %3874 = vmatprep.subr.mxu0 0.0
    %3875 = vmatpush1.msra.mxu0 0.0
    %3876 = vmatprep.subr.mxu0 0.0
    %3877 = vmatpush1.msra.mxu0 0.0
    %3878 = vmatprep.subr.mxu0 0.0
    %3879 = vmatpush1.msra.mxu0 0.0
    %3880 = vmatprep.subr.mxu0 0.0
    %3881 = vmatpush1.msra.mxu0 0.0
    %3882 = vmatprep.subr.mxu0 0.0
    %3883 = vmatpush1.msra.mxu0 0.0
    %3884 = vmatprep.subr.mxu0 0.0
    %3885 = vmatpush1.msra.mxu0 0.0
    %3886 = vmatprep.subr.mxu0 0.0
    %3887 = vmatpush1.msra.mxu0 0.0
    %3888 = vmatprep.subr.mxu0 0.0
    %3889 = vmatpush1.msra.mxu0 0.0
    %3890 = vmatprep.subr.mxu0 0.0
    %3891 = vmatpush1.msra.mxu0 0.0
    %3892 = vmatprep.subr.mxu0 0.0
    %3893 = vmatpush1.msra.mxu0 0.0
    %3894 = vmatprep.subr.mxu0 0.0
    %3895 = vmatpush1.msra.mxu0 0.0
    %3896 = vmatprep.subr.mxu0 0.0
    %3897 = vmatpush1.msra.mxu0 0.0
    %3898 = vmatprep.subr.mxu0 0.0
    %3899 = vmatpush1.msra.mxu0 0.0
    %3900 = vmatprep.subr.mxu0 0.0
    %3901 = vmatpush1.msra.mxu0 0.0
    %3902 = vmatprep.subr.mxu0 0.0
    %3903 = vmatpush1.msra.mxu0 0.0
    %3904 = vmatprep.subr.mxu0 0.0
    %3905 = vmatpush1.msra.mxu0 0.0
    %3906 = vmatprep.subr.mxu0 0.0
    %3907 = vmatpush1.msra.mxu0 0.0
    %3908 = vmatprep.subr.mxu0 0.0
    %3909 = vmatpush1.msra.mxu0 0.0
    %3910 = vmatprep.subr.mxu0 0.0
    %3911 = vmatpush1.msra.mxu0 0.0
    %3912 = vmatprep.mubr.f32.mxu0 0.0
    %3913 = vmatmul.mubr.f32.gmra.mrb[0].mxu0 %v3831
    %v3914 = vpop.f32.mrb[0].mxu0
    %v3915 = vadd.f32 0.0, %v3914
    %v3916 = vpop.f32.mrb[0].mxu0
    %3917 = vmatprep.mubr.f32.mxu0 0.0
    %3918 = vmatmul.mubr.f32.gmra.mrb[0].mxu0 %v3834
    %v3919 = vpop.f32.mrb[0].mxu0
    %v3920 = vadd.f32 0.0, %v3919
    %v3921 = vpop.f32.mrb[0].mxu0
    %3922 = vmatprep.mubr.f32.mxu0 0.0
    %3923 = vmatmul.mubr.f32.gmra.mrb[0].mxu0 %v3837
    %v3924 = vpop.f32.mrb[0].mxu0
    %v3925 = vadd.f32 0.0, %v3924
    %v3926 = vpop.f32.mrb[0].mxu0
    %3927 = vmatprep.mubr.f32.mxu0 0.0
    %3928 = vmatmul.mubr.f32.gmra.mrb[0].mxu0 %v3840
    %v3929 = vpop.f32.mrb[0].mxu0
    %v3930 = vadd.f32 0.0, %v3929
    %v3931 = vpop.f32.mrb[0].mxu0
    %3932 = vmatprep.mubr.f32.mxu0 0.0
    %3933 = vmatmul.mubr.f32.gmra.mrb[0].mxu0 %v3843
    %v3934 = vpop.f32.mrb[0].mxu0
    %v3935 = vadd.f32 0.0, %v3934
    %v3936 = vpop.f32.mrb[0].mxu0
    %3937 = vmatprep.mubr.f32.mxu0 0.0
    %3938 = vmatmul.mubr.f32.gmra.mrb[0].mxu0 %v3846
    %v3939 = vpop.f32.mrb[0].mxu0
    %v3940 = vadd.f32 0.0, %v3939
    %v3941 = vpop.f32.mrb[0].mxu0
    %3942 = vdwg.mxu0
    %3949 = vrot.lane.b32.xlu0 %v3915, 16
    %v3950 = vpop.permute.xlu0 %3949
    %3951 = vrot.lane.b32.xlu0 %v3920, 16
    %v3952 = vpop.permute.xlu0 %3951
    %3953 = vrot.lane.b32.xlu0 %v3925, 16
    %v3954 = vpop.permute.xlu0 %3953
    %3955 = vrot.lane.b32.xlu0 %v3930, 16
    %v3956 = vpop.permute.xlu0 %3955
    %3957 = vrot.lane.b32.xlu0 %v3935, 16
    %v3958 = vpop.permute.xlu0 %3957
    %3959 = vrot.lane.b32.xlu0 %v3940, 16
    %v3960 = vpop.permute.xlu0 %3959
    %3967 = vst.msk [vmem:[#allocation2] sm:$0xff] %vm1632, %v3950
    %3968 = vst.msk [vmem:[#allocation2 + $0x8] sm:$0xff] %vm1632, %v3952
    %3969 = vst.msk [vmem:[#allocation2 + $0x10] sm:$0xff] %vm1632, %v3954
    %3970 = vst.msk [vmem:[#allocation2 + $0x18] sm:$0xff] %vm1632, %v3956
    %3971 = vst.msk [vmem:[#allocation2 + $0x20] sm:$0xff] %vm1632, %v3958
    %3972 = vst.msk [vmem:[#allocation2 + $0x28] sm:$0xff] %vm1632, %v3960
    %3973 = vrot.lane.b32.xlu0 %v2829, 104
    %v3974 = vpop.permute.xlu0 %3973
    %3975 = vrot.lane.b32.xlu0 %v2834, 104
    %v3976 = vpop.permute.xlu0 %3975
    %3977 = vrot.lane.b32.xlu0 %v2839, 104
    %v3978 = vpop.permute.xlu0 %3977
    %3979 = vrot.lane.b32.xlu0 %v2844, 104
    %v3980 = vpop.permute.xlu0 %3979
    %3981 = vrot.lane.b32.xlu0 %v2849, 104
    %v3982 = vpop.permute.xlu0 %3981
    %3983 = vrot.lane.b32.xlu0 %v2854, 104
    %v3984 = vpop.permute.xlu0 %3983
    %3985 = vrot.lane.b32.xlu0 %v2829, 72
    %v3986 = vpop.permute.xlu0 %3985
    %3987 = vrot.lane.b32.xlu0 %v2834, 72
    %v3988 = vpop.permute.xlu0 %3987
    %3989 = vrot.lane.b32.xlu0 %v2839, 72
    %v3990 = vpop.permute.xlu0 %3989
    %3991 = vrot.lane.b32.xlu0 %v2844, 72
    %v3992 = vpop.permute.xlu0 %3991
    %3993 = vrot.lane.b32.xlu0 %v2849, 72
    %v3994 = vpop.permute.xlu0 %3993
    %3995 = vrot.lane.b32.xlu0 %v2854, 72
    %v3996 = vpop.permute.xlu0 %3995
    %v3997 = vsel %vm538, %v3974, 0
    %v3999 = vsel %vm538, %v3976, 0
    %v4001 = vsel %vm538, %v3978, 0
    %v4003 = vsel %vm538, %v3980, 0
    %v4005 = vsel %vm538, %v3982, 0
    %v4007 = vsel %vm538, %v3984, 0
    %v4009 = vsel %vm538, %v3986, 0
    %v4011 = vsel %vm538, %v3988, 0
    %v4013 = vsel %vm538, %v3990, 0
    %v4015 = vsel %vm538, %v3992, 0
    %v4017 = vsel %vm538, %v3994, 0
    %v4019 = vsel %vm538, %v3996, 0
    %4021 = vmatprep.subr.mxu0 0.0
    %4022 = vmatpush1.xpose.msra.mxu0 %v4009
    %4023 = vmatprep.subr.mxu0 0.0
    %4024 = vmatpush1.xpose.msra.mxu0 %v4011
    %4025 = vmatprep.subr.mxu0 0.0
    %4026 = vmatpush1.xpose.msra.mxu0 %v4013
    %4027 = vmatprep.subr.mxu0 0.0
    %4028 = vmatpush1.xpose.msra.mxu0 %v4015
    %4029 = vmatprep.subr.mxu0 0.0
    %4030 = vmatpush1.xpose.msra.mxu0 %v4017
    %4031 = vmatprep.subr.mxu0 0.0
    %4032 = vmatpush1.xpose.msra.mxu0 %v4019
    %4033 = vmatprep.subr.mxu0 0.0
    %4034 = vmatpush1.xpose.msra.mxu0 0.0
    %4035 = vmatprep.subr.mxu0 0.0
    %4036 = vmatpush1.xpose.msra.mxu0 0.0
    %4037 = vmatprep.subr.mxu0 0.0
    %4038 = vmatpush1.xpose.msra.mxu0 0.0
    %4039 = vmatprep.subr.mxu0 0.0
    %4040 = vmatpush1.xpose.msra.mxu0 0.0
    %4041 = vmatprep.subr.mxu0 0.0
    %4042 = vmatpush1.xpose.msra.mxu0 0.0
    %4043 = vmatprep.subr.mxu0 0.0
    %4044 = vmatpush1.xpose.msra.mxu0 0.0
    %4045 = vmatprep.subr.mxu0 0.0
    %4046 = vmatpush1.xpose.msra.mxu0 0.0
    %4047 = vmatprep.subr.mxu0 0.0
    %4048 = vmatpush1.xpose.msra.mxu0 0.0
    %4049 = vmatprep.subr.mxu0 0.0
    %4050 = vmatpush1.xpose.msra.mxu0 0.0
    %4051 = vmatprep.subr.mxu0 0.0
    %4052 = vmatpush1.xpose.msra.mxu0 0.0
    %4053 = vmatprep.subr.mxu0 0.0
    %4054 = vmatpush1.xpose.msra.mxu0 0.0
    %4055 = vmatprep.subr.mxu0 0.0
    %4056 = vmatpush1.xpose.msra.mxu0 0.0
    %4057 = vmatprep.subr.mxu0 0.0
    %4058 = vmatpush1.xpose.msra.mxu0 0.0
    %4059 = vmatprep.subr.mxu0 0.0
    %4060 = vmatpush1.xpose.msra.mxu0 0.0
    %4061 = vmatprep.subr.mxu0 0.0
    %4062 = vmatpush1.xpose.msra.mxu0 0.0
    %4063 = vmatprep.subr.mxu0 0.0
    %4064 = vmatpush1.xpose.msra.mxu0 0.0
    %4065 = vmatprep.subr.mxu0 0.0
    %4066 = vmatpush1.xpose.msra.mxu0 0.0
    %4067 = vmatprep.subr.mxu0 0.0
    %4068 = vmatpush1.xpose.msra.mxu0 0.0
    %4069 = vmatprep.subr.mxu0 0.0
    %4070 = vmatpush1.xpose.msra.mxu0 0.0
    %4071 = vmatprep.subr.mxu0 0.0
    %4072 = vmatpush1.xpose.msra.mxu0 0.0
    %4073 = vmatprep.subr.mxu0 0.0
    %4074 = vmatpush1.xpose.msra.mxu0 0.0
    %4075 = vmatprep.subr.mxu0 0.0
    %4076 = vmatpush1.xpose.msra.mxu0 0.0
    %4077 = vmatprep.subr.mxu0 0.0
    %4078 = vmatpush1.xpose.msra.mxu0 0.0
    %4079 = vmatprep.subr.mxu0 0.0
    %4080 = vmatpush1.xpose.msra.mxu0 0.0
    %4081 = vmatprep.subr.mxu0 0.0
    %4082 = vmatpush1.xpose.msra.mxu0 0.0
    %4083 = vmatprep.subr.mxu0 0.0
    %4084 = vmatpush1.xpose.msra.mxu0 0.0
    %4085 = vmatprep.mubr.f32.mxu0 0.0
    %4086 = vmatmul.mubr.f32.gmra.mrb[0].mxu0 %v3997
    %v4087 = vpop.f32.mrb[0].mxu0
    %v4088 = vadd.f32 0.0, %v4087
    %v4089 = vpop.f32.mrb[0].mxu0
    %4090 = vmatprep.mubr.f32.mxu0 0.0
    %4091 = vmatmul.mubr.f32.gmra.mrb[0].mxu0 %v3999
    %v4092 = vpop.f32.mrb[0].mxu0
    %v4093 = vadd.f32 0.0, %v4092
    %v4094 = vpop.f32.mrb[0].mxu0
    %4095 = vmatprep.mubr.f32.mxu0 0.0
    %4096 = vmatmul.mubr.f32.gmra.mrb[0].mxu0 %v4001
    %v4097 = vpop.f32.mrb[0].mxu0
    %v4098 = vadd.f32 0.0, %v4097
    %v4099 = vpop.f32.mrb[0].mxu0
    %4100 = vmatprep.mubr.f32.mxu0 0.0
    %4101 = vmatmul.mubr.f32.gmra.mrb[0].mxu0 %v4003
    %v4102 = vpop.f32.mrb[0].mxu0
    %v4103 = vadd.f32 0.0, %v4102
    %v4104 = vpop.f32.mrb[0].mxu0
    %4105 = vmatprep.mubr.f32.mxu0 0.0
    %4106 = vmatmul.mubr.f32.gmra.mrb[0].mxu0 %v4005
    %v4107 = vpop.f32.mrb[0].mxu0
    %v4108 = vadd.f32 0.0, %v4107
    %v4109 = vpop.f32.mrb[0].mxu0
    %4110 = vmatprep.mubr.f32.mxu0 0.0
    %4111 = vmatmul.mubr.f32.gmra.mrb[0].mxu0 %v4007
    %v4112 = vpop.f32.mrb[0].mxu0
    %v4113 = vadd.f32 0.0, %v4112
    %v4114 = vpop.f32.mrb[0].mxu0
    %4115 = vdwg.mxu0
    %v4116 = vmul.f32 %v4088, 0.17677669
    %v4117 = vmul.f32 %v4093, 0.17677669
    %v4118 = vmul.f32 %v4098, 0.17677669
    %v4119 = vmul.f32 %v4103, 0.17677669
    %v4120 = vmul.f32 %v4108, 0.17677669
    %v4121 = vmul.f32 %v4113, 0.17677669
    %v4122 = vadd.f32 %v4116, %v284
    %v4123 = vadd.f32 %v4117, %v285
    %v4124 = vadd.f32 %v4118, %v286
    %v4125 = vadd.f32 %v4119, %v287
    %v4126 = vadd.f32 %v4120, %v288
    %v4127 = vadd.f32 %v4121, %v289
    %v4128 = vsel %vm158, %v4122, -inf
    %4129 = vmax.xlane.f32.xlu0 %v4128
    %v4130 = vpop.xlane.xlu0 %4129
    %v4131 = vsel %vm158, %v4123, -inf
    %4132 = vmax.xlane.f32.xlu0 %v4131
    %v4133 = vpop.xlane.xlu0 %4132
    %v4134 = vsel %vm158, %v4124, -inf
    %4135 = vmax.xlane.f32.xlu0 %v4134
    %v4136 = vpop.xlane.xlu0 %4135
    %v4137 = vsel %vm158, %v4125, -inf
    %4138 = vmax.xlane.f32.xlu0 %v4137
    %v4139 = vpop.xlane.xlu0 %4138
    %v4140 = vsel %vm158, %v4126, -inf
    %4141 = vmax.xlane.f32.xlu0 %v4140
    %v4142 = vpop.xlane.xlu0 %4141
    %v4143 = vsel %vm158, %v4127, -inf
    %4144 = vmax.xlane.f32.xlu0 %v4143
    %v4145 = vpop.xlane.xlu0 %4144
    %v4146 = vsub.f32 %v4122, %v4130
    %v4147 = vsub.f32 %v4123, %v4133
    %v4148 = vsub.f32 %v4124, %v4136
    %v4149 = vsub.f32 %v4125, %v4139
    %v4150 = vsub.f32 %v4126, %v4142
    %v4151 = vsub.f32 %v4127, %v4145
    %v4152 = vmul.f32 %v4146, 1.442695
    %v4153 = vpow.pop %v4152
    %v4154 = vmul.f32 %v4147, 1.442695
    %v4155 = vpow.pop %v4154
    %v4156 = vmul.f32 %v4148, 1.442695
    %v4157 = vpow.pop %v4156
    %v4158 = vmul.f32 %v4149, 1.442695
    %v4159 = vpow.pop %v4158
    %v4160 = vmul.f32 %v4150, 1.442695
    %v4161 = vpow.pop %v4160
    %v4162 = vmul.f32 %v4151, 1.442695
    %v4163 = vpow.pop %v4162
    %v4164 = vsel %vm158, %v4153, 0.0
    %4165 = vadd.xlane.f32.xlu0 %v4164
    %v4166 = vpop.xlane.xlu0 %4165
    %v4167 = vsel %vm158, %v4155, 0.0
    %4168 = vadd.xlane.f32.xlu0 %v4167
    %v4169 = vpop.xlane.xlu0 %4168
    %v4170 = vsel %vm158, %v4157, 0.0
    %4171 = vadd.xlane.f32.xlu0 %v4170
    %v4172 = vpop.xlane.xlu0 %4171
    %v4173 = vsel %vm158, %v4159, 0.0
    %4174 = vadd.xlane.f32.xlu0 %v4173
    %v4175 = vpop.xlane.xlu0 %4174
    %v4176 = vsel %vm158, %v4161, 0.0
    %4177 = vadd.xlane.f32.xlu0 %v4176
    %v4178 = vpop.xlane.xlu0 %4177
    %v4179 = vsel %vm158, %v4163, 0.0
    %4180 = vadd.xlane.f32.xlu0 %v4179
    %v4181 = vpop.xlane.xlu0 %4180
    %v4182 = vrcp.pop %v4166
    %v4183 = vmul.f32 %v4153, %v4182
    %v4184 = vrcp.pop %v4169
    %v4185 = vmul.f32 %v4155, %v4184
    %v4186 = vrcp.pop %v4172
    %v4187 = vmul.f32 %v4157, %v4186
    %v4188 = vrcp.pop %v4175
    %v4189 = vmul.f32 %v4159, %v4188
    %v4190 = vrcp.pop %v4178
    %v4191 = vmul.f32 %v4161, %v4190
    %v4192 = vrcp.pop %v4181
    %v4193 = vmul.f32 %v4163, %v4192
    %4194 = vrot.lane.b32.xlu0 %v2829, 40
    %v4195 = vpop.permute.xlu0 %4194
    %4196 = vrot.lane.b32.xlu0 %v2834, 40
    %v4197 = vpop.permute.xlu0 %4196
    %4198 = vrot.lane.b32.xlu0 %v2839, 40
    %v4199 = vpop.permute.xlu0 %4198
    %4200 = vrot.lane.b32.xlu0 %v2844, 40
    %v4201 = vpop.permute.xlu0 %4200
    %4202 = vrot.lane.b32.xlu0 %v2849, 40
    %v4203 = vpop.permute.xlu0 %4202
    %4204 = vrot.lane.b32.xlu0 %v2854, 40
    %v4205 = vpop.permute.xlu0 %4204
    %v4213 = vsel %vm158, %v4183, 0
    %v4216 = vsel %vm158, %v4185, 0
    %v4219 = vsel %vm158, %v4187, 0
    %v4222 = vsel %vm158, %v4189, 0
    %v4225 = vsel %vm158, %v4191, 0
    %v4228 = vsel %vm158, %v4193, 0
    %4230 = vmatprep.subr.mxu0 0.0
    %4231 = vmatpush1.msra.mxu0 %v4195
    %4232 = vmatprep.subr.mxu0 0.0
    %4233 = vmatpush1.msra.mxu0 %v4197
    %4234 = vmatprep.subr.mxu0 0.0
    %4235 = vmatpush1.msra.mxu0 %v4199
    %4236 = vmatprep.subr.mxu0 0.0
    %4237 = vmatpush1.msra.mxu0 %v4201
    %4238 = vmatprep.subr.mxu0 0.0
    %4239 = vmatpush1.msra.mxu0 %v4203
    %4240 = vmatprep.subr.mxu0 0.0
    %4241 = vmatpush1.msra.mxu0 %v4205
    %4242 = vmatprep.subr.mxu0 0.0
    %4243 = vmatpush1.msra.mxu0 0.0
    %4244 = vmatprep.subr.mxu0 0.0
    %4245 = vmatpush1.msra.mxu0 0.0
    %4246 = vmatprep.subr.mxu0 0.0
    %4247 = vmatpush1.msra.mxu0 0.0
    %4248 = vmatprep.subr.mxu0 0.0
    %4249 = vmatpush1.msra.mxu0 0.0
    %4250 = vmatprep.subr.mxu0 0.0
    %4251 = vmatpush1.msra.mxu0 0.0
    %4252 = vmatprep.subr.mxu0 0.0
    %4253 = vmatpush1.msra.mxu0 0.0
    %4254 = vmatprep.subr.mxu0 0.0
    %4255 = vmatpush1.msra.mxu0 0.0
    %4256 = vmatprep.subr.mxu0 0.0
    %4257 = vmatpush1.msra.mxu0 0.0
    %4258 = vmatprep.subr.mxu0 0.0
    %4259 = vmatpush1.msra.mxu0 0.0
    %4260 = vmatprep.subr.mxu0 0.0
    %4261 = vmatpush1.msra.mxu0 0.0
    %4262 = vmatprep.subr.mxu0 0.0
    %4263 = vmatpush1.msra.mxu0 0.0
    %4264 = vmatprep.subr.mxu0 0.0
    %4265 = vmatpush1.msra.mxu0 0.0
    %4266 = vmatprep.subr.mxu0 0.0
    %4267 = vmatpush1.msra.mxu0 0.0
    %4268 = vmatprep.subr.mxu0 0.0
    %4269 = vmatpush1.msra.mxu0 0.0
    %4270 = vmatprep.subr.mxu0 0.0
    %4271 = vmatpush1.msra.mxu0 0.0
    %4272 = vmatprep.subr.mxu0 0.0
    %4273 = vmatpush1.msra.mxu0 0.0
    %4274 = vmatprep.subr.mxu0 0.0
    %4275 = vmatpush1.msra.mxu0 0.0
    %4276 = vmatprep.subr.mxu0 0.0
    %4277 = vmatpush1.msra.mxu0 0.0
    %4278 = vmatprep.subr.mxu0 0.0
    %4279 = vmatpush1.msra.mxu0 0.0
    %4280 = vmatprep.subr.mxu0 0.0
    %4281 = vmatpush1.msra.mxu0 0.0
    %4282 = vmatprep.subr.mxu0 0.0
    %4283 = vmatpush1.msra.mxu0 0.0
    %4284 = vmatprep.subr.mxu0 0.0
    %4285 = vmatpush1.msra.mxu0 0.0
    %4286 = vmatprep.subr.mxu0 0.0
    %4287 = vmatpush1.msra.mxu0 0.0
    %4288 = vmatprep.subr.mxu0 0.0
    %4289 = vmatpush1.msra.mxu0 0.0
    %4290 = vmatprep.subr.mxu0 0.0
    %4291 = vmatpush1.msra.mxu0 0.0
    %4292 = vmatprep.subr.mxu0 0.0
    %4293 = vmatpush1.msra.mxu0 0.0
    %4294 = vmatprep.mubr.f32.mxu0 0.0
    %4295 = vmatmul.mubr.f32.gmra.mrb[0].mxu0 %v4213
    %v4296 = vpop.f32.mrb[0].mxu0
    %v4297 = vadd.f32 0.0, %v4296
    %v4298 = vpop.f32.mrb[0].mxu0
    %4299 = vmatprep.mubr.f32.mxu0 0.0
    %4300 = vmatmul.mubr.f32.gmra.mrb[0].mxu0 %v4216
    %v4301 = vpop.f32.mrb[0].mxu0
    %v4302 = vadd.f32 0.0, %v4301
    %v4303 = vpop.f32.mrb[0].mxu0
    %4304 = vmatprep.mubr.f32.mxu0 0.0
    %4305 = vmatmul.mubr.f32.gmra.mrb[0].mxu0 %v4219
    %v4306 = vpop.f32.mrb[0].mxu0
    %v4307 = vadd.f32 0.0, %v4306
    %v4308 = vpop.f32.mrb[0].mxu0
    %4309 = vmatprep.mubr.f32.mxu0 0.0
    %4310 = vmatmul.mubr.f32.gmra.mrb[0].mxu0 %v4222
    %v4311 = vpop.f32.mrb[0].mxu0
    %v4312 = vadd.f32 0.0, %v4311
    %v4313 = vpop.f32.mrb[0].mxu0
    %4314 = vmatprep.mubr.f32.mxu0 0.0
    %4315 = vmatmul.mubr.f32.gmra.mrb[0].mxu0 %v4225
    %v4316 = vpop.f32.mrb[0].mxu0
    %v4317 = vadd.f32 0.0, %v4316
    %v4318 = vpop.f32.mrb[0].mxu0
    %4319 = vmatprep.mubr.f32.mxu0 0.0
    %4320 = vmatmul.mubr.f32.gmra.mrb[0].mxu0 %v4228
    %v4321 = vpop.f32.mrb[0].mxu0
    %v4322 = vadd.f32 0.0, %v4321
    %v4323 = vpop.f32.mrb[0].mxu0
    %4324 = vdwg.mxu0
    %4331 = vrot.lane.b32.xlu0 %v4297, 24
    %v4332 = vpop.permute.xlu0 %4331
    %4333 = vrot.lane.b32.xlu0 %v4302, 24
    %v4334 = vpop.permute.xlu0 %4333
    %4335 = vrot.lane.b32.xlu0 %v4307, 24
    %v4336 = vpop.permute.xlu0 %4335
    %4337 = vrot.lane.b32.xlu0 %v4312, 24
    %v4338 = vpop.permute.xlu0 %4337
    %4339 = vrot.lane.b32.xlu0 %v4317, 24
    %v4340 = vpop.permute.xlu0 %4339
    %4341 = vrot.lane.b32.xlu0 %v4322, 24
    %v4342 = vpop.permute.xlu0 %4341
    %4349 = vst.msk [vmem:[#allocation2] sm:$0xff] %vm2015, %v4332
    %4350 = vst.msk [vmem:[#allocation2 + $0x8] sm:$0xff] %vm2015, %v4334
    %4351 = vst.msk [vmem:[#allocation2 + $0x10] sm:$0xff] %vm2015, %v4336
    %4352 = vst.msk [vmem:[#allocation2 + $0x18] sm:$0xff] %vm2015, %v4338
    %4353 = vst.msk [vmem:[#allocation2 + $0x20] sm:$0xff] %vm2015, %v4340
    %4354 = vst.msk [vmem:[#allocation2 + $0x28] sm:$0xff] %vm2015, %v4342
    %v4355 = vld [vmem:[#allocation2] sm:$0xff]
    %v4356 = vld [vmem:[#allocation2 + $0x8] sm:$0xff]
    %v4357 = vld [vmem:[#allocation2 + $0x10] sm:$0xff]
    %v4358 = vld [vmem:[#allocation2 + $0x18] sm:$0xff]
    %v4359 = vld [vmem:[#allocation2 + $0x20] sm:$0xff]
    %v4360 = vld [vmem:[#allocation2 + $0x28] sm:$0xff]
    %v4361 = vld [vmem:[%s51] sm:$0xff]
    %v4362 = vld [vmem:[%s51 + $0x8] sm:$0xff]
    %v4363 = vld [vmem:[%s51 + $0x10] sm:$0xff]
    %v4364 = vld [vmem:[%s51 + $0x18] sm:$0xff]
    %v4365 = vld [vmem:[%s53] sm:$0x1]
    %v4367 = vlaneseq
    %v4368 = vshrl.u32 %v4367, 7
    %v4369 = vsub.s32 0, %v4368
    %v4370 = vrot.slane %v4365, %v4369
    %v4373 = vsel %vm292, %v4355, 0
    %v4376 = vsel %vm292, %v4356, 0
    %v4379 = vsel %vm292, %v4357, 0
    %v4382 = vsel %vm292, %v4358, 0
    %v4385 = vsel %vm292, %v4359, 0
    %v4388 = vsel %vm292, %v4360, 0
    %4390 = vmatprep.subr.mxu0 0.0
    %4391 = vmatpush1.msra.mxu0 %v4361
    %4392 = vmatprep.subr.mxu0 0.0
    %4393 = vmatpush1.msra.mxu0 %v4362
    %4394 = vmatprep.subr.mxu0 0.0
    %4395 = vmatpush1.msra.mxu0 %v4363
    %4396 = vmatprep.subr.mxu0 0.0
    %4397 = vmatpush1.msra.mxu0 %v4364
    %4398 = vmatprep.subr.mxu0 0.0
    %4399 = vmatpush1.msra.mxu0 0.0
    %4400 = vmatprep.subr.mxu0 0.0
    %4401 = vmatpush1.msra.mxu0 0.0
    %4402 = vmatprep.subr.mxu0 0.0
    %4403 = vmatpush1.msra.mxu0 0.0
    %4404 = vmatprep.subr.mxu0 0.0
    %4405 = vmatpush1.msra.mxu0 0.0
    %4406 = vmatprep.subr.mxu0 0.0
    %4407 = vmatpush1.msra.mxu0 0.0
    %4408 = vmatprep.subr.mxu0 0.0
    %4409 = vmatpush1.msra.mxu0 0.0
    %4410 = vmatprep.subr.mxu0 0.0
    %4411 = vmatpush1.msra.mxu0 0.0
    %4412 = vmatprep.subr.mxu0 0.0
    %4413 = vmatpush1.msra.mxu0 0.0
    %4414 = vmatprep.subr.mxu0 0.0
    %4415 = vmatpush1.msra.mxu0 0.0
    %4416 = vmatprep.subr.mxu0 0.0
    %4417 = vmatpush1.msra.mxu0 0.0
    %4418 = vmatprep.subr.mxu0 0.0
    %4419 = vmatpush1.msra.mxu0 0.0
    %4420 = vmatprep.subr.mxu0 0.0
    %4421 = vmatpush1.msra.mxu0 0.0
    %4422 = vmatprep.subr.mxu0 0.0
    %4423 = vmatpush1.msra.mxu0 0.0
    %4424 = vmatprep.subr.mxu0 0.0
    %4425 = vmatpush1.msra.mxu0 0.0
    %4426 = vmatprep.subr.mxu0 0.0
    %4427 = vmatpush1.msra.mxu0 0.0
    %4428 = vmatprep.subr.mxu0 0.0
    %4429 = vmatpush1.msra.mxu0 0.0
    %4430 = vmatprep.subr.mxu0 0.0
    %4431 = vmatpush1.msra.mxu0 0.0
    %4432 = vmatprep.subr.mxu0 0.0
    %4433 = vmatpush1.msra.mxu0 0.0
    %4434 = vmatprep.subr.mxu0 0.0
    %4435 = vmatpush1.msra.mxu0 0.0
    %4436 = vmatprep.subr.mxu0 0.0
    %4437 = vmatpush1.msra.mxu0 0.0
    %4438 = vmatprep.subr.mxu0 0.0
    %4439 = vmatpush1.msra.mxu0 0.0
    %4440 = vmatprep.subr.mxu0 0.0
    %4441 = vmatpush1.msra.mxu0 0.0
    %4442 = vmatprep.subr.mxu0 0.0
    %4443 = vmatpush1.msra.mxu0 0.0
    %4444 = vmatprep.subr.mxu0 0.0
    %4445 = vmatpush1.msra.mxu0 0.0
    %4446 = vmatprep.subr.mxu0 0.0
    %4447 = vmatpush1.msra.mxu0 0.0
    %4448 = vmatprep.subr.mxu0 0.0
    %4449 = vmatpush1.msra.mxu0 0.0
    %4450 = vmatprep.subr.mxu0 0.0
    %4451 = vmatpush1.msra.mxu0 0.0
    %4452 = vmatprep.subr.mxu0 0.0
    %4453 = vmatpush1.msra.mxu0 0.0
    %4454 = vmatprep.mubr.f32.mxu0 0.0
    %4455 = vmatmul.mubr.f32.gmra.mrb[0].mxu0 %v4373
    %v4456 = vpop.f32.mrb[0].mxu0
    %v4457 = vadd.f32 %v4370, %v4456
    %v4458 = vpop.f32.mrb[0].mxu0
    %4459 = vmatprep.mubr.f32.mxu0 0.0
    %4460 = vmatmul.mubr.f32.gmra.mrb[0].mxu0 %v4376
    %v4461 = vpop.f32.mrb[0].mxu0
    %v4462 = vadd.f32 %v4370, %v4461
    %v4463 = vpop.f32.mrb[0].mxu0
    %4464 = vmatprep.mubr.f32.mxu0 0.0
    %4465 = vmatmul.mubr.f32.gmra.mrb[0].mxu0 %v4379
    %v4466 = vpop.f32.mrb[0].mxu0
    %v4467 = vadd.f32 %v4370, %v4466
    %v4468 = vpop.f32.mrb[0].mxu0
    %4469 = vmatprep.mubr.f32.mxu0 0.0
    %4470 = vmatmul.mubr.f32.gmra.mrb[0].mxu0 %v4382
    %v4471 = vpop.f32.mrb[0].mxu0
    %v4472 = vadd.f32 %v4370, %v4471
    %v4473 = vpop.f32.mrb[0].mxu0
    %4474 = vmatprep.mubr.f32.mxu0 0.0
    %4475 = vmatmul.mubr.f32.gmra.mrb[0].mxu0 %v4385
    %v4476 = vpop.f32.mrb[0].mxu0
    %v4477 = vadd.f32 %v4370, %v4476
    %v4478 = vpop.f32.mrb[0].mxu0
    %4479 = vmatprep.mubr.f32.mxu0 0.0
    %4480 = vmatmul.mubr.f32.gmra.mrb[0].mxu0 %v4388
    %v4481 = vpop.f32.mrb[0].mxu0
    %v4482 = vadd.f32 %v4370, %v4481
    %v4483 = vpop.f32.mrb[0].mxu0
    %4484 = vdwg.mxu0
    %v4485 = vadd.f32 %v2623, %v4457
    %v4486 = vadd.f32 %v2624, %v4462
    %v4487 = vadd.f32 %v2625, %v4467
    %v4488 = vadd.f32 %v2626, %v4472
    %v4489 = vadd.f32 %v2627, %v4477
    %v4490 = vadd.f32 %v2628, %v4482
    %v4491 = vld [vmem:[%s55] sm:$0x1]
    %v4492 = vld [vmem:[%s57] sm:$0x1]
    %v4493 = vsel %vm292, %v4485, 0.0
    %4494 = vadd.xlane.f32.xlu0 %v4493
    %v4495 = vpop.xlane.xlu0 %4494
    %v4496 = vsel %vm292, %v4486, 0.0
    %4497 = vadd.xlane.f32.xlu0 %v4496
    %v4498 = vpop.xlane.xlu0 %4497
    %v4499 = vsel %vm292, %v4487, 0.0
    %4500 = vadd.xlane.f32.xlu0 %v4499
    %v4501 = vpop.xlane.xlu0 %4500
    %v4502 = vsel %vm292, %v4488, 0.0
    %4503 = vadd.xlane.f32.xlu0 %v4502
    %v4504 = vpop.xlane.xlu0 %4503
    %v4505 = vsel %vm292, %v4489, 0.0
    %4506 = vadd.xlane.f32.xlu0 %v4505
    %v4507 = vpop.xlane.xlu0 %4506
    %v4508 = vsel %vm292, %v4490, 0.0
    %4509 = vadd.xlane.f32.xlu0 %v4508
    %v4510 = vpop.xlane.xlu0 %4509
    %v4511 = vmul.f32 %v4495, %v311
    %v4512 = vmul.f32 %v4498, %v311
    %v4513 = vmul.f32 %v4501, %v311
    %v4514 = vmul.f32 %v4504, %v311
    %v4515 = vmul.f32 %v4507, %v311
    %v4516 = vmul.f32 %v4510, %v311
    %v4517 = vsub.f32 %v4485, %v4511
    %v4518 = vsub.f32 %v4486, %v4512
    %v4519 = vsub.f32 %v4487, %v4513
    %v4520 = vsub.f32 %v4488, %v4514
    %v4521 = vsub.f32 %v4489, %v4515
    %v4522 = vsub.f32 %v4490, %v4516
    %v4523 = vmul.f32 %v4517, %v4517
    %v4524 = vmul.f32 %v4518, %v4518
    %v4525 = vmul.f32 %v4519, %v4519
    %v4526 = vmul.f32 %v4520, %v4520
    %v4527 = vmul.f32 %v4521, %v4521
    %v4528 = vmul.f32 %v4522, %v4522
    %v4529 = vsel %vm292, %v4523, 0.0
    %4530 = vadd.xlane.f32.xlu0 %v4529
    %v4531 = vpop.xlane.xlu0 %4530
    %v4532 = vsel %vm292, %v4524, 0.0
    %4533 = vadd.xlane.f32.xlu0 %v4532
    %v4534 = vpop.xlane.xlu0 %4533
    %v4535 = vsel %vm292, %v4525, 0.0
    %4536 = vadd.xlane.f32.xlu0 %v4535
    %v4537 = vpop.xlane.xlu0 %4536
    %v4538 = vsel %vm292, %v4526, 0.0
    %4539 = vadd.xlane.f32.xlu0 %v4538
    %v4540 = vpop.xlane.xlu0 %4539
    %v4541 = vsel %vm292, %v4527, 0.0
    %4542 = vadd.xlane.f32.xlu0 %v4541
    %v4543 = vpop.xlane.xlu0 %4542
    %v4544 = vsel %vm292, %v4528, 0.0
    %4545 = vadd.xlane.f32.xlu0 %v4544
    %v4546 = vpop.xlane.xlu0 %4545
    %v4547 = vmul.f32 %v4531, %v311
    %v4548 = vmul.f32 %v4534, %v311
    %v4549 = vmul.f32 %v4537, %v311
    %v4550 = vmul.f32 %v4540, %v311
    %v4551 = vmul.f32 %v4543, %v311
    %v4552 = vmul.f32 %v4546, %v311
    %v4553 = vadd.f32 %v4547, 1e-05
    %v4554 = vadd.f32 %v4548, 1e-05
    %v4555 = vadd.f32 %v4549, 1e-05
    %v4556 = vadd.f32 %v4550, 1e-05
    %v4557 = vadd.f32 %v4551, 1e-05
    %v4558 = vadd.f32 %v4552, 1e-05
    %v4559 = vrsqrt.pop %v4553
    %v4560 = vrsqrt.pop %v4554
    %v4561 = vrsqrt.pop %v4555
    %v4562 = vrsqrt.pop %v4556
    %v4563 = vrsqrt.pop %v4557
    %v4564 = vrsqrt.pop %v4558
    %v4565 = vmul.f32 %v4517, %v4559
    %v4566 = vmul.f32 %v4518, %v4560
    %v4567 = vmul.f32 %v4519, %v4561
    %v4568 = vmul.f32 %v4520, %v4562
    %v4569 = vmul.f32 %v4521, %v4563
    %v4570 = vmul.f32 %v4522, %v4564
    %v4572 = vlaneseq
    %v4573 = vshrl.u32 %v4572, 7
    %v4574 = vsub.s32 0, %v4573
    %v4575 = vrot.slane %v4491, %v4574
    %v4577 = vmul.f32 %v4565, %v4575
    %v4578 = vmul.f32 %v4566, %v4575
    %v4579 = vmul.f32 %v4567, %v4575
    %v4580 = vmul.f32 %v4568, %v4575
    %v4581 = vmul.f32 %v4569, %v4575
    %v4582 = vmul.f32 %v4570, %v4575
    %v4584 = vlaneseq
    %v4585 = vshrl.u32 %v4584, 7
    %v4586 = vsub.s32 0, %v4585
    %v4587 = vrot.slane %v4492, %v4586
    %v4589 = vadd.f32 %v4577, %v4587
    %v4590 = vadd.f32 %v4578, %v4587
    %v4591 = vadd.f32 %v4579, %v4587
    %v4592 = vadd.f32 %v4580, %v4587
    %v4593 = vadd.f32 %v4581, %v4587
    %v4594 = vadd.f32 %v4582, %v4587
    %v4595 = vld [vmem:[%s59] sm:$0xff]
    %v4596 = vld [vmem:[%s59 + $0x8] sm:$0xff]
    %v4597 = vld [vmem:[%s59 + $0x10] sm:$0xff]
    %v4598 = vld [vmem:[%s59 + $0x18] sm:$0xff]
    %v4599 = vld [vmem:[%s61] sm:$0x1]
    %v4601 = vlaneseq
    %v4602 = vshrl.u32 %v4601, 7
    %v4603 = vsub.s32 0, %v4602
    %v4604 = vrot.slane %v4599, %v4603
    %v4607 = vsel %vm292, %v4589, 0
    %v4610 = vsel %vm292, %v4590, 0
    %v4613 = vsel %vm292, %v4591, 0
    %v4616 = vsel %vm292, %v4592, 0
    %v4619 = vsel %vm292, %v4593, 0
    %v4622 = vsel %vm292, %v4594, 0
    %4624 = vmatprep.subr.mxu0 0.0
    %4625 = vmatpush1.msra.mxu0 %v4595
    %4626 = vmatprep.subr.mxu0 0.0
    %4627 = vmatpush1.msra.mxu0 %v4596
    %4628 = vmatprep.subr.mxu0 0.0
    %4629 = vmatpush1.msra.mxu0 %v4597
    %4630 = vmatprep.subr.mxu0 0.0
    %4631 = vmatpush1.msra.mxu0 %v4598
    %4632 = vmatprep.subr.mxu0 0.0
    %4633 = vmatpush1.msra.mxu0 0.0
    %4634 = vmatprep.subr.mxu0 0.0
    %4635 = vmatpush1.msra.mxu0 0.0
    %4636 = vmatprep.subr.mxu0 0.0
    %4637 = vmatpush1.msra.mxu0 0.0
    %4638 = vmatprep.subr.mxu0 0.0
    %4639 = vmatpush1.msra.mxu0 0.0
    %4640 = vmatprep.subr.mxu0 0.0
    %4641 = vmatpush1.msra.mxu0 0.0
    %4642 = vmatprep.subr.mxu0 0.0
    %4643 = vmatpush1.msra.mxu0 0.0
    %4644 = vmatprep.subr.mxu0 0.0
    %4645 = vmatpush1.msra.mxu0 0.0
    %4646 = vmatprep.subr.mxu0 0.0
    %4647 = vmatpush1.msra.mxu0 0.0
    %4648 = vmatprep.subr.mxu0 0.0
    %4649 = vmatpush1.msra.mxu0 0.0
    %4650 = vmatprep.subr.mxu0 0.0
    %4651 = vmatpush1.msra.mxu0 0.0
    %4652 = vmatprep.subr.mxu0 0.0
    %4653 = vmatpush1.msra.mxu0 0.0
    %4654 = vmatprep.subr.mxu0 0.0
    %4655 = vmatpush1.msra.mxu0 0.0
    %4656 = vmatprep.subr.mxu0 0.0
    %4657 = vmatpush1.msra.mxu0 0.0
    %4658 = vmatprep.subr.mxu0 0.0
    %4659 = vmatpush1.msra.mxu0 0.0
    %4660 = vmatprep.subr.mxu0 0.0
    %4661 = vmatpush1.msra.mxu0 0.0
    %4662 = vmatprep.subr.mxu0 0.0
    %4663 = vmatpush1.msra.mxu0 0.0
    %4664 = vmatprep.subr.mxu0 0.0
    %4665 = vmatpush1.msra.mxu0 0.0
    %4666 = vmatprep.subr.mxu0 0.0
    %4667 = vmatpush1.msra.mxu0 0.0
    %4668 = vmatprep.subr.mxu0 0.0
    %4669 = vmatpush1.msra.mxu0 0.0
    %4670 = vmatprep.subr.mxu0 0.0
    %4671 = vmatpush1.msra.mxu0 0.0
    %4672 = vmatprep.subr.mxu0 0.0
    %4673 = vmatpush1.msra.mxu0 0.0
    %4674 = vmatprep.subr.mxu0 0.0
    %4675 = vmatpush1.msra.mxu0 0.0
    %4676 = vmatprep.subr.mxu0 0.0
    %4677 = vmatpush1.msra.mxu0 0.0
    %4678 = vmatprep.subr.mxu0 0.0
    %4679 = vmatpush1.msra.mxu0 0.0
    %4680 = vmatprep.subr.mxu0 0.0
    %4681 = vmatpush1.msra.mxu0 0.0
    %4682 = vmatprep.subr.mxu0 0.0
    %4683 = vmatpush1.msra.mxu0 0.0
    %4684 = vmatprep.subr.mxu0 0.0
    %4685 = vmatpush1.msra.mxu0 0.0
    %4686 = vmatprep.subr.mxu0 0.0
    %4687 = vmatpush1.msra.mxu0 0.0
    %4688 = vmatprep.mubr.f32.mxu0 0.0
    %4689 = vmatmul.mubr.f32.gmra.mrb[0].mxu0 %v4607
    %v4690 = vpop.f32.mrb[0].mxu0
    %v4691 = vadd.f32 %v4604, %v4690
    %v4692 = vpop.f32.mrb[0].mxu0
    %4693 = vmatprep.mubr.f32.mxu0 0.0
    %4694 = vmatmul.mubr.f32.gmra.mrb[0].mxu0 %v4610
    %v4695 = vpop.f32.mrb[0].mxu0
    %v4696 = vadd.f32 %v4604, %v4695
    %v4697 = vpop.f32.mrb[0].mxu0
    %4698 = vmatprep.mubr.f32.mxu0 0.0
    %4699 = vmatmul.mubr.f32.gmra.mrb[0].mxu0 %v4613
    %v4700 = vpop.f32.mrb[0].mxu0
    %v4701 = vadd.f32 %v4604, %v4700
    %v4702 = vpop.f32.mrb[0].mxu0
    %4703 = vmatprep.mubr.f32.mxu0 0.0
    %4704 = vmatmul.mubr.f32.gmra.mrb[0].mxu0 %v4616
    %v4705 = vpop.f32.mrb[0].mxu0
    %v4706 = vadd.f32 %v4604, %v4705
    %v4707 = vpop.f32.mrb[0].mxu0
    %4708 = vmatprep.mubr.f32.mxu0 0.0
    %4709 = vmatmul.mubr.f32.gmra.mrb[0].mxu0 %v4619
    %v4710 = vpop.f32.mrb[0].mxu0
    %v4711 = vadd.f32 %v4604, %v4710
    %v4712 = vpop.f32.mrb[0].mxu0
    %4713 = vmatprep.mubr.f32.mxu0 0.0
    %4714 = vmatmul.mubr.f32.gmra.mrb[0].mxu0 %v4622
    %v4715 = vpop.f32.mrb[0].mxu0
    %v4716 = vadd.f32 %v4604, %v4715
    %v4717 = vpop.f32.mrb[0].mxu0
    %4718 = vdwg.mxu0
    %v4719 = vmul.f32 %v4691, %v4691
    %v4720 = vmul.f32 %v4696, %v4696
    %v4721 = vmul.f32 %v4701, %v4701
    %v4722 = vmul.f32 %v4706, %v4706
    %v4723 = vmul.f32 %v4711, %v4711
    %v4724 = vmul.f32 %v4716, %v4716
    %v4725 = vmul.f32 %v4691, %v4719
    %v4726 = vmul.f32 %v4696, %v4720
    %v4727 = vmul.f32 %v4701, %v4721
    %v4728 = vmul.f32 %v4706, %v4722
    %v4729 = vmul.f32 %v4711, %v4723
    %v4730 = vmul.f32 %v4716, %v4724
    %v4731 = vmul.f32 %v4725, 0.044715
    %v4732 = vmul.f32 %v4726, 0.044715
    %v4733 = vmul.f32 %v4727, 0.044715
    %v4734 = vmul.f32 %v4728, 0.044715
    %v4735 = vmul.f32 %v4729, 0.044715
    %v4736 = vmul.f32 %v4730, 0.044715
    %v4737 = vadd.f32 %v4691, %v4731
    %v4738 = vadd.f32 %v4696, %v4732
    %v4739 = vadd.f32 %v4701, %v4733
    %v4740 = vadd.f32 %v4706, %v4734
    %v4741 = vadd.f32 %v4711, %v4735
    %v4742 = vadd.f32 %v4716, %v4736
    %v4743 = vmul.f32 %v4737, 0.7978846
    %v4744 = vmul.f32 %v4738, 0.7978846
    %v4745 = vmul.f32 %v4739, 0.7978846
    %v4746 = vmul.f32 %v4740, 0.7978846
    %v4747 = vmul.f32 %v4741, 0.7978846
    %v4748 = vmul.f32 %v4742, 0.7978846
    %v4749 = vtanh.pop %v4743
    %v4750 = vtanh.pop %v4744
    %v4751 = vtanh.pop %v4745
    %v4752 = vtanh.pop %v4746
    %v4753 = vtanh.pop %v4747
    %v4754 = vtanh.pop %v4748
    %v4755 = vadd.f32 %v4749, 1.0
    %v4756 = vadd.f32 %v4750, 1.0
    %v4757 = vadd.f32 %v4751, 1.0
    %v4758 = vadd.f32 %v4752, 1.0
    %v4759 = vadd.f32 %v4753, 1.0
    %v4760 = vadd.f32 %v4754, 1.0
    %v4761 = vmul.f32 %v4755, 0.5
    %v4762 = vmul.f32 %v4756, 0.5
    %v4763 = vmul.f32 %v4757, 0.5
    %v4764 = vmul.f32 %v4758, 0.5
    %v4765 = vmul.f32 %v4759, 0.5
    %v4766 = vmul.f32 %v4760, 0.5
    %v4767 = vmul.f32 %v4691, %v4761
    %v4768 = vmul.f32 %v4696, %v4762
    %v4769 = vmul.f32 %v4701, %v4763
    %v4770 = vmul.f32 %v4706, %v4764
    %v4771 = vmul.f32 %v4711, %v4765
    %v4772 = vmul.f32 %v4716, %v4766
    %v4773 = vld [vmem:[%s63] sm:$0xff]
    %v4774 = vld [vmem:[%s63 + $0x8] sm:$0xff]
    %v4775 = vld [vmem:[%s63 + $0x10] sm:$0xff]
    %v4776 = vld [vmem:[%s63 + $0x18] sm:$0xff]
    %v4777 = vld [vmem:[%s63 + $0x20] sm:$0xff]
    %v4778 = vld [vmem:[%s63 + $0x28] sm:$0xff]
    %v4779 = vld [vmem:[%s63 + $0x30] sm:$0xff]
    %v4780 = vld [vmem:[%s63 + $0x38] sm:$0xff]
    %v4781 = vld [vmem:[%s65] sm:$0x1]
    %v4783 = vlaneseq
    %v4784 = vshrl.u32 %v4783, 7
    %v4785 = vsub.s32 0, %v4784
    %v4786 = vrot.slane %v4781, %v4785
    %v4789 = vsel %vm2455, %v4767, 0
    %v4792 = vsel %vm2455, %v4768, 0
    %v4795 = vsel %vm2455, %v4769, 0
    %v4798 = vsel %vm2455, %v4770, 0
    %v4801 = vsel %vm2455, %v4771, 0
    %v4804 = vsel %vm2455, %v4772, 0
    %4806 = vmatprep.subr.mxu0 0.0
    %4807 = vmatpush1.msra.mxu0 %v4773
    %4808 = vmatprep.subr.mxu0 0.0
    %4809 = vmatpush1.msra.mxu0 %v4774
    %4810 = vmatprep.subr.mxu0 0.0
    %4811 = vmatpush1.msra.mxu0 %v4775
    %4812 = vmatprep.subr.mxu0 0.0
    %4813 = vmatpush1.msra.mxu0 %v4776
    %4814 = vmatprep.subr.mxu0 0.0
    %4815 = vmatpush1.msra.mxu0 %v4777
    %4816 = vmatprep.subr.mxu0 0.0
    %4817 = vmatpush1.msra.mxu0 %v4778
    %4818 = vmatprep.subr.mxu0 0.0
    %4819 = vmatpush1.msra.mxu0 %v4779
    %4820 = vmatprep.subr.mxu0 0.0
    %4821 = vmatpush1.msra.mxu0 %v4780
    %4822 = vmatprep.subr.mxu0 0.0
    %4823 = vmatpush1.msra.mxu0 0.0
    %4824 = vmatprep.subr.mxu0 0.0
    %4825 = vmatpush1.msra.mxu0 0.0
    %4826 = vmatprep.subr.mxu0 0.0
    %4827 = vmatpush1.msra.mxu0 0.0
    %4828 = vmatprep.subr.mxu0 0.0
    %4829 = vmatpush1.msra.mxu0 0.0
    %4830 = vmatprep.subr.mxu0 0.0
    %4831 = vmatpush1.msra.mxu0 0.0
    %4832 = vmatprep.subr.mxu0 0.0
    %4833 = vmatpush1.msra.mxu0 0.0
    %4834 = vmatprep.subr.mxu0 0.0
    %4835 = vmatpush1.msra.mxu0 0.0
    %4836 = vmatprep.subr.mxu0 0.0
    %4837 = vmatpush1.msra.mxu0 0.0
    %4838 = vmatprep.subr.mxu0 0.0
    %4839 = vmatpush1.msra.mxu0 0.0
    %4840 = vmatprep.subr.mxu0 0.0
    %4841 = vmatpush1.msra.mxu0 0.0
    %4842 = vmatprep.subr.mxu0 0.0
    %4843 = vmatpush1.msra.mxu0 0.0
    %4844 = vmatprep.subr.mxu0 0.0
    %4845 = vmatpush1.msra.mxu0 0.0
    %4846 = vmatprep.subr.mxu0 0.0
    %4847 = vmatpush1.msra.mxu0 0.0
    %4848 = vmatprep.subr.mxu0 0.0
    %4849 = vmatpush1.msra.mxu0 0.0
    %4850 = vmatprep.subr.mxu0 0.0
    %4851 = vmatpush1.msra.mxu0 0.0
    %4852 = vmatprep.subr.mxu0 0.0
    %4853 = vmatpush1.msra.mxu0 0.0
    %4854 = vmatprep.subr.mxu0 0.0
    %4855 = vmatpush1.msra.mxu0 0.0
    %4856 = vmatprep.subr.mxu0 0.0
    %4857 = vmatpush1.msra.mxu0 0.0
    %4858 = vmatprep.subr.mxu0 0.0
    %4859 = vmatpush1.msra.mxu0 0.0
    %4860 = vmatprep.subr.mxu0 0.0
    %4861 = vmatpush1.msra.mxu0 0.0
    %4862 = vmatprep.subr.mxu0 0.0
    %4863 = vmatpush1.msra.mxu0 0.0
    %4864 = vmatprep.subr.mxu0 0.0
    %4865 = vmatpush1.msra.mxu0 0.0
    %4866 = vmatprep.subr.mxu0 0.0
    %4867 = vmatpush1.msra.mxu0 0.0
    %4868 = vmatprep.subr.mxu0 0.0
    %4869 = vmatpush1.msra.mxu0 0.0
    %4870 = vmatprep.mubr.f32.mxu0 0.0
    %4871 = vmatmul.mubr.f32.gmra.mrb[0].mxu0 %v4789
    %v4872 = vpop.f32.mrb[0].mxu0
    %v4873 = vadd.f32 %v4786, %v4872
    %v4874 = vpop.f32.mrb[0].mxu0
    %4875 = vmatprep.mubr.f32.mxu0 0.0
    %4876 = vmatmul.mubr.f32.gmra.mrb[0].mxu0 %v4792
    %v4877 = vpop.f32.mrb[0].mxu0
    %v4878 = vpop.f32.mrb[0].mxu0
    %4879 = vmatprep.mubr.f32.mxu0 0.0
    %4880 = vmatmul.mubr.f32.gmra.mrb[0].mxu0 %v4795
    %v4881 = vpop.f32.mrb[0].mxu0
    %v4882 = vpop.f32.mrb[0].mxu0
    %4883 = vmatprep.mubr.f32.mxu0 0.0
    %4884 = vmatmul.mubr.f32.gmra.mrb[0].mxu0 %v4798
    %v4885 = vpop.f32.mrb[0].mxu0
    %v4886 = vadd.f32 %v4786, %v4885
    %v4887 = vpop.f32.mrb[0].mxu0
    %4888 = vmatprep.mubr.f32.mxu0 0.0
    %4889 = vmatmul.mubr.f32.gmra.mrb[0].mxu0 %v4801
    %v4890 = vpop.f32.mrb[0].mxu0
    %v4891 = vpop.f32.mrb[0].mxu0
    %4892 = vmatprep.mubr.f32.mxu0 0.0
    %4893 = vmatmul.mubr.f32.gmra.mrb[0].mxu0 %v4804
    %v4894 = vpop.f32.mrb[0].mxu0
    %v4895 = vpop.f32.mrb[0].mxu0
    %4896 = vdwg.mxu0
    %v4897 = vmul.f32 %v4873, %v4873
    %v4898 = vmul.f32 %v4886, %v4886
    %v4899 = vmul.f32 %v4873, %v4897
    %v4900 = vmul.f32 %v4886, %v4898
    %v4901 = vmul.f32 %v4899, 0.044715
    %v4902 = vmul.f32 %v4900, 0.044715
    %v4903 = vadd.f32 %v4873, %v4901
    %v4904 = vadd.f32 %v4886, %v4902
    %v4905 = vmul.f32 %v4903, 0.7978846
    %v4906 = vmul.f32 %v4904, 0.7978846
    %v4907 = vtanh.pop %v4905
    %v4908 = vtanh.pop %v4906
    %v4909 = vadd.f32 %v4907, 1.0
    %v4910 = vadd.f32 %v4908, 1.0
    %v4911 = vmul.f32 %v4909, 0.5
    %v4912 = vmul.f32 %v4910, 0.5
    %v4913 = vmul.f32 %v4873, %v4911
    %v4914 = vmul.f32 %v4886, %v4912
    %v4915 = vadd.f32 %v4485, %v4913
    %v4916 = vadd.f32 %v4488, %v4914
    %v4918 = vrot.slane %v4916, 7
    %vm4920 = vcmask 1040384
    %v4921 = vsel %vm4920, %v4915, %v4918
    %v4922 = vld [vmem:[%s11] sm:$0x1]
    %v4923 = vld [vmem:[%s13] sm:$0x1]
    %vm4924 = vcmask 254976
    %v4925 = vsel %vm4924, %v4921, 0.0
    %4926 = vadd.xlane.f32.xlu0 %v4925
    %v4927 = vpop.xlane.xlu0 %4926
    %v4928 = vmul.f32 %v4927, %v311
    %v4929 = vsub.f32 %v4921, %v4928
    %v4930 = vmul.f32 %v4929, %v4929
    %v4931 = vsel %vm4924, %v4930, 0.0
    %4932 = vadd.xlane.f32.xlu0 %v4931
    %v4933 = vpop.xlane.xlu0 %4932
    %v4934 = vmul.f32 %v4933, %v311
    %v4935 = vadd.f32 %v4934, 1e-05
    %v4936 = vrsqrt.pop %v4935
    %v4937 = vmul.f32 %v4929, %v4936
    %v4939 = vlaneseq
    %v4940 = vshrl.u32 %v4939, 7
    %v4941 = vsub.s32 0, %v4940
    %v4942 = vrot.slane %v4922, %v4941
    %v4944 = vmul.f32 %v4937, %v4942
    %v4946 = vlaneseq
    %v4947 = vshrl.u32 %v4946, 7
    %v4948 = vsub.s32 0, %v4947
    %v4949 = vrot.slane %v4923, %v4948
    %v4951 = vadd.f32 %v4944, %v4949
    %v4952 = vld [vmem:[%s15] sm:$0xff]
    %v4953 = vld [vmem:[%s15 + $0x8] sm:$0xff]
    %v4954 = vld [vmem:[%s15 + $0x10] sm:$0xff]
    %v4955 = vld [vmem:[%s15 + $0x18] sm:$0xff]
    %v4956 = vld [vmem:[%s17] sm:$0x1]
    %v4958 = vlaneseq
    %v4959 = vshrl.u32 %v4958, 7
    %v4960 = vsub.s32 0, %v4959
    %v4961 = vrot.slane %v4956, %v4960
    %v4964 = vsel %vm292, %v4951, 0
    %4966 = vmatprep.subr.mxu0 0.0
    %4967 = vmatpush1.msra.mxu0 %v4952
    %4968 = vmatprep.subr.mxu0 0.0
    %4969 = vmatpush1.msra.mxu0 %v4953
    %4970 = vmatprep.subr.mxu0 0.0
    %4971 = vmatpush1.msra.mxu0 %v4954
    %4972 = vmatprep.subr.mxu0 0.0
    %4973 = vmatpush1.msra.mxu0 %v4955
    %4974 = vmatprep.subr.mxu0 0.0
    %4975 = vmatpush1.msra.mxu0 0.0
    %4976 = vmatprep.subr.mxu0 0.0
    %4977 = vmatpush1.msra.mxu0 0.0
    %4978 = vmatprep.subr.mxu0 0.0
    %4979 = vmatpush1.msra.mxu0 0.0
    %4980 = vmatprep.subr.mxu0 0.0
    %4981 = vmatpush1.msra.mxu0 0.0
    %4982 = vmatprep.subr.mxu0 0.0
    %4983 = vmatpush1.msra.mxu0 0.0
    %4984 = vmatprep.subr.mxu0 0.0
    %4985 = vmatpush1.msra.mxu0 0.0
    %4986 = vmatprep.subr.mxu0 0.0
    %4987 = vmatpush1.msra.mxu0 0.0
    %4988 = vmatprep.subr.mxu0 0.0
    %4989 = vmatpush1.msra.mxu0 0.0
    %4990 = vmatprep.subr.mxu0 0.0
    %4991 = vmatpush1.msra.mxu0 0.0
    %4992 = vmatprep.subr.mxu0 0.0
    %4993 = vmatpush1.msra.mxu0 0.0
    %4994 = vmatprep.subr.mxu0 0.0
    %4995 = vmatpush1.msra.mxu0 0.0
    %4996 = vmatprep.subr.mxu0 0.0
    %4997 = vmatpush1.msra.mxu0 0.0
    %4998 = vmatprep.subr.mxu0 0.0
    %4999 = vmatpush1.msra.mxu0 0.0
    %5000 = vmatprep.subr.mxu0 0.0
    %5001 = vmatpush1.msra.mxu0 0.0
    %5002 = vmatprep.subr.mxu0 0.0
    %5003 = vmatpush1.msra.mxu0 0.0
    %5004 = vmatprep.subr.mxu0 0.0
    %5005 = vmatpush1.msra.mxu0 0.0
    %5006 = vmatprep.subr.mxu0 0.0
    %5007 = vmatpush1.msra.mxu0 0.0
    %5008 = vmatprep.subr.mxu0 0.0
    %5009 = vmatpush1.msra.mxu0 0.0
    %5010 = vmatprep.subr.mxu0 0.0
    %5011 = vmatpush1.msra.mxu0 0.0
    %5012 = vmatprep.subr.mxu0 0.0
    %5013 = vmatpush1.msra.mxu0 0.0
    %5014 = vmatprep.subr.mxu0 0.0
    %5015 = vmatpush1.msra.mxu0 0.0
    %5016 = vmatprep.subr.mxu0 0.0
    %5017 = vmatpush1.msra.mxu0 0.0
    %5018 = vmatprep.subr.mxu0 0.0
    %5019 = vmatpush1.msra.mxu0 0.0
    %5020 = vmatprep.subr.mxu0 0.0
    %5021 = vmatpush1.msra.mxu0 0.0
    %5022 = vmatprep.subr.mxu0 0.0
    %5023 = vmatpush1.msra.mxu0 0.0
    %5024 = vmatprep.subr.mxu0 0.0
    %5025 = vmatpush1.msra.mxu0 0.0
    %5026 = vmatprep.subr.mxu0 0.0
    %5027 = vmatpush1.msra.mxu0 0.0
    %5028 = vmatprep.subr.mxu0 0.0
    %5029 = vmatpush1.msra.mxu0 0.0
    %5030 = vmatprep.mubr.f32.mxu0 0.0
    %5031 = vmatmul.mubr.f32.gmra.mrb[0].mxu0 %v4964
    %v5032 = vpop.f32.mrb[0].mxu0
    %v5033 = vadd.f32 %v4961, %v5032
    %v5034 = vpop.f32.mrb[0].mxu0
    %5035 = vdwg.mxu0
    %5036 = vst [vmem:[#allocation3] sm:$0x3] %v5033
    // Predicated region
    $region134: #{vit_forward.1} parent=1 // pred_check
      _
    $region135: #{vit_forward.1} parent=1 // pred_check_branch
      %5038 = sbr.rel (0) target = $region137
    $region136: #{vit_forward.1} parent=1 // pred_region
      %s5040 = ssub.s32 32, 32
      %5041 = vsyncadd [#allocation4], %s5040
      %s5043 = sshll.u32 [#allocation3], 4
      %s5044 = int_to_ptr.vmem [resolvable:$true] %s5043
      %5046 = dma.vmem_to_hbm [thread:$0]  %s5044, 32, %s67, [#allocation4]
    $region137: #{vit_forward.1} parent=1 // pred_fallthru
      _
    // Predicated region
    $region138: #{vit_forward.1} parent=1 // pred_check
      _
    $region139: #{vit_forward.1} parent=1 // pred_check_branch
      %5048 = sbr.rel (0) target = $region141
    $region140: #{vit_forward.1} parent=1 // pred_region
      %5049 = dma.done [#allocation4], 32
    $region141: #{vit_forward.1} parent=1 // pred_fallthru
      _
    %5050 = vsyncpa [#allocation4], 1

</llo_original>
